<compile_context>
chip_gen: v7x
topology: tpu7x:2x2x1
jax: 0.10.0
libtpu: 0.0.40
codegen_flags: <defaults>
</compile_context>

<pallas_src>
import jax
import jax.numpy as jnp
from jax.experimental import pallas as pl
from jax.experimental.pallas import tpu as pltpu

EPS = 1e-5
NEG_SLOPE = 0.1
# Tiles are sized to a few MiB, so 40 MiB fits v7x's 64 MiB VMEM with headroom and is
# ample on v5e/v6e (128 MiB).  (Per-generation tuning could query pltpu.get_tpu_info().)
VMEM_LIMIT = 40 * 1024 * 1024


def _row_tile(h, w, target_hw=2048):
    """Largest divisor T of h with T*w <= target_hw and (T*w) % 8 == 0 (sublane rule)."""
    for t in range(h, 0, -1):
        if h % t == 0 and t * w <= target_hw and (t == h or (t * w) % 8 == 0):
            return t
    return h


def _hw_tile(hw, target=4096):
    """Pass-2 tile over M=H*W: full hw if small, else a divisor that is a multiple of 128."""
    if hw <= target:
        return hw
    for t in range(target, 0, -1):
        if hw % t == 0 and t % 128 == 0:
            return t
    return hw


@jax.jit
def cnn_block(x_nchw, w_oihw, gamma, beta):
    """Conv2d(bias=False, stride=1, 'same' pad) -> BatchNorm2d(train) -> LeakyReLU(0.1)."""
    n, cin, h, w = x_nchw.shape
    cout, cin2, kh, kw = w_oihw.shape
    assert cin2 == cin
    # TODO(synk): only stride=1 'same' conv (odd kernel, padding=k//2) is implemented, matching
    #             the YOLOv1 3x3 CNNBlock; the 7x7/stride-2 stem needs a strided im2col variant.
    pad = kh // 2
    hp, wp = h + 2 * pad, w + 2 * pad
    hw = h * w
    m_total = n * hw
    k_dim = kh * kw * cin

    t_h = _row_tile(h, w)
    tile_hw = t_h * w
    n_ht = h // t_h

    # ---- wrapper-side layout prep (no im2col in HBM) ----------------------------------
    # NCHW -> NHWC, cast to bf16 once (MXU operand dtype), zero 'same' padding.
    # TODO(synk): the input NCHW->NHWC transpose is one extra HBM roundtrip; keeping the
    #             surrounding model NHWC would remove it.
    x_nhwc = jnp.transpose(x_nchw, (0, 2, 3, 1)).astype(jnp.bfloat16)
    x_padded = jnp.pad(x_nhwc, ((0, 0), (pad, pad), (pad, pad), (0, 0)))   # (N, Hp, Wp, Cin)
    # weights OIHW -> (KH*KW*Cin, Cout) bf16; row index = (dy*KW + dx)*Cin + c.
    w_mat = jnp.transpose(w_oihw, (2, 3, 1, 0)).reshape(k_dim, cout).astype(jnp.bfloat16)

    # ---- pass 1: fused im2col matmul conv + per-tile channel stats ---------------------
    def conv_stats_kernel(x_ref, w_ref, conv_ref, stats_ref):
        # x_ref:    (1, Hp, Wp, Cin)  bf16  (one padded image, resident across its row tiles)
        # w_ref:    (K, Cout)         bf16  (grid-invariant)
        # conv_ref: (1, tile_hw, Cout) bf16
        # stats_ref:(1, 1, 2, Cout)    f32  row0 = sum, row1 = sum of squares
        r0 = pl.multiple_of(pl.program_id(1) * t_h, t_h)
        cols = []
        for dy in range(kh):
            for dx in range(kw):
                # NOTE: dx=1,2 window slices cost a sublane relayout; a pltpu.roll-based
                # swizzle could move that to the XLU, but data volumes here are small.
                win = x_ref[0, pl.ds(r0 + dy, t_h), dx:dx + w, :]        # (t_h, w, cin) bf16
                cols.append(win.reshape(tile_hw, cin))
        lhs = jnp.concatenate(cols, axis=-1)                              # (tile_hw, K) bf16
        acc = jnp.dot(lhs, w_ref[...], preferred_element_type=jnp.float32)
        conv_ref[0] = acc.astype(jnp.bfloat16)
        # stats from the f32 accumulator, BEFORE the bf16 downcast.
        s = jnp.sum(acc, axis=0, keepdims=True)
        sq = jnp.sum(acc * acc, axis=0, keepdims=True)
        stats_ref[0, 0] = jnp.concatenate([s, sq], axis=0)

    conv_bf16, stats = pl.pallas_call(
        conv_stats_kernel,
        out_shape=(jax.ShapeDtypeStruct((n, hw, cout), jnp.bfloat16),
                   jax.ShapeDtypeStruct((n, n_ht, 2, cout), jnp.float32)),
        grid_spec=pltpu.PrefetchScalarGridSpec(
            num_scalar_prefetch=0,
            grid=(n, n_ht),
            in_specs=[
                # one padded image, re-DMA'd only when the batch index changes.
                pl.BlockSpec((1, hp, wp, cin), lambda b, t: (b, 0, 0, 0)),
                # grid-invariant weights.  (For v7x with very large Cin*Cout, single-buffer
                # this block via pipeline_mode=pl.Buffered(1) to save VMEM.)
                pl.BlockSpec((k_dim, cout), lambda b, t: (0, 0)),
            ],
            out_specs=[
                pl.BlockSpec((1, tile_hw, cout), lambda b, t: (b, t, 0)),
                pl.BlockSpec((1, 1, 2, cout), lambda b, t: (b, t, 0, 0)),
            ]),
        compiler_params=pltpu.CompilerParams(
            dimension_semantics=("parallel", "parallel"),
            vmem_limit_bytes=VMEM_LIMIT),
    )(x_padded, w_mat)

    # ---- fold BatchNorm (training-mode batch stats) into per-channel scale/shift -------
    # TODO(synk): running_mean/running_var momentum buffers are not updated (forward output
    #             does not depend on them in training mode).
    # TODO(synk): variance uses E[x^2]-E[x]^2 in f32; a shifted-sum / Welford combine would be
    #             safer for channels whose mean is huge relative to their std.
    stats_sum = jnp.sum(stats, axis=(0, 1))                    # (2, Cout) f32
    mean = stats_sum[0] / m_total
    var = jnp.maximum(stats_sum[1] / m_total - mean * mean, 0.0)   # biased batch variance
    inv_std = jax.lax.rsqrt(var + EPS)
    scale_v = gamma.astype(jnp.float32) * inv_std
    shift_v = beta.astype(jnp.float32) - mean * scale_v
    scale = scale_v.reshape(1, cout)
    shift = shift_v.reshape(1, cout)

    # ---- pass 2: folded BN + LeakyReLU + NHWC->NCHW layout (in-kernel transpose) -------
    tile2 = _hw_tile(hw)
    n_t2 = hw // tile2

    def bn_act_kernel(c_ref, sc_ref, sh_ref, o_ref):
        y = c_ref[0].astype(jnp.float32) * sc_ref[...] + sh_ref[...]     # (tile2, cout)
        y = jnp.where(y > 0, y, NEG_SLOPE * y)
        o_ref[0] = y.T                                                   # XLU transpose -> (cout, tile2)

    out3d = pl.pallas_call(
        bn_act_kernel,
        out_shape=jax.ShapeDtypeStruct((n, cout, hw), jnp.float32),
        grid_spec=pltpu.PrefetchScalarGridSpec(
            num_scalar_prefetch=0,
            grid=(n, n_t2),
            in_specs=[
                pl.BlockSpec((1, tile2, cout), lambda b, t: (b, t, 0)),
                pl.BlockSpec((1, cout), lambda b, t: (0, 0)),   # resident
                pl.BlockSpec((1, cout), lambda b, t: (0, 0)),   # resident
            ],
            out_specs=pl.BlockSpec((1, cout, tile2), lambda b, t: (b, 0, t))),
        compiler_params=pltpu.CompilerParams(
            dimension_semantics=("parallel", "parallel"),
            vmem_limit_bytes=VMEM_LIMIT),
    )(conv_bf16, scale, shift)

    # already NCHW-contiguous: this reshape is free (no extra HBM pass).
    return out3d.reshape(n, cout, h, w)


def reference(x_nchw, w_oihw, gamma, beta):
    kh = w_oihw.shape[2]
    pad = kh // 2
    conv = jax.lax.conv_general_dilated(
        x_nchw, w_oihw, window_strides=(1, 1), padding=((pad, pad), (pad, pad)),
        dimension_numbers=("NCHW", "OIHW", "NCHW"))
    mean = conv.mean(axis=(0, 2, 3), keepdims=True)
    var = conv.var(axis=(0, 2, 3), keepdims=True)      # biased, as PyTorch BN forward
    yhat = (conv - mean) * jax.lax.rsqrt(var + EPS)
    y = yhat * gamma.reshape(1, -1, 1, 1) + beta.reshape(1, -1, 1, 1)
    return jnp.where(y > 0, y, NEG_SLOPE * y)


if __name__ == "__main__":
    key = jax.random.PRNGKey(0)
    k1, k2, k3, k4 = jax.random.split(key, 4)

    N, CIN, H, W = 2, 4, 16, 16
    COUT, KH, KW = 8, 3, 3

    x = jax.random.normal(k1, (N, CIN, H, W), dtype=jnp.float32)
    w = jax.random.normal(k2, (COUT, CIN, KH, KW), dtype=jnp.float32) * 0.1
    gamma = 1.0 + 0.1 * jax.random.normal(k3, (COUT,), dtype=jnp.float32)
    beta = 0.1 * jax.random.normal(k4, (COUT,), dtype=jnp.float32)

    out = cnn_block(x, w, gamma, beta)
    out = jax.block_until_ready(out)

    ref = reference(x, w, gamma, beta)
    assert out.shape == (N, COUT, H, W), out.shape
    # bf16 MXU operands + bf16 conv intermediate -> loosen tolerance vs the f32 reference.
    assert jnp.allclose(out, ref, atol=3e-2, rtol=3e-2), float(jnp.max(jnp.abs(out - ref)))

    print("KERNEL_OK")
</pallas_src>

<mosaic_0001>
module attributes {stable_mosaic.version = 11 : i64} {
  func.func @conv_stats_kernel(%arg0: i32, %arg1: i32, %arg2: memref<1x18x18x4xbf16, #tpu.memory_space<vmem>>, %arg3: memref<36x8xbf16, #tpu.memory_space<vmem>>, %arg4: memref<1x256x8xbf16, #tpu.memory_space<vmem>>, %arg5: memref<1x1x2x8xf32, #tpu.memory_space<vmem>>) attributes {dimension_semantics = [#tpu.dimension_semantics<parallel>, #tpu.dimension_semantics<parallel>], iteration_bounds = array<i64: 2, 1>, scalar_prefetch = 0 : i64, scratch_operands = 0 : i64, tpu.core_type = #tpu.core_type<tc>, window_params = [{transform_indices = @transform_0, window_bounds = array<i64: 1, 18, 18, 4>}, {pipeline_mode = #tpu.pipeline_mode<synchronous>, transform_indices = @transform_1, window_bounds = array<i64: 36, 8>}, {transform_indices = @transform_2, window_bounds = array<i64: 1, 256, 8>}, {transform_indices = @transform_3, window_bounds = array<i64: 1, 1, 2, 8>}]} {
    %c16_i32 = arith.constant 16 : i32
    %0 = arith.muli %arg1, %c16_i32 : i32
    %1 = tpu.assume_multiple %0, 16 : i32
    %c0_i32 = arith.constant 0 : i32
    %2 = arith.addi %1, %c0_i32 : i32
    %c0 = arith.constant 0 : index
    %3 = arith.index_cast %2 : i32 to index
    %c0_0 = arith.constant 0 : index
    %c0_1 = arith.constant 0 : index
    %4 = vector.load %arg2[%c0, %3, %c0_0, %c0_1] : memref<1x18x18x4xbf16, #tpu.memory_space<vmem>>, vector<1x16x16x4xbf16>
    %5 = vector.shape_cast %4 : vector<1x16x16x4xbf16> to vector<16x16x4xbf16>
    %6 = vector.shape_cast %5 : vector<16x16x4xbf16> to vector<256x4xbf16>
    %c0_i32_2 = arith.constant 0 : i32
    %7 = arith.addi %1, %c0_i32_2 : i32
    %c0_3 = arith.constant 0 : index
    %8 = arith.index_cast %7 : i32 to index
    %c1 = arith.constant 1 : index
    %c0_4 = arith.constant 0 : index
    %9 = vector.load %arg2[%c0_3, %8, %c1, %c0_4] : memref<1x18x18x4xbf16, #tpu.memory_space<vmem>>, vector<1x16x16x4xbf16>
    %10 = vector.shape_cast %9 : vector<1x16x16x4xbf16> to vector<16x16x4xbf16>
    %11 = vector.shape_cast %10 : vector<16x16x4xbf16> to vector<256x4xbf16>
    %c0_i32_5 = arith.constant 0 : i32
    %12 = arith.addi %1, %c0_i32_5 : i32
    %c0_6 = arith.constant 0 : index
    %13 = arith.index_cast %12 : i32 to index
    %c2 = arith.constant 2 : index
    %c0_7 = arith.constant 0 : index
    %14 = vector.load %arg2[%c0_6, %13, %c2, %c0_7] : memref<1x18x18x4xbf16, #tpu.memory_space<vmem>>, vector<1x16x16x4xbf16>
    %15 = vector.shape_cast %14 : vector<1x16x16x4xbf16> to vector<16x16x4xbf16>
    %16 = vector.shape_cast %15 : vector<16x16x4xbf16> to vector<256x4xbf16>
    %c1_i32 = arith.constant 1 : i32
    %17 = arith.addi %1, %c1_i32 : i32
    %c0_8 = arith.constant 0 : index
    %18 = arith.index_cast %17 : i32 to index
    %c0_9 = arith.constant 0 : index
    %c0_10 = arith.constant 0 : index
    %19 = vector.load %arg2[%c0_8, %18, %c0_9, %c0_10] : memref<1x18x18x4xbf16, #tpu.memory_space<vmem>>, vector<1x16x16x4xbf16>
    %20 = vector.shape_cast %19 : vector<1x16x16x4xbf16> to vector<16x16x4xbf16>
    %21 = vector.shape_cast %20 : vector<16x16x4xbf16> to vector<256x4xbf16>
    %c1_i32_11 = arith.constant 1 : i32
    %22 = arith.addi %1, %c1_i32_11 : i32
    %c0_12 = arith.constant 0 : index
    %23 = arith.index_cast %22 : i32 to index
    %c1_13 = arith.constant 1 : index
    %c0_14 = arith.constant 0 : index
    %24 = vector.load %arg2[%c0_12, %23, %c1_13, %c0_14] : memref<1x18x18x4xbf16, #tpu.memory_space<vmem>>, vector<1x16x16x4xbf16>
    %25 = vector.shape_cast %24 : vector<1x16x16x4xbf16> to vector<16x16x4xbf16>
    %26 = vector.shape_cast %25 : vector<16x16x4xbf16> to vector<256x4xbf16>
    %c1_i32_15 = arith.constant 1 : i32
    %27 = arith.addi %1, %c1_i32_15 : i32
    %c0_16 = arith.constant 0 : index
    %28 = arith.index_cast %27 : i32 to index
    %c2_17 = arith.constant 2 : index
    %c0_18 = arith.constant 0 : index
    %29 = vector.load %arg2[%c0_16, %28, %c2_17, %c0_18] : memref<1x18x18x4xbf16, #tpu.memory_space<vmem>>, vector<1x16x16x4xbf16>
    %30 = vector.shape_cast %29 : vector<1x16x16x4xbf16> to vector<16x16x4xbf16>
    %31 = vector.shape_cast %30 : vector<16x16x4xbf16> to vector<256x4xbf16>
    %c2_i32 = arith.constant 2 : i32
    %32 = arith.addi %1, %c2_i32 : i32
    %c0_19 = arith.constant 0 : index
    %33 = arith.index_cast %32 : i32 to index
    %c0_20 = arith.constant 0 : index
    %c0_21 = arith.constant 0 : index
    %34 = vector.load %arg2[%c0_19, %33, %c0_20, %c0_21] : memref<1x18x18x4xbf16, #tpu.memory_space<vmem>>, vector<1x16x16x4xbf16>
    %35 = vector.shape_cast %34 : vector<1x16x16x4xbf16> to vector<16x16x4xbf16>
    %36 = vector.shape_cast %35 : vector<16x16x4xbf16> to vector<256x4xbf16>
    %c2_i32_22 = arith.constant 2 : i32
    %37 = arith.addi %1, %c2_i32_22 : i32
    %c0_23 = arith.constant 0 : index
    %38 = arith.index_cast %37 : i32 to index
    %c1_24 = arith.constant 1 : index
    %c0_25 = arith.constant 0 : index
    %39 = vector.load %arg2[%c0_23, %38, %c1_24, %c0_25] : memref<1x18x18x4xbf16, #tpu.memory_space<vmem>>, vector<1x16x16x4xbf16>
    %40 = vector.shape_cast %39 : vector<1x16x16x4xbf16> to vector<16x16x4xbf16>
    %41 = vector.shape_cast %40 : vector<16x16x4xbf16> to vector<256x4xbf16>
    %c2_i32_26 = arith.constant 2 : i32
    %42 = arith.addi %1, %c2_i32_26 : i32
    %c0_27 = arith.constant 0 : index
    %43 = arith.index_cast %42 : i32 to index
    %c2_28 = arith.constant 2 : index
    %c0_29 = arith.constant 0 : index
    %44 = vector.load %arg2[%c0_27, %43, %c2_28, %c0_29] : memref<1x18x18x4xbf16, #tpu.memory_space<vmem>>, vector<1x16x16x4xbf16>
    %45 = vector.shape_cast %44 : vector<1x16x16x4xbf16> to vector<16x16x4xbf16>
    %46 = vector.shape_cast %45 : vector<16x16x4xbf16> to vector<256x4xbf16>
    %47 = tpu.concatenate %6, %11, %16, %21, %26, %31, %36, %41, %46 in 1 : vector<256x4xbf16>, vector<256x4xbf16>, vector<256x4xbf16>, vector<256x4xbf16>, vector<256x4xbf16>, vector<256x4xbf16>, vector<256x4xbf16>, vector<256x4xbf16>, vector<256x4xbf16> -> vector<256x36xbf16>
    %c0_30 = arith.constant 0 : index
    %c0_31 = arith.constant 0 : index
    %48 = vector.load %arg3[%c0_30, %c0_31] : memref<36x8xbf16, #tpu.memory_space<vmem>>, vector<36x8xbf16>
    %cst = arith.constant dense<0.000000e+00> : vector<256x8xf32>
    %49 = tpu.matmul %47, %48, %cst {dimension_numbers = #tpu.dot_dimension_numbers<[1], [0], [0], [1], [0, 0, 1, 1], [], []>} : vector<256x36xbf16>, vector<36x8xbf16>, vector<256x8xf32> -> vector<256x8xf32>
    %50 = arith.truncf %49 : vector<256x8xf32> to vector<256x8xbf16>
    %c0_32 = arith.constant 0 : index
    %c0_33 = arith.constant 0 : index
    %c0_34 = arith.constant 0 : index
    %51 = vector.load %arg4[%c0_32, %c0_33, %c0_34] : memref<1x256x8xbf16, #tpu.memory_space<vmem>>, vector<1x256x8xbf16>
    %52 = vector.shape_cast %51 : vector<1x256x8xbf16> to vector<256x8xbf16>
    %53 = vector.shape_cast %50 : vector<256x8xbf16> to vector<1x256x8xbf16>
    tpu.vector_store %arg4[%c0_32, %c0_33, %c0_34], %53 {strides = array<i32>} : memref<1x256x8xbf16, #tpu.memory_space<vmem>>, vector<1x256x8xbf16>,
    %cst_35 = arith.constant dense<0.000000e+00> : vector<8xf32>
    %54 = vector.multi_reduction <add>, %49, %cst_35 [0] : vector<256x8xf32> to vector<8xf32>
    %55 = vector.shape_cast %54 : vector<8xf32> to vector<1x8xf32>
    %56 = arith.mulf %49, %49 : vector<256x8xf32>
    %cst_36 = arith.constant dense<0.000000e+00> : vector<8xf32>
    %57 = vector.multi_reduction <add>, %56, %cst_36 [0] : vector<256x8xf32> to vector<8xf32>
    %58 = vector.shape_cast %57 : vector<8xf32> to vector<1x8xf32>
    %59 = tpu.concatenate %55, %58 in 0 : vector<1x8xf32>, vector<1x8xf32> -> vector<2x8xf32>
    %c0_37 = arith.constant 0 : index
    %c0_38 = arith.constant 0 : index
    %c0_39 = arith.constant 0 : index
    %c0_40 = arith.constant 0 : index
    %60 = vector.load %arg5[%c0_37, %c0_38, %c0_39, %c0_40] : memref<1x1x2x8xf32, #tpu.memory_space<vmem>>, vector<1x1x2x8xf32>
    %61 = vector.shape_cast %60 : vector<1x1x2x8xf32> to vector<2x8xf32>
    %62 = vector.shape_cast %59 : vector<2x8xf32> to vector<1x1x2x8xf32>
    tpu.vector_store %arg5[%c0_37, %c0_38, %c0_39, %c0_40], %62 {strides = array<i32>} : memref<1x1x2x8xf32, #tpu.memory_space<vmem>>, vector<1x1x2x8xf32>,
    return
  }
  func.func @transform_0(%arg0: i32, %arg1: i32) -> (i32, i32, i32, i32) {
    %c0_i32 = arith.constant 0 : i32
    %c0_i32_0 = arith.constant 0 : i32
    %c0_i32_1 = arith.constant 0 : i32
    %c0_i32_2 = arith.constant 0 : i32
    return %arg0, %c0_i32, %c0_i32_0, %c0_i32_1 : i32, i32, i32, i32
  }
  func.func @transform_1(%arg0: i32, %arg1: i32) -> (i32, i32) {
    %c0_i32 = arith.constant 0 : i32
    %c0_i32_0 = arith.constant 0 : i32
    %c0_i32_1 = arith.constant 0 : i32
    return %c0_i32, %c0_i32_0 : i32, i32
  }
  func.func @transform_2(%arg0: i32, %arg1: i32) -> (i32, i32, i32) {
    %c0_i32 = arith.constant 0 : i32
    %c0_i32_0 = arith.constant 0 : i32
    return %arg0, %arg1, %c0_i32 : i32, i32, i32
  }
  func.func @transform_3(%arg0: i32, %arg1: i32) -> (i32, i32, i32, i32) {
    %c0_i32 = arith.constant 0 : i32
    %c0_i32_0 = arith.constant 0 : i32
    %c0_i32_1 = arith.constant 0 : i32
    return %arg0, %arg1, %c0_i32, %c0_i32_0 : i32, i32, i32, i32
  }
}

module attributes {stable_mosaic.version = 11 : i64} {
  func.func @bn_act_kernel(%arg0: i32, %arg1: i32, %arg2: memref<1x256x8xbf16, #tpu.memory_space<vmem>>, %arg3: memref<1x8xf32, #tpu.memory_space<vmem>>, %arg4: memref<1x8xf32, #tpu.memory_space<vmem>>, %arg5: memref<1x8x256xf32, #tpu.memory_space<vmem>>) attributes {dimension_semantics = [#tpu.dimension_semantics<parallel>, #tpu.dimension_semantics<parallel>], iteration_bounds = array<i64: 2, 1>, scalar_prefetch = 0 : i64, scratch_operands = 0 : i64, tpu.core_type = #tpu.core_type<tc>, window_params = [{transform_indices = @transform_0, window_bounds = array<i64: 1, 256, 8>}, {pipeline_mode = #tpu.pipeline_mode<synchronous>, transform_indices = @transform_1, window_bounds = array<i64: 1, 8>}, {pipeline_mode = #tpu.pipeline_mode<synchronous>, transform_indices = @transform_2, window_bounds = array<i64: 1, 8>}, {transform_indices = @transform_3, window_bounds = array<i64: 1, 8, 256>}]} {
    %c0 = arith.constant 0 : index
    %c0_0 = arith.constant 0 : index
    %c0_1 = arith.constant 0 : index
    %0 = vector.load %arg2[%c0, %c0_0, %c0_1] : memref<1x256x8xbf16, #tpu.memory_space<vmem>>, vector<1x256x8xbf16>
    %1 = vector.shape_cast %0 : vector<1x256x8xbf16> to vector<256x8xbf16>
    %2 = arith.extf %1 : vector<256x8xbf16> to vector<256x8xf32>
    %c0_2 = arith.constant 0 : index
    %c0_3 = arith.constant 0 : index
    %3 = vector.load %arg3[%c0_2, %c0_3] : memref<1x8xf32, #tpu.memory_space<vmem>>, vector<1x8xf32>
    %4 = vector.broadcast %3 : vector<1x8xf32> to vector<256x8xf32>
    %5 = arith.mulf %2, %4 : vector<256x8xf32>
    %c0_4 = arith.constant 0 : index
    %c0_5 = arith.constant 0 : index
    %6 = vector.load %arg4[%c0_4, %c0_5] : memref<1x8xf32, #tpu.memory_space<vmem>>, vector<1x8xf32>
    %7 = vector.broadcast %6 : vector<1x8xf32> to vector<256x8xf32>
    %8 = arith.addf %5, %7 : vector<256x8xf32>
    %cst = arith.constant 0.000000e+00 : f32
    %9 = vector.broadcast %cst : f32 to vector<256x8xf32>
    %10 = arith.cmpf ogt, %8, %9 : vector<256x8xf32>
    %cst_6 = arith.constant 1.000000e-01 : f32
    %11 = vector.broadcast %cst_6 : f32 to vector<256x8xf32>
    %12 = arith.mulf %11, %8 : vector<256x8xf32>
    %13 = arith.select %10, %8, %12 : vector<256x8xi1>, vector<256x8xf32>
    %14 = tpu.transpose %13, [1, 0] : vector<256x8xf32> -> vector<8x256xf32>
    %c0_7 = arith.constant 0 : index
    %c0_8 = arith.constant 0 : index
    %c0_9 = arith.constant 0 : index
    %15 = vector.load %arg5[%c0_7, %c0_8, %c0_9] : memref<1x8x256xf32, #tpu.memory_space<vmem>>, vector<1x8x256xf32>
    %16 = vector.shape_cast %15 : vector<1x8x256xf32> to vector<8x256xf32>
    %17 = vector.shape_cast %14 : vector<8x256xf32> to vector<1x8x256xf32>
    tpu.vector_store %arg5[%c0_7, %c0_8, %c0_9], %17 {strides = array<i32>} : memref<1x8x256xf32, #tpu.memory_space<vmem>>, vector<1x8x256xf32>,
    return
  }
  func.func @transform_0(%arg0: i32, %arg1: i32) -> (i32, i32, i32) {
    %c0_i32 = arith.constant 0 : i32
    %c0_i32_0 = arith.constant 0 : i32
    return %arg0, %arg1, %c0_i32 : i32, i32, i32
  }
  func.func @transform_1(%arg0: i32, %arg1: i32) -> (i32, i32) {
    %c0_i32 = arith.constant 0 : i32
    %c0_i32_0 = arith.constant 0 : i32
    %c0_i32_1 = arith.constant 0 : i32
    return %c0_i32, %c0_i32_0 : i32, i32
  }
  func.func @transform_2(%arg0: i32, %arg1: i32) -> (i32, i32) {
    %c0_i32 = arith.constant 0 : i32
    %c0_i32_0 = arith.constant 0 : i32
    %c0_i32_1 = arith.constant 0 : i32
    return %c0_i32, %c0_i32_0 : i32, i32
  }
  func.func @transform_3(%arg0: i32, %arg1: i32) -> (i32, i32, i32) {
    %c0_i32 = arith.constant 0 : i32
    %c0_i32_0 = arith.constant 0 : i32
    return %arg0, %c0_i32, %arg1 : i32, i32, i32
  }
}

</mosaic_0001>

<llo_original>
// kernel: cnn_block.3
$region0: #{cnn_block.3}
  #allocation0 [shape = 'u32[]', space=smem, size = 0x4, offset = 0x4, fixed_abs, tag = 'smem constant byte address 0x4 - core index']
  #allocation1 [shape = 'u32[144,128]{1,0:T(1,128)}', space=vmem, size = 0x12000, scoped, tag = 'internal scratch']
  %s0 = inlined_call_operand.vmem [shape: bf16[2,256,8], index: 0, kind: input, shape index: {}]
  %s1 = inlined_call_operand.vmem [shape: f32[1,8], index: 1, kind: input, shape index: {}]
  %s2 = inlined_call_operand.vmem [shape: f32[1,8], index: 2, kind: input, shape index: {}]
  %s3 = inlined_call_operand.vmem [shape: f32[2,8,256], index: 3, kind: output, shape index: {}]
  %s4 = sld [smem:[#allocation0]]
  $region45: #{cnn_block.3} parent=0
    _
  %s6 = ssub.s32 1, %s4
  %s7 = scalar_select 0, %s6, %s4
  loop: start=0, step=1, limit=4
  $region2: #{cnn_block.3} parent=0 // loop_pre_header
    _
  $region3: #{cnn_block.3} parent=0 // loop_header
    %s9 = sphi 0, %s13
    %p10 = scmp.ge.s32.totalorder %s9, 4
    %s16 = sphi 0, %s28
    %s17 = sphi 0, %s24
    %s18 = sphi 0, %s16
    %s19 = sphi 0, %s17
    %s20 = sphi 0, %s18
    %s21 = sphi 0, %s19
    %s33 = sphi 0, %s35
    %s36 = sphi 0, %s33
    %s37 = sphi 0, %s36
    %s53 = sphi 0, %s37
    %s57 = sphi 0, %s57
    %s59 = sphi 0, %s57
    %s60 = sphi 0, %s59
    %s74 = sphi 0, %s60
    %s78 = sphi 0, %s78
    %s80 = sphi 0, %s78
    %s81 = sphi 0, %s80
    %s95 = sphi 0, %s81
    %s103 = sphi 0, %s105
    %s106 = sphi 0, %s103
    %s107 = sphi 0, %s106
    %s123 = sphi 0, %s107
  $region4: #{cnn_block.3} parent=0 // loop_header_branch
    %12 = sbr.rel (%p10) target = $region8
  $region5: #{cnn_block.3} parent=0 // loop_body
    %s14 = ssub.s32 %s9, 1
    %s15 = ssub.s32 %s9, 2
    %s22 = sadd.s32 1, %s17
    %p23 = scmp.ge.s32.totalorder %s22, 1
    %s24 = scalar_select %p23, 0, %s22
    %s25 = sadd.s32 1, %s16
    %s26 = scalar_select %p23, %s25, %s16
    %p27 = scmp.ge.s32.totalorder %s26, 2
    %s28 = scalar_select %p27, 0, %s26
    %s29 = ssub.s32 %s16, %s28
    %s30 = ssub.s32 %s17, %s24
    %s31 = sor.u32 %s29, %s30
    %p32 = scmp.eq.s32.totalorder %s31, 0
    %s34 = sadd.s32 %s33, 1
    %s35 = scalar_select %p32, %s33, %s34
    %p38 = pneg %p32
    %p39 = scmp.eq.s32.totalorder %s9, 1
    %p40 = por %p38, %p39
    %p41 = scmp.ne.s32.totalorder %s33, %s36
    %p42 = scmp.eq.s32.totalorder %s9, 0
    %p43 = por %p41, %p42
    %p44 = scmp.ne.s32.totalorder %s33, %s36
    %p45 = scmp.eq.s32.totalorder %s14, 1
    %p46 = por %p44, %p45
    %p47 = scmp.ne.s32.totalorder %s36, %s37
    %p48 = scmp.eq.s32.totalorder %s14, 0
    %p49 = por %p47, %p48
    %p50 = scmp.ne.s32.totalorder %s36, %s37
    %p51 = scmp.eq.s32.totalorder %s15, 1
    %p52 = por %p50, %p51
    %p54 = scmp.ne.s32.totalorder %s37, %s53
    %p55 = scmp.eq.s32.totalorder %s15, 0
    %p56 = por %p54, %p55
    %s58 = sadd.s32 %s57, 1
    %p61 = scmp.eq.s32.totalorder %s9, 1
    %p62 = scmp.ne.s32.totalorder %s57, %s59
    %p63 = scmp.eq.s32.totalorder %s9, 0
    %p64 = por %p62, %p63
    %p65 = scmp.ne.s32.totalorder %s57, %s59
    %p66 = scmp.eq.s32.totalorder %s14, 1
    %p67 = por %p65, %p66
    %p68 = scmp.ne.s32.totalorder %s59, %s60
    %p69 = scmp.eq.s32.totalorder %s14, 0
    %p70 = por %p68, %p69
    %p71 = scmp.ne.s32.totalorder %s59, %s60
    %p72 = scmp.eq.s32.totalorder %s15, 1
    %p73 = por %p71, %p72
    %p75 = scmp.ne.s32.totalorder %s60, %s74
    %p76 = scmp.eq.s32.totalorder %s15, 0
    %p77 = por %p75, %p76
    %s79 = sadd.s32 %s78, 1
    %p82 = scmp.eq.s32.totalorder %s9, 1
    %p83 = scmp.ne.s32.totalorder %s78, %s80
    %p84 = scmp.eq.s32.totalorder %s9, 0
    %p85 = por %p83, %p84
    %p86 = scmp.ne.s32.totalorder %s78, %s80
    %p87 = scmp.eq.s32.totalorder %s14, 1
    %p88 = por %p86, %p87
    %p89 = scmp.ne.s32.totalorder %s80, %s81
    %p90 = scmp.eq.s32.totalorder %s14, 0
    %p91 = por %p89, %p90
    %p92 = scmp.ne.s32.totalorder %s80, %s81
    %p93 = scmp.eq.s32.totalorder %s15, 1
    %p94 = por %p92, %p93
    %p96 = scmp.ne.s32.totalorder %s81, %s95
    %p97 = scmp.eq.s32.totalorder %s15, 0
    %p98 = por %p96, %p97
    %s99 = ssub.s32 %s16, %s28
    %s100 = ssub.s32 %s17, %s24
    %s101 = sor.u32 %s99, %s100
    %p102 = scmp.eq.s32.totalorder %s101, 0
    %s104 = sadd.s32 %s103, 1
    %s105 = scalar_select %p102, %s103, %s104
    %p108 = pneg %p102
    %p109 = scmp.eq.s32.totalorder %s9, 1
    %p110 = por %p108, %p109
    %p111 = scmp.ne.s32.totalorder %s103, %s106
    %p112 = scmp.eq.s32.totalorder %s9, 0
    %p113 = por %p111, %p112
    %p114 = scmp.ne.s32.totalorder %s103, %s106
    %p115 = scmp.eq.s32.totalorder %s14, 1
    %p116 = por %p114, %p115
    %p117 = scmp.ne.s32.totalorder %s106, %s107
    %p118 = scmp.eq.s32.totalorder %s14, 0
    %p119 = por %p117, %p118
    %p120 = scmp.ne.s32.totalorder %s106, %s107
    %p121 = scmp.eq.s32.totalorder %s15, 1
    %p122 = por %p120, %p121
    %p124 = scmp.ne.s32.totalorder %s107, %s123
    %p125 = scmp.eq.s32.totalorder %s15, 0
    %p126 = por %p124, %p125
    %p127 = scmp.le.s32.totalorder 1, %s9
    %p128 = scmp.lt.s32.totalorder %s9, 3
    %p129 = pnand %p127, %p128
    %p130 = pneg %p129
    // Predicated region
    $region9: #{cnn_block.3} parent=5 // pred_check
      _
    $region10: #{cnn_block.3} parent=5 // pred_check_branch
      %132 = sbr.rel (%p129) target = $region12
    $region11: #{cnn_block.3} parent=5 // pred_region
      %s133 = ssub.s32 %s9, 1
      // Predicated region
      $region13: #{cnn_block.3} parent=11 // pred_check
        %p134 = pneg %p70
      $region14: #{cnn_block.3} parent=11 // pred_check_branch
        %136 = sbr.rel (%p134) target = $region16
      $region15: #{cnn_block.3} parent=11 // pred_region
        _
      $region16: #{cnn_block.3} parent=11 // pred_fallthru
        _
      // Predicated region
      $region17: #{cnn_block.3} parent=11 // pred_check
        %p137 = pneg %p91
      $region18: #{cnn_block.3} parent=11 // pred_check_branch
        %139 = sbr.rel (%p137) target = $region20
      $region19: #{cnn_block.3} parent=11 // pred_region
        _
      $region20: #{cnn_block.3} parent=11 // pred_fallthru
        _
    $region12: #{cnn_block.3} parent=5 // pred_fallthru
      _
    %p140 = scmp.lt.s32.totalorder %s9, 2
    // Predicated region
    $region21: #{cnn_block.3} parent=5 // pred_check
      %p141 = pneg %p140
    $region22: #{cnn_block.3} parent=5 // pred_check_branch
      %143 = sbr.rel (%p141) target = $region24
    $region23: #{cnn_block.3} parent=5 // pred_region
      // Predicated region
      $region25: #{cnn_block.3} parent=23 // pred_check
        %p144 = pneg %p43
      $region26: #{cnn_block.3} parent=23 // pred_check_branch
        %146 = sbr.rel (%p144) target = $region28
      $region27: #{cnn_block.3} parent=23 // pred_region
        %s147 = smul.u32 32, %s17
        %p148 = scmp.lt.s32.totalorder %s16, 1
        %s149 = scalar_select %p148, %s16, 1
        %p150 = scmp.lt.s32.totalorder %s147, 31
        %s151 = scalar_select %p150, %s147, 31
        %s152 = smul.addr %s149, 32
        %s153 = sadd.s32 %s151, %s152
        %s154 = smul.addr %s153, 4
        %s155 = scalar_lea.vmem %s0, %s154
        %s156 = smul.u32 32, %s17
      $region28: #{cnn_block.3} parent=23 // pred_fallthru
        _
    $region24: #{cnn_block.3} parent=5 // pred_fallthru
      _
    %p157 = scmp.le.s32.totalorder 1, %s9
    %p158 = scmp.lt.s32.totalorder %s9, 3
    %p159 = pnand %p157, %p158
    %p160 = pneg %p159
    // Predicated region
    $region29: #{cnn_block.3} parent=5 // pred_check
      _
    $region30: #{cnn_block.3} parent=5 // pred_check_branch
      %162 = sbr.rel (%p159) target = $region32
    $region31: #{cnn_block.3} parent=5 // pred_region
      %s163 = ssub.s32 %s9, 1
      %s164 = smul.u32 32, %s19
      %p165 = scmp.lt.s32.totalorder %s18, 1
      %s166 = scalar_select %p165, %s18, 1
      %p167 = scmp.lt.s32.totalorder %s164, 31
      %s168 = scalar_select %p167, %s164, 31
      %s169 = smul.addr %s166, 32
      %s170 = sadd.s32 %s168, %s169
      %s171 = smul.addr %s170, 4
      %s172 = scalar_lea.vmem %s0, %s171
      %p173 = pneg %p49
      %p174 = pneg %p46
      %p175 = pneg %p70
      %p176 = pneg %p67
      %p177 = pneg %p91
      %p178 = pneg %p88
      %p179 = pneg %p119
      %p180 = pneg %p116
      %s181 = smul.u32 2, %s19
      %p182 = scmp.lt.s32.totalorder %s18, 1
      %s183 = scalar_select %p182, %s18, 1
      %p184 = scmp.lt.s32.totalorder %s181, 1
      %s185 = scalar_select %p184, %s181, 1
      %s186 = smul.addr %s183, 2
      %s187 = sadd.s32 %s185, %s186
      %s188 = smul.addr %s187, 8
      %s189 = scalar_lea.vmem %s3, %s188
      %s190 = smul.u32 32, %s19
      %p191 = scmp.lt.s32.totalorder %s18, 1
      %s192 = scalar_select %p191, %s18, 1
      %p193 = scmp.lt.s32.totalorder %s190, 31
      %s194 = scalar_select %p193, %s190, 31
      %s195 = smul.addr %s192, 32
      %s196 = sadd.s32 %s194, %s195
      %s197 = smul.addr %s196, 4
      %s198 = scalar_lea.vmem %s0, %s197
      %s199 = smul.u32 32, %s19
      %s200 = smul.u32 2, %s19
      %p201 = scmp.lt.s32.totalorder %s18, 1
      %s202 = scalar_select %p201, %s18, 1
      %p203 = scmp.lt.s32.totalorder %s200, 1
      %s204 = scalar_select %p203, %s200, 1
      %s205 = smul.addr %s202, 2
      %s206 = sadd.s32 %s204, %s205
      %s207 = smul.addr %s206, 8
      %s208 = scalar_lea.vmem %s3, %s207
      %s209 = smul.u32 2, %s19
      %v210 = vld [vmem:[%s198] sm:$0xf]
      %v211 = vld [vmem:[%s198 + $0x4] sm:$0xf]
      %v212 = vld [vmem:[%s198 + $0x8] sm:$0xf]
      %v213 = vld [vmem:[%s198 + $0xc] sm:$0xf]
      %v214 = vld [vmem:[%s198 + $0x10] sm:$0xf]
      %v215 = vld [vmem:[%s198 + $0x14] sm:$0xf]
      %v216 = vld [vmem:[%s198 + $0x18] sm:$0xf]
      %v217 = vld [vmem:[%s198 + $0x1c] sm:$0xf]
      %v218 = vld [vmem:[%s198 + $0x20] sm:$0xf]
      %v219 = vld [vmem:[%s198 + $0x24] sm:$0xf]
      %v220 = vld [vmem:[%s198 + $0x28] sm:$0xf]
      %v221 = vld [vmem:[%s198 + $0x2c] sm:$0xf]
      %v222 = vld [vmem:[%s198 + $0x30] sm:$0xf]
      %v223 = vld [vmem:[%s198 + $0x34] sm:$0xf]
      %v224 = vld [vmem:[%s198 + $0x38] sm:$0xf]
      %v225 = vld [vmem:[%s198 + $0x3c] sm:$0xf]
      %v226 = vld [vmem:[%s198 + $0x40] sm:$0xf]
      %v227 = vld [vmem:[%s198 + $0x44] sm:$0xf]
      %v228 = vld [vmem:[%s198 + $0x48] sm:$0xf]
      %v229 = vld [vmem:[%s198 + $0x4c] sm:$0xf]
      %v230 = vld [vmem:[%s198 + $0x50] sm:$0xf]
      %v231 = vld [vmem:[%s198 + $0x54] sm:$0xf]
      %v232 = vld [vmem:[%s198 + $0x58] sm:$0xf]
      %v233 = vld [vmem:[%s198 + $0x5c] sm:$0xf]
      %v234 = vld [vmem:[%s198 + $0x60] sm:$0xf]
      %v235 = vld [vmem:[%s198 + $0x64] sm:$0xf]
      %v236 = vld [vmem:[%s198 + $0x68] sm:$0xf]
      %v237 = vld [vmem:[%s198 + $0x6c] sm:$0xf]
      %v238 = vld [vmem:[%s198 + $0x70] sm:$0xf]
      %v239 = vld [vmem:[%s198 + $0x74] sm:$0xf]
      %v240 = vld [vmem:[%s198 + $0x78] sm:$0xf]
      %v241 = vld [vmem:[%s198 + $0x7c] sm:$0xf]
      %v242 = vunpack.c.l.bf16 %v210
      %v243 = vunpack.c.l.bf16 %v211
      %v244 = vunpack.c.l.bf16 %v212
      %v245 = vunpack.c.l.bf16 %v213
      %v246 = vunpack.c.l.bf16 %v214
      %v247 = vunpack.c.l.bf16 %v215
      %v248 = vunpack.c.l.bf16 %v216
      %v249 = vunpack.c.l.bf16 %v217
      %v250 = vunpack.c.l.bf16 %v218
      %v251 = vunpack.c.l.bf16 %v219
      %v252 = vunpack.c.l.bf16 %v220
      %v253 = vunpack.c.l.bf16 %v221
      %v254 = vunpack.c.l.bf16 %v222
      %v255 = vunpack.c.l.bf16 %v223
      %v256 = vunpack.c.l.bf16 %v224
      %v257 = vunpack.c.l.bf16 %v225
      %v258 = vunpack.c.l.bf16 %v226
      %v259 = vunpack.c.l.bf16 %v227
      %v260 = vunpack.c.l.bf16 %v228
      %v261 = vunpack.c.l.bf16 %v229
      %v262 = vunpack.c.l.bf16 %v230
      %v263 = vunpack.c.l.bf16 %v231
      %v264 = vunpack.c.l.bf16 %v232
      %v265 = vunpack.c.l.bf16 %v233
      %v266 = vunpack.c.l.bf16 %v234
      %v267 = vunpack.c.l.bf16 %v235
      %v268 = vunpack.c.l.bf16 %v236
      %v269 = vunpack.c.l.bf16 %v237
      %v270 = vunpack.c.l.bf16 %v238
      %v271 = vunpack.c.l.bf16 %v239
      %v272 = vunpack.c.l.bf16 %v240
      %v273 = vunpack.c.l.bf16 %v241
      %v274 = vld [vmem:[%s1] sm:$0x1]
      %v276 = vlaneseq
      %v277 = vshrl.u32 %v276, 7
      %v278 = vsub.s32 0, %v277
      %v279 = vrot.slane %v274, %v278
      %v281 = vmul.f32 %v242, %v279
      %v282 = vmul.f32 %v243, %v279
      %v283 = vmul.f32 %v244, %v279
      %v284 = vmul.f32 %v245, %v279
      %v285 = vmul.f32 %v246, %v279
      %v286 = vmul.f32 %v247, %v279
      %v287 = vmul.f32 %v248, %v279
      %v288 = vmul.f32 %v249, %v279
      %v289 = vmul.f32 %v250, %v279
      %v290 = vmul.f32 %v251, %v279
      %v291 = vmul.f32 %v252, %v279
      %v292 = vmul.f32 %v253, %v279
      %v293 = vmul.f32 %v254, %v279
      %v294 = vmul.f32 %v255, %v279
      %v295 = vmul.f32 %v256, %v279
      %v296 = vmul.f32 %v257, %v279
      %v297 = vmul.f32 %v258, %v279
      %v298 = vmul.f32 %v259, %v279
      %v299 = vmul.f32 %v260, %v279
      %v300 = vmul.f32 %v261, %v279
      %v301 = vmul.f32 %v262, %v279
      %v302 = vmul.f32 %v263, %v279
      %v303 = vmul.f32 %v264, %v279
      %v304 = vmul.f32 %v265, %v279
      %v305 = vmul.f32 %v266, %v279
      %v306 = vmul.f32 %v267, %v279
      %v307 = vmul.f32 %v268, %v279
      %v308 = vmul.f32 %v269, %v279
      %v309 = vmul.f32 %v270, %v279
      %v310 = vmul.f32 %v271, %v279
      %v311 = vmul.f32 %v272, %v279
      %v312 = vmul.f32 %v273, %v279
      %v313 = vld [vmem:[%s2] sm:$0x1]
      %v315 = vlaneseq
      %v316 = vshrl.u32 %v315, 7
      %v317 = vsub.s32 0, %v316
      %v318 = vrot.slane %v313, %v317
      %v320 = vadd.f32 %v281, %v318
      %v321 = vadd.f32 %v282, %v318
      %v322 = vadd.f32 %v283, %v318
      %v323 = vadd.f32 %v284, %v318
      %v324 = vadd.f32 %v285, %v318
      %v325 = vadd.f32 %v286, %v318
      %v326 = vadd.f32 %v287, %v318
      %v327 = vadd.f32 %v288, %v318
      %v328 = vadd.f32 %v289, %v318
      %v329 = vadd.f32 %v290, %v318
      %v330 = vadd.f32 %v291, %v318
      %v331 = vadd.f32 %v292, %v318
      %v332 = vadd.f32 %v293, %v318
      %v333 = vadd.f32 %v294, %v318
      %v334 = vadd.f32 %v295, %v318
      %v335 = vadd.f32 %v296, %v318
      %v336 = vadd.f32 %v297, %v318
      %v337 = vadd.f32 %v298, %v318
      %v338 = vadd.f32 %v299, %v318
      %v339 = vadd.f32 %v300, %v318
      %v340 = vadd.f32 %v301, %v318
      %v341 = vadd.f32 %v302, %v318
      %v342 = vadd.f32 %v303, %v318
      %v343 = vadd.f32 %v304, %v318
      %v344 = vadd.f32 %v305, %v318
      %v345 = vadd.f32 %v306, %v318
      %v346 = vadd.f32 %v307, %v318
      %v347 = vadd.f32 %v308, %v318
      %v348 = vadd.f32 %v309, %v318
      %v349 = vadd.f32 %v310, %v318
      %v350 = vadd.f32 %v311, %v318
      %v351 = vadd.f32 %v312, %v318
      %vm352 = vcmp.gt.f32.partialorder %v320, 0.0
      %vm353 = vcmp.gt.f32.partialorder %v321, 0.0
      %vm354 = vcmp.gt.f32.partialorder %v322, 0.0
      %vm355 = vcmp.gt.f32.partialorder %v323, 0.0
      %vm356 = vcmp.gt.f32.partialorder %v324, 0.0
      %vm357 = vcmp.gt.f32.partialorder %v325, 0.0
      %vm358 = vcmp.gt.f32.partialorder %v326, 0.0
      %vm359 = vcmp.gt.f32.partialorder %v327, 0.0
      %vm360 = vcmp.gt.f32.partialorder %v328, 0.0
      %vm361 = vcmp.gt.f32.partialorder %v329, 0.0
      %vm362 = vcmp.gt.f32.partialorder %v330, 0.0
      %vm363 = vcmp.gt.f32.partialorder %v331, 0.0
      %vm364 = vcmp.gt.f32.partialorder %v332, 0.0
      %vm365 = vcmp.gt.f32.partialorder %v333, 0.0
      %vm366 = vcmp.gt.f32.partialorder %v334, 0.0
      %vm367 = vcmp.gt.f32.partialorder %v335, 0.0
      %vm368 = vcmp.gt.f32.partialorder %v336, 0.0
      %vm369 = vcmp.gt.f32.partialorder %v337, 0.0
      %vm370 = vcmp.gt.f32.partialorder %v338, 0.0
      %vm371 = vcmp.gt.f32.partialorder %v339, 0.0
      %vm372 = vcmp.gt.f32.partialorder %v340, 0.0
      %vm373 = vcmp.gt.f32.partialorder %v341, 0.0
      %vm374 = vcmp.gt.f32.partialorder %v342, 0.0
      %vm375 = vcmp.gt.f32.partialorder %v343, 0.0
      %vm376 = vcmp.gt.f32.partialorder %v344, 0.0
      %vm377 = vcmp.gt.f32.partialorder %v345, 0.0
      %vm378 = vcmp.gt.f32.partialorder %v346, 0.0
      %vm379 = vcmp.gt.f32.partialorder %v347, 0.0
      %vm380 = vcmp.gt.f32.partialorder %v348, 0.0
      %vm381 = vcmp.gt.f32.partialorder %v349, 0.0
      %vm382 = vcmp.gt.f32.partialorder %v350, 0.0
      %vm383 = vcmp.gt.f32.partialorder %v351, 0.0
      %v384 = vmul.f32 %v320, 0.1
      %v385 = vmul.f32 %v321, 0.1
      %v386 = vmul.f32 %v322, 0.1
      %v387 = vmul.f32 %v323, 0.1
      %v388 = vmul.f32 %v324, 0.1
      %v389 = vmul.f32 %v325, 0.1
      %v390 = vmul.f32 %v326, 0.1
      %v391 = vmul.f32 %v327, 0.1
      %v392 = vmul.f32 %v328, 0.1
      %v393 = vmul.f32 %v329, 0.1
      %v394 = vmul.f32 %v330, 0.1
      %v395 = vmul.f32 %v331, 0.1
      %v396 = vmul.f32 %v332, 0.1
      %v397 = vmul.f32 %v333, 0.1
      %v398 = vmul.f32 %v334, 0.1
      %v399 = vmul.f32 %v335, 0.1
      %v400 = vmul.f32 %v336, 0.1
      %v401 = vmul.f32 %v337, 0.1
      %v402 = vmul.f32 %v338, 0.1
      %v403 = vmul.f32 %v339, 0.1
      %v404 = vmul.f32 %v340, 0.1
      %v405 = vmul.f32 %v341, 0.1
      %v406 = vmul.f32 %v342, 0.1
      %v407 = vmul.f32 %v343, 0.1
      %v408 = vmul.f32 %v344, 0.1
      %v409 = vmul.f32 %v345, 0.1
      %v410 = vmul.f32 %v346, 0.1
      %v411 = vmul.f32 %v347, 0.1
      %v412 = vmul.f32 %v348, 0.1
      %v413 = vmul.f32 %v349, 0.1
      %v414 = vmul.f32 %v350, 0.1
      %v415 = vmul.f32 %v351, 0.1
      %v416 = vsel %vm352, %v320, %v384
      %v417 = vsel %vm353, %v321, %v385
      %v418 = vsel %vm354, %v322, %v386
      %v419 = vsel %vm355, %v323, %v387
      %v420 = vsel %vm356, %v324, %v388
      %v421 = vsel %vm357, %v325, %v389
      %v422 = vsel %vm358, %v326, %v390
      %v423 = vsel %vm359, %v327, %v391
      %v424 = vsel %vm360, %v328, %v392
      %v425 = vsel %vm361, %v329, %v393
      %v426 = vsel %vm362, %v330, %v394
      %v427 = vsel %vm363, %v331, %v395
      %v428 = vsel %vm364, %v332, %v396
      %v429 = vsel %vm365, %v333, %v397
      %v430 = vsel %vm366, %v334, %v398
      %v431 = vsel %vm367, %v335, %v399
      %v432 = vsel %vm368, %v336, %v400
      %v433 = vsel %vm369, %v337, %v401
      %v434 = vsel %vm370, %v338, %v402
      %v435 = vsel %vm371, %v339, %v403
      %v436 = vsel %vm372, %v340, %v404
      %v437 = vsel %vm373, %v341, %v405
      %v438 = vsel %vm374, %v342, %v406
      %v439 = vsel %vm375, %v343, %v407
      %v440 = vsel %vm376, %v344, %v408
      %v441 = vsel %vm377, %v345, %v409
      %v442 = vsel %vm378, %v346, %v410
      %v443 = vsel %vm379, %v347, %v411
      %v444 = vsel %vm380, %v348, %v412
      %v445 = vsel %vm381, %v349, %v413
      %v446 = vsel %vm382, %v350, %v414
      %v447 = vsel %vm383, %v351, %v415
      %448 = vxpose.xlu0.b32.start [1/16] %v416, 128
      %449 = vxpose.xlu0.b32.cont [2/16] %v417, 128
      %450 = vxpose.xlu0.b32.cont [3/16] %v418, 128
      %451 = vxpose.xlu0.b32.cont [4/16] %v419, 128
      %452 = vxpose.xlu0.b32.cont [5/16] %v420, 128
      %453 = vxpose.xlu0.b32.cont [6/16] %v421, 128
      %454 = vxpose.xlu0.b32.cont [7/16] %v422, 128
      %455 = vxpose.xlu0.b32.cont [8/16] %v423, 128
      %456 = vxpose.xlu0.b32.cont [9/16] %v424, 128
      %457 = vxpose.xlu0.b32.cont [10/16] %v425, 128
      %458 = vxpose.xlu0.b32.cont [11/16] %v426, 128
      %459 = vxpose.xlu0.b32.cont [12/16] %v427, 128
      %460 = vxpose.xlu0.b32.cont [13/16] %v428, 128
      %461 = vxpose.xlu0.b32.cont [14/16] %v429, 128
      %462 = vxpose.xlu0.b32.cont [15/16] %v430, 128
      %463 = vxpose.xlu0.b32.end [16/16] %v431, 128
      %v464 = vpop.trf.xlu0
      %v465 = vpop.trf.xlu0
      %v466 = vpop.trf.xlu0
      %v467 = vpop.trf.xlu0
      %v468 = vpop.trf.xlu0
      %v469 = vpop.trf.xlu0
      %v470 = vpop.trf.xlu0
      %v471 = vpop.trf.xlu0
      %v472 = vpop.trf.xlu0
      %v473 = vpop.trf.xlu0
      %v474 = vpop.trf.xlu0
      %v475 = vpop.trf.xlu0
      %v476 = vpop.trf.xlu0
      %v477 = vpop.trf.xlu0
      %v478 = vpop.trf.xlu0
      %v479 = vpop.trf.xlu0
      %480 = vxpose.xlu0.b32.start [1/16] %v432, 128
      %481 = vxpose.xlu0.b32.cont [2/16] %v433, 128
      %482 = vxpose.xlu0.b32.cont [3/16] %v434, 128
      %483 = vxpose.xlu0.b32.cont [4/16] %v435, 128
      %484 = vxpose.xlu0.b32.cont [5/16] %v436, 128
      %485 = vxpose.xlu0.b32.cont [6/16] %v437, 128
      %486 = vxpose.xlu0.b32.cont [7/16] %v438, 128
      %487 = vxpose.xlu0.b32.cont [8/16] %v439, 128
      %488 = vxpose.xlu0.b32.cont [9/16] %v440, 128
      %489 = vxpose.xlu0.b32.cont [10/16] %v441, 128
      %490 = vxpose.xlu0.b32.cont [11/16] %v442, 128
      %491 = vxpose.xlu0.b32.cont [12/16] %v443, 128
      %492 = vxpose.xlu0.b32.cont [13/16] %v444, 128
      %493 = vxpose.xlu0.b32.cont [14/16] %v445, 128
      %494 = vxpose.xlu0.b32.cont [15/16] %v446, 128
      %495 = vxpose.xlu0.b32.end [16/16] %v447, 128
      %v496 = vpop.trf.xlu0
      %v497 = vpop.trf.xlu0
      %v498 = vpop.trf.xlu0
      %v499 = vpop.trf.xlu0
      %v500 = vpop.trf.xlu0
      %v501 = vpop.trf.xlu0
      %v502 = vpop.trf.xlu0
      %v503 = vpop.trf.xlu0
      %v504 = vpop.trf.xlu0
      %v505 = vpop.trf.xlu0
      %v506 = vpop.trf.xlu0
      %v507 = vpop.trf.xlu0
      %v508 = vpop.trf.xlu0
      %v509 = vpop.trf.xlu0
      %v510 = vpop.trf.xlu0
      %v511 = vpop.trf.xlu0
      %512 = vst [vmem:[%s208] sm:$0xff] %v464
      %513 = vst [vmem:[%s208 + $0x8] sm:$0xff] %v496
      %s514 = smul.u32 2, %s19
      %p515 = scmp.lt.s32.totalorder %s18, 1
      %s516 = scalar_select %p515, %s18, 1
      %p517 = scmp.lt.s32.totalorder %s514, 1
      %s518 = scalar_select %p517, %s514, 1
      %s519 = smul.addr %s516, 2
      %s520 = sadd.s32 %s518, %s519
      %s521 = smul.addr %s520, 8
      %s522 = scalar_lea.vmem %s3, %s521
      // Predicated region
      $region33: #{cnn_block.3} parent=31 // pred_check
        %p523 = pneg %p116
      $region34: #{cnn_block.3} parent=31 // pred_check_branch
        %525 = sbr.rel (%p523) target = $region36
      $region35: #{cnn_block.3} parent=31 // pred_region
        %s526 = smul.u32 2, %s19
      $region36: #{cnn_block.3} parent=31 // pred_fallthru
        _
    $region32: #{cnn_block.3} parent=5 // pred_fallthru
      _
    %p527 = scmp.le.s32.totalorder 2, %s9
    // Predicated region
    $region37: #{cnn_block.3} parent=5 // pred_check
      %p528 = pneg %p527
    $region38: #{cnn_block.3} parent=5 // pred_check_branch
      %530 = sbr.rel (%p528) target = $region40
    $region39: #{cnn_block.3} parent=5 // pred_region
      %s531 = ssub.s32 %s9, 2
      // Predicated region
      $region41: #{cnn_block.3} parent=39 // pred_check
        %p532 = pneg %p122
      $region42: #{cnn_block.3} parent=39 // pred_check_branch
        %534 = sbr.rel (%p532) target = $region44
      $region43: #{cnn_block.3} parent=39 // pred_region
        %s535 = smul.u32 2, %s21
        %p536 = scmp.lt.s32.totalorder %s20, 1
        %s537 = scalar_select %p536, %s20, 1
        %p538 = scmp.lt.s32.totalorder %s535, 1
        %s539 = scalar_select %p538, %s535, 1
        %s540 = smul.addr %s537, 2
        %s541 = sadd.s32 %s539, %s540
        %s542 = smul.addr %s541, 8
        %s543 = scalar_lea.vmem %s3, %s542
      $region44: #{cnn_block.3} parent=39 // pred_fallthru
        _
    $region40: #{cnn_block.3} parent=5 // pred_fallthru
      _
  $region6: #{cnn_block.3} parent=0 // loop_footer
    %s13 = sadd.s32 1, %s9
  $region7: #{cnn_block.3} parent=0 // loop_footer_branch
    %8 = sbr.rel target = $region3
  $region8: #{cnn_block.3} parent=0 // loop_exit
    _

// kernel: cnn_block.2
$region0: #{cnn_block.2}
  #allocation0 [shape = 'u32[]', space=smem, size = 0x4, offset = 0x4, fixed_abs, tag = 'smem constant byte address 0x4 - core index']
  #allocation1 [shape = 'u32[144,128]{1,0:T(1,128)}', space=vmem, size = 0x12000, scoped, tag = 'internal scratch']
  %s0 = inlined_call_operand.vmem [shape: bf16[2,18,18,4], index: 0, kind: input, shape index: {}]
  %s1 = inlined_call_operand.vmem [shape: bf16[36,8], index: 1, kind: input, shape index: {}]
  %s2 = inlined_call_operand.vmem [shape: bf16[2,256,8], index: 2, kind: output, shape index: {0}]
  %s3 = inlined_call_operand.vmem [shape: f32[2,1,2,8], index: 3, kind: output, shape index: {1}]
  %4 = xla_tuple %s2, %s3
  %s5 = sld [smem:[#allocation0]]
  $region49: #{cnn_block.2} parent=0
    _
  %s7 = ssub.s32 1, %s5
  %s8 = scalar_select 0, %s7, %s5
  loop: start=0, step=1, limit=4
  $region2: #{cnn_block.2} parent=0 // loop_pre_header
    _
  $region3: #{cnn_block.2} parent=0 // loop_header
    %s10 = sphi 0, %s14
    %p11 = scmp.ge.s32.totalorder %s10, 4
    %s17 = sphi 0, %s29
    %s18 = sphi 0, %s25
    %s19 = sphi 0, %s17
    %s20 = sphi 0, %s18
    %s21 = sphi 0, %s19
    %s22 = sphi 0, %s20
    %s32 = sphi 0, %s34
    %s35 = sphi 0, %s32
    %s36 = sphi 0, %s35
    %s52 = sphi 0, %s36
    %s56 = sphi 0, %s56
    %s58 = sphi 0, %s56
    %s59 = sphi 0, %s58
    %s73 = sphi 0, %s59
    %s81 = sphi 0, %s83
    %s84 = sphi 0, %s81
    %s85 = sphi 0, %s84
    %s101 = sphi 0, %s85
    %s109 = sphi 0, %s111
    %s112 = sphi 0, %s109
    %s113 = sphi 0, %s112
    %s129 = sphi 0, %s113
  $region4: #{cnn_block.2} parent=0 // loop_header_branch
    %13 = sbr.rel (%p11) target = $region8
  $region5: #{cnn_block.2} parent=0 // loop_body
    %s15 = ssub.s32 %s10, 1
    %s16 = ssub.s32 %s10, 2
    %s23 = sadd.s32 1, %s18
    %p24 = scmp.ge.s32.totalorder %s23, 1
    %s25 = scalar_select %p24, 0, %s23
    %s26 = sadd.s32 1, %s17
    %s27 = scalar_select %p24, %s26, %s17
    %p28 = scmp.ge.s32.totalorder %s27, 2
    %s29 = scalar_select %p28, 0, %s27
    %s30 = ssub.s32 %s17, %s29
    %p31 = scmp.eq.s32.totalorder %s30, 0
    %s33 = sadd.s32 %s32, 1
    %s34 = scalar_select %p31, %s32, %s33
    %p37 = pneg %p31
    %p38 = scmp.eq.s32.totalorder %s10, 1
    %p39 = por %p37, %p38
    %p40 = scmp.ne.s32.totalorder %s32, %s35
    %p41 = scmp.eq.s32.totalorder %s10, 0
    %p42 = por %p40, %p41
    %p43 = scmp.ne.s32.totalorder %s32, %s35
    %p44 = scmp.eq.s32.totalorder %s15, 1
    %p45 = por %p43, %p44
    %p46 = scmp.ne.s32.totalorder %s35, %s36
    %p47 = scmp.eq.s32.totalorder %s15, 0
    %p48 = por %p46, %p47
    %p49 = scmp.ne.s32.totalorder %s35, %s36
    %p50 = scmp.eq.s32.totalorder %s16, 1
    %p51 = por %p49, %p50
    %p53 = scmp.ne.s32.totalorder %s36, %s52
    %p54 = scmp.eq.s32.totalorder %s16, 0
    %p55 = por %p53, %p54
    %s57 = sadd.s32 %s56, 1
    %p60 = scmp.eq.s32.totalorder %s10, 1
    %p61 = scmp.ne.s32.totalorder %s56, %s58
    %p62 = scmp.eq.s32.totalorder %s10, 0
    %p63 = por %p61, %p62
    %p64 = scmp.ne.s32.totalorder %s56, %s58
    %p65 = scmp.eq.s32.totalorder %s15, 1
    %p66 = por %p64, %p65
    %p67 = scmp.ne.s32.totalorder %s58, %s59
    %p68 = scmp.eq.s32.totalorder %s15, 0
    %p69 = por %p67, %p68
    %p70 = scmp.ne.s32.totalorder %s58, %s59
    %p71 = scmp.eq.s32.totalorder %s16, 1
    %p72 = por %p70, %p71
    %p74 = scmp.ne.s32.totalorder %s59, %s73
    %p75 = scmp.eq.s32.totalorder %s16, 0
    %p76 = por %p74, %p75
    %s77 = ssub.s32 %s17, %s29
    %s78 = ssub.s32 %s18, %s25
    %s79 = sor.u32 %s77, %s78
    %p80 = scmp.eq.s32.totalorder %s79, 0
    %s82 = sadd.s32 %s81, 1
    %s83 = scalar_select %p80, %s81, %s82
    %p86 = pneg %p80
    %p87 = scmp.eq.s32.totalorder %s10, 1
    %p88 = por %p86, %p87
    %p89 = scmp.ne.s32.totalorder %s81, %s84
    %p90 = scmp.eq.s32.totalorder %s10, 0
    %p91 = por %p89, %p90
    %p92 = scmp.ne.s32.totalorder %s81, %s84
    %p93 = scmp.eq.s32.totalorder %s15, 1
    %p94 = por %p92, %p93
    %p95 = scmp.ne.s32.totalorder %s84, %s85
    %p96 = scmp.eq.s32.totalorder %s15, 0
    %p97 = por %p95, %p96
    %p98 = scmp.ne.s32.totalorder %s84, %s85
    %p99 = scmp.eq.s32.totalorder %s16, 1
    %p100 = por %p98, %p99
    %p102 = scmp.ne.s32.totalorder %s85, %s101
    %p103 = scmp.eq.s32.totalorder %s16, 0
    %p104 = por %p102, %p103
    %s105 = ssub.s32 %s17, %s29
    %s106 = ssub.s32 %s18, %s25
    %s107 = sor.u32 %s105, %s106
    %p108 = scmp.eq.s32.totalorder %s107, 0
    %s110 = sadd.s32 %s109, 1
    %s111 = scalar_select %p108, %s109, %s110
    %p114 = pneg %p108
    %p115 = scmp.eq.s32.totalorder %s10, 1
    %p116 = por %p114, %p115
    %p117 = scmp.ne.s32.totalorder %s109, %s112
    %p118 = scmp.eq.s32.totalorder %s10, 0
    %p119 = por %p117, %p118
    %p120 = scmp.ne.s32.totalorder %s109, %s112
    %p121 = scmp.eq.s32.totalorder %s15, 1
    %p122 = por %p120, %p121
    %p123 = scmp.ne.s32.totalorder %s112, %s113
    %p124 = scmp.eq.s32.totalorder %s15, 0
    %p125 = por %p123, %p124
    %p126 = scmp.ne.s32.totalorder %s112, %s113
    %p127 = scmp.eq.s32.totalorder %s16, 1
    %p128 = por %p126, %p127
    %p130 = scmp.ne.s32.totalorder %s113, %s129
    %p131 = scmp.eq.s32.totalorder %s16, 0
    %p132 = por %p130, %p131
    %p133 = scmp.le.s32.totalorder 1, %s10
    %p134 = scmp.lt.s32.totalorder %s10, 3
    %p135 = pnand %p133, %p134
    %p136 = pneg %p135
    // Predicated region
    $region9: #{cnn_block.2} parent=5 // pred_check
      _
    $region10: #{cnn_block.2} parent=5 // pred_check_branch
      %138 = sbr.rel (%p135) target = $region12
    $region11: #{cnn_block.2} parent=5 // pred_region
      %s139 = ssub.s32 %s10, 1
      // Predicated region
      $region13: #{cnn_block.2} parent=11 // pred_check
        %p140 = pneg %p69
      $region14: #{cnn_block.2} parent=11 // pred_check_branch
        %142 = sbr.rel (%p140) target = $region16
      $region15: #{cnn_block.2} parent=11 // pred_region
        _
      $region16: #{cnn_block.2} parent=11 // pred_fallthru
        _
    $region12: #{cnn_block.2} parent=5 // pred_fallthru
      _
    %p143 = scmp.lt.s32.totalorder %s10, 2
    // Predicated region
    $region17: #{cnn_block.2} parent=5 // pred_check
      %p144 = pneg %p143
    $region18: #{cnn_block.2} parent=5 // pred_check_branch
      %146 = sbr.rel (%p144) target = $region20
    $region19: #{cnn_block.2} parent=5 // pred_region
      // Predicated region
      $region21: #{cnn_block.2} parent=19 // pred_check
        %p147 = pneg %p42
      $region22: #{cnn_block.2} parent=19 // pred_check_branch
        %149 = sbr.rel (%p147) target = $region24
      $region23: #{cnn_block.2} parent=19 // pred_region
        %p150 = scmp.lt.s32.totalorder %s17, 1
        %s151 = scalar_select %p150, %s17, 1
        %s152 = smul.addr %s151, 54
        %s153 = smul.addr %s152, 4
        %s154 = scalar_lea.vmem %s0, %s153
      $region24: #{cnn_block.2} parent=19 // pred_fallthru
        _
    $region20: #{cnn_block.2} parent=5 // pred_fallthru
      _
    %p155 = scmp.le.s32.totalorder 1, %s10
    %p156 = scmp.lt.s32.totalorder %s10, 3
    %p157 = pnand %p155, %p156
    %p158 = pneg %p157
    // Predicated region
    $region25: #{cnn_block.2} parent=5 // pred_check
      _
    $region26: #{cnn_block.2} parent=5 // pred_check_branch
      %160 = sbr.rel (%p157) target = $region28
    $region27: #{cnn_block.2} parent=5 // pred_region
      %s161 = ssub.s32 %s10, 1
      %p162 = scmp.lt.s32.totalorder %s19, 1
      %s163 = scalar_select %p162, %s19, 1
      %s164 = smul.addr %s163, 54
      %s165 = smul.addr %s164, 4
      %s166 = scalar_lea.vmem %s0, %s165
      %p167 = pneg %p48
      %p168 = pneg %p45
      %p169 = pneg %p69
      %p170 = pneg %p66
      %p171 = pneg %p97
      %p172 = pneg %p94
      %s173 = smul.u32 32, %s20
      %p174 = scmp.lt.s32.totalorder %s19, 1
      %s175 = scalar_select %p174, %s19, 1
      %p176 = scmp.lt.s32.totalorder %s173, 31
      %s177 = scalar_select %p176, %s173, 31
      %s178 = smul.addr %s175, 32
      %s179 = sadd.s32 %s177, %s178
      %s180 = smul.addr %s179, 4
      %s181 = scalar_lea.vmem %s2, %s180
      %p182 = pneg %p125
      %p183 = pneg %p122
      %p184 = scmp.lt.s32.totalorder %s19, 1
      %s185 = scalar_select %p184, %s19, 1
      %p186 = scmp.lt.s32.totalorder %s20, 0
      %s187 = scalar_select %p186, %s20, 0
      %s188 = sadd.s32 %s187, %s185
      %s189 = smul.addr %s188, 2
      %s190 = scalar_lea.vmem %s3, %s189
      %p191 = scmp.lt.s32.totalorder %s19, 1
      %s192 = scalar_select %p191, %s19, 1
      %s193 = smul.addr %s192, 54
      %s194 = smul.addr %s193, 4
      %s195 = scalar_lea.vmem %s0, %s194
      %s196 = smul.u32 32, %s20
      %p197 = scmp.lt.s32.totalorder %s19, 1
      %s198 = scalar_select %p197, %s19, 1
      %p199 = scmp.lt.s32.totalorder %s196, 31
      %s200 = scalar_select %p199, %s196, 31
      %s201 = smul.addr %s198, 32
      %s202 = sadd.s32 %s200, %s201
      %s203 = smul.addr %s202, 4
      %s204 = scalar_lea.vmem %s2, %s203
      %s205 = smul.u32 32, %s20
      %p206 = scmp.lt.s32.totalorder %s19, 1
      %s207 = scalar_select %p206, %s19, 1
      %p208 = scmp.lt.s32.totalorder %s20, 0
      %s209 = scalar_select %p208, %s20, 0
      %s210 = sadd.s32 %s209, %s207
      %s211 = smul.addr %s210, 2
      %s212 = scalar_lea.vmem %s3, %s211
      %s214 = smul.u32 %s20, 16
      %s215 = smul.u32 %s214, 3
      %s216 = smul.addr %s215, 4
      %s217 = scalar_lea.vmem %s195, %s216
      %v218 = vld [vmem:[%s217] sm:$0xf]
      %v219 = vld [vmem:[%s217 + $0x4] sm:$0xf]
      %v220 = vld [vmem:[%s217 + $0xc] sm:$0xf]
      %v221 = vld [vmem:[%s217 + $0x10] sm:$0xf]
      %v222 = vld [vmem:[%s217 + $0x18] sm:$0xf]
      %v223 = vld [vmem:[%s217 + $0x1c] sm:$0xf]
      %v224 = vld [vmem:[%s217 + $0x24] sm:$0xf]
      %v225 = vld [vmem:[%s217 + $0x28] sm:$0xf]
      %v226 = vld [vmem:[%s217 + $0x30] sm:$0xf]
      %v227 = vld [vmem:[%s217 + $0x34] sm:$0xf]
      %v228 = vld [vmem:[%s217 + $0x3c] sm:$0xf]
      %v229 = vld [vmem:[%s217 + $0x40] sm:$0xf]
      %v230 = vld [vmem:[%s217 + $0x48] sm:$0xf]
      %v231 = vld [vmem:[%s217 + $0x4c] sm:$0xf]
      %v232 = vld [vmem:[%s217 + $0x54] sm:$0xf]
      %v233 = vld [vmem:[%s217 + $0x58] sm:$0xf]
      %v234 = vld [vmem:[%s217 + $0x60] sm:$0xf]
      %v235 = vld [vmem:[%s217 + $0x64] sm:$0xf]
      %v236 = vld [vmem:[%s217 + $0x6c] sm:$0xf]
      %v237 = vld [vmem:[%s217 + $0x70] sm:$0xf]
      %v238 = vld [vmem:[%s217 + $0x78] sm:$0xf]
      %v239 = vld [vmem:[%s217 + $0x7c] sm:$0xf]
      %v240 = vld [vmem:[%s217 + $0x84] sm:$0xf]
      %v241 = vld [vmem:[%s217 + $0x88] sm:$0xf]
      %v242 = vld [vmem:[%s217 + $0x90] sm:$0xf]
      %v243 = vld [vmem:[%s217 + $0x94] sm:$0xf]
      %v244 = vld [vmem:[%s217 + $0x9c] sm:$0xf]
      %v245 = vld [vmem:[%s217 + $0xa0] sm:$0xf]
      %v246 = vld [vmem:[%s217 + $0xa8] sm:$0xf]
      %v247 = vld [vmem:[%s217 + $0xac] sm:$0xf]
      %v248 = vld [vmem:[%s217 + $0xb4] sm:$0xf]
      %v249 = vld [vmem:[%s217 + $0xb8] sm:$0xf]
      %v250 = vld [vmem:[%s217 + $0x8] sm:$0x1]
      %v251 = vld [vmem:[%s217 + $0x14] sm:$0x1]
      %v252 = vld [vmem:[%s217 + $0x20] sm:$0x1]
      %v253 = vld [vmem:[%s217 + $0x2c] sm:$0x1]
      %v254 = vld [vmem:[%s217 + $0x38] sm:$0x1]
      %v255 = vld [vmem:[%s217 + $0x44] sm:$0x1]
      %v256 = vld [vmem:[%s217 + $0x50] sm:$0x1]
      %v257 = vld [vmem:[%s217 + $0x5c] sm:$0x1]
      %v258 = vld [vmem:[%s217 + $0x68] sm:$0x1]
      %v259 = vld [vmem:[%s217 + $0x74] sm:$0x1]
      %v260 = vld [vmem:[%s217 + $0x80] sm:$0x1]
      %v261 = vld [vmem:[%s217 + $0x8c] sm:$0x1]
      %v262 = vld [vmem:[%s217 + $0x98] sm:$0x1]
      %v263 = vld [vmem:[%s217 + $0xa4] sm:$0x1]
      %v264 = vld [vmem:[%s217 + $0xb0] sm:$0x1]
      %v265 = vld [vmem:[%s217 + $0xbc] sm:$0x1]
      %vm266 = vsmask.f32 3328
      %vm267 = vsmask.f32 7440
      %vm268 = vmor %vm266, %vm267
      %v270 = vshrl.u32 %v218, 16
      %v272 = vrot.slane %v270, 4
      %v273 = vshll.u32 %v218, 16
      %v275 = vrot.slane %v273, 5
      %v276 = vor.u32 %v272, %v275
      %v277 = vrot.slane %v276, 4
      %v279 = vshll.u32 %v219, 16
      %v281 = vrot.slane %v279, 5
      %v282 = vsel %vm268, %v277, %v281
      %v283 = vshrl.u32 %v219, 16
      %v285 = vrot.slane %v283, 4
      %v286 = vor.u32 %v285, %v281
      %v287 = vrot.slane %v286, 4
      %v289 = vshll.u32 %v250, 16
      %v291 = vrot.slane %v289, 5
      %v292 = vsel %vm268, %v287, %v291
      %v294 = vshrl.u32 %v220, 16
      %v296 = vrot.slane %v294, 4
      %v297 = vshll.u32 %v220, 16
      %v299 = vrot.slane %v297, 5
      %v300 = vor.u32 %v296, %v299
      %v301 = vrot.slane %v300, 4
      %v303 = vshll.u32 %v221, 16
      %v305 = vrot.slane %v303, 5
      %v306 = vsel %vm268, %v301, %v305
      %v307 = vshrl.u32 %v221, 16
      %v309 = vrot.slane %v307, 4
      %v310 = vor.u32 %v309, %v305
      %v311 = vrot.slane %v310, 4
      %v313 = vshll.u32 %v251, 16
      %v315 = vrot.slane %v313, 5
      %v316 = vsel %vm268, %v311, %v315
      %v318 = vshrl.u32 %v222, 16
      %v320 = vrot.slane %v318, 4
      %v321 = vshll.u32 %v222, 16
      %v323 = vrot.slane %v321, 5
      %v324 = vor.u32 %v320, %v323
      %v325 = vrot.slane %v324, 4
      %v327 = vshll.u32 %v223, 16
      %v329 = vrot.slane %v327, 5
      %v330 = vsel %vm268, %v325, %v329
      %v331 = vshrl.u32 %v223, 16
      %v333 = vrot.slane %v331, 4
      %v334 = vor.u32 %v333, %v329
      %v335 = vrot.slane %v334, 4
      %v337 = vshll.u32 %v252, 16
      %v339 = vrot.slane %v337, 5
      %v340 = vsel %vm268, %v335, %v339
      %v342 = vshrl.u32 %v224, 16
      %v344 = vrot.slane %v342, 4
      %v345 = vshll.u32 %v224, 16
      %v347 = vrot.slane %v345, 5
      %v348 = vor.u32 %v344, %v347
      %v349 = vrot.slane %v348, 4
      %v351 = vshll.u32 %v225, 16
      %v353 = vrot.slane %v351, 5
      %v354 = vsel %vm268, %v349, %v353
      %v355 = vshrl.u32 %v225, 16
      %v357 = vrot.slane %v355, 4
      %v358 = vor.u32 %v357, %v353
      %v359 = vrot.slane %v358, 4
      %v361 = vshll.u32 %v253, 16
      %v363 = vrot.slane %v361, 5
      %v364 = vsel %vm268, %v359, %v363
      %v366 = vshrl.u32 %v226, 16
      %v368 = vrot.slane %v366, 4
      %v369 = vshll.u32 %v226, 16
      %v371 = vrot.slane %v369, 5
      %v372 = vor.u32 %v368, %v371
      %v373 = vrot.slane %v372, 4
      %v375 = vshll.u32 %v227, 16
      %v377 = vrot.slane %v375, 5
      %v378 = vsel %vm268, %v373, %v377
      %v379 = vshrl.u32 %v227, 16
      %v381 = vrot.slane %v379, 4
      %v382 = vor.u32 %v381, %v377
      %v383 = vrot.slane %v382, 4
      %v385 = vshll.u32 %v254, 16
      %v387 = vrot.slane %v385, 5
      %v388 = vsel %vm268, %v383, %v387
      %v390 = vshrl.u32 %v228, 16
      %v392 = vrot.slane %v390, 4
      %v393 = vshll.u32 %v228, 16
      %v395 = vrot.slane %v393, 5
      %v396 = vor.u32 %v392, %v395
      %v397 = vrot.slane %v396, 4
      %v399 = vshll.u32 %v229, 16
      %v401 = vrot.slane %v399, 5
      %v402 = vsel %vm268, %v397, %v401
      %v403 = vshrl.u32 %v229, 16
      %v405 = vrot.slane %v403, 4
      %v406 = vor.u32 %v405, %v401
      %v407 = vrot.slane %v406, 4
      %v409 = vshll.u32 %v255, 16
      %v411 = vrot.slane %v409, 5
      %v412 = vsel %vm268, %v407, %v411
      %v414 = vshrl.u32 %v230, 16
      %v416 = vrot.slane %v414, 4
      %v417 = vshll.u32 %v230, 16
      %v419 = vrot.slane %v417, 5
      %v420 = vor.u32 %v416, %v419
      %v421 = vrot.slane %v420, 4
      %v423 = vshll.u32 %v231, 16
      %v425 = vrot.slane %v423, 5
      %v426 = vsel %vm268, %v421, %v425
      %v427 = vshrl.u32 %v231, 16
      %v429 = vrot.slane %v427, 4
      %v430 = vor.u32 %v429, %v425
      %v431 = vrot.slane %v430, 4
      %v433 = vshll.u32 %v256, 16
      %v435 = vrot.slane %v433, 5
      %v436 = vsel %vm268, %v431, %v435
      %v438 = vshrl.u32 %v232, 16
      %v440 = vrot.slane %v438, 4
      %v441 = vshll.u32 %v232, 16
      %v443 = vrot.slane %v441, 5
      %v444 = vor.u32 %v440, %v443
      %v445 = vrot.slane %v444, 4
      %v447 = vshll.u32 %v233, 16
      %v449 = vrot.slane %v447, 5
      %v450 = vsel %vm268, %v445, %v449
      %v451 = vshrl.u32 %v233, 16
      %v453 = vrot.slane %v451, 4
      %v454 = vor.u32 %v453, %v449
      %v455 = vrot.slane %v454, 4
      %v457 = vshll.u32 %v257, 16
      %v459 = vrot.slane %v457, 5
      %v460 = vsel %vm268, %v455, %v459
      %v462 = vshrl.u32 %v234, 16
      %v464 = vrot.slane %v462, 4
      %v465 = vshll.u32 %v234, 16
      %v467 = vrot.slane %v465, 5
      %v468 = vor.u32 %v464, %v467
      %v469 = vrot.slane %v468, 4
      %v471 = vshll.u32 %v235, 16
      %v473 = vrot.slane %v471, 5
      %v474 = vsel %vm268, %v469, %v473
      %v475 = vshrl.u32 %v235, 16
      %v477 = vrot.slane %v475, 4
      %v478 = vor.u32 %v477, %v473
      %v479 = vrot.slane %v478, 4
      %v481 = vshll.u32 %v258, 16
      %v483 = vrot.slane %v481, 5
      %v484 = vsel %vm268, %v479, %v483
      %v486 = vshrl.u32 %v236, 16
      %v488 = vrot.slane %v486, 4
      %v489 = vshll.u32 %v236, 16
      %v491 = vrot.slane %v489, 5
      %v492 = vor.u32 %v488, %v491
      %v493 = vrot.slane %v492, 4
      %v495 = vshll.u32 %v237, 16
      %v497 = vrot.slane %v495, 5
      %v498 = vsel %vm268, %v493, %v497
      %v499 = vshrl.u32 %v237, 16
      %v501 = vrot.slane %v499, 4
      %v502 = vor.u32 %v501, %v497
      %v503 = vrot.slane %v502, 4
      %v505 = vshll.u32 %v259, 16
      %v507 = vrot.slane %v505, 5
      %v508 = vsel %vm268, %v503, %v507
      %v510 = vshrl.u32 %v238, 16
      %v512 = vrot.slane %v510, 4
      %v513 = vshll.u32 %v238, 16
      %v515 = vrot.slane %v513, 5
      %v516 = vor.u32 %v512, %v515
      %v517 = vrot.slane %v516, 4
      %v519 = vshll.u32 %v239, 16
      %v521 = vrot.slane %v519, 5
      %v522 = vsel %vm268, %v517, %v521
      %v523 = vshrl.u32 %v239, 16
      %v525 = vrot.slane %v523, 4
      %v526 = vor.u32 %v525, %v521
      %v527 = vrot.slane %v526, 4
      %v529 = vshll.u32 %v260, 16
      %v531 = vrot.slane %v529, 5
      %v532 = vsel %vm268, %v527, %v531
      %v534 = vshrl.u32 %v240, 16
      %v536 = vrot.slane %v534, 4
      %v537 = vshll.u32 %v240, 16
      %v539 = vrot.slane %v537, 5
      %v540 = vor.u32 %v536, %v539
      %v541 = vrot.slane %v540, 4
      %v543 = vshll.u32 %v241, 16
      %v545 = vrot.slane %v543, 5
      %v546 = vsel %vm268, %v541, %v545
      %v547 = vshrl.u32 %v241, 16
      %v549 = vrot.slane %v547, 4
      %v550 = vor.u32 %v549, %v545
      %v551 = vrot.slane %v550, 4
      %v553 = vshll.u32 %v261, 16
      %v555 = vrot.slane %v553, 5
      %v556 = vsel %vm268, %v551, %v555
      %v558 = vshrl.u32 %v242, 16
      %v560 = vrot.slane %v558, 4
      %v561 = vshll.u32 %v242, 16
      %v563 = vrot.slane %v561, 5
      %v564 = vor.u32 %v560, %v563
      %v565 = vrot.slane %v564, 4
      %v567 = vshll.u32 %v243, 16
      %v569 = vrot.slane %v567, 5
      %v570 = vsel %vm268, %v565, %v569
      %v571 = vshrl.u32 %v243, 16
      %v573 = vrot.slane %v571, 4
      %v574 = vor.u32 %v573, %v569
      %v575 = vrot.slane %v574, 4
      %v577 = vshll.u32 %v262, 16
      %v579 = vrot.slane %v577, 5
      %v580 = vsel %vm268, %v575, %v579
      %v582 = vshrl.u32 %v244, 16
      %v584 = vrot.slane %v582, 4
      %v585 = vshll.u32 %v244, 16
      %v587 = vrot.slane %v585, 5
      %v588 = vor.u32 %v584, %v587
      %v589 = vrot.slane %v588, 4
      %v591 = vshll.u32 %v245, 16
      %v593 = vrot.slane %v591, 5
      %v594 = vsel %vm268, %v589, %v593
      %v595 = vshrl.u32 %v245, 16
      %v597 = vrot.slane %v595, 4
      %v598 = vor.u32 %v597, %v593
      %v599 = vrot.slane %v598, 4
      %v601 = vshll.u32 %v263, 16
      %v603 = vrot.slane %v601, 5
      %v604 = vsel %vm268, %v599, %v603
      %v606 = vshrl.u32 %v246, 16
      %v608 = vrot.slane %v606, 4
      %v609 = vshll.u32 %v246, 16
      %v611 = vrot.slane %v609, 5
      %v612 = vor.u32 %v608, %v611
      %v613 = vrot.slane %v612, 4
      %v615 = vshll.u32 %v247, 16
      %v617 = vrot.slane %v615, 5
      %v618 = vsel %vm268, %v613, %v617
      %v619 = vshrl.u32 %v247, 16
      %v621 = vrot.slane %v619, 4
      %v622 = vor.u32 %v621, %v617
      %v623 = vrot.slane %v622, 4
      %v625 = vshll.u32 %v264, 16
      %v627 = vrot.slane %v625, 5
      %v628 = vsel %vm268, %v623, %v627
      %v630 = vshrl.u32 %v248, 16
      %v632 = vrot.slane %v630, 4
      %v633 = vshll.u32 %v248, 16
      %v635 = vrot.slane %v633, 5
      %v636 = vor.u32 %v632, %v635
      %v637 = vrot.slane %v636, 4
      %v639 = vshll.u32 %v249, 16
      %v641 = vrot.slane %v639, 5
      %v642 = vsel %vm268, %v637, %v641
      %v643 = vshrl.u32 %v249, 16
      %v645 = vrot.slane %v643, 4
      %v646 = vor.u32 %v645, %v641
      %v647 = vrot.slane %v646, 4
      %v649 = vshll.u32 %v265, 16
      %v651 = vrot.slane %v649, 5
      %v652 = vsel %vm268, %v647, %v651
      %v653 = vld [vmem:[%s217] sm:$0xe]
      %v654 = vld [vmem:[%s217 + $0xc] sm:$0xe]
      %v655 = vld [vmem:[%s217 + $0x18] sm:$0xe]
      %v656 = vld [vmem:[%s217 + $0x24] sm:$0xe]
      %v657 = vld [vmem:[%s217 + $0x30] sm:$0xe]
      %v658 = vld [vmem:[%s217 + $0x3c] sm:$0xe]
      %v659 = vld [vmem:[%s217 + $0x48] sm:$0xe]
      %v660 = vld [vmem:[%s217 + $0x54] sm:$0xe]
      %v661 = vld [vmem:[%s217 + $0x60] sm:$0xe]
      %v662 = vld [vmem:[%s217 + $0x6c] sm:$0xe]
      %v663 = vld [vmem:[%s217 + $0x78] sm:$0xe]
      %v664 = vld [vmem:[%s217 + $0x84] sm:$0xe]
      %v665 = vld [vmem:[%s217 + $0x90] sm:$0xe]
      %v666 = vld [vmem:[%s217 + $0x9c] sm:$0xe]
      %v667 = vld [vmem:[%s217 + $0xa8] sm:$0xe]
      %v668 = vld [vmem:[%s217 + $0xb4] sm:$0xe]
      %vm717 = vcmask 1042432
      %vm718 = vcmask 1046532
      %vm719 = vmor %vm717, %vm718
      %v720 = vrot.slane %v653, 5
      %v721 = vrot.slane %v720, 4
      %v722 = vrot.slane %v219, 5
      %v723 = vsel %vm719, %v721, %v722
      %v724 = vrot.slane %v722, 4
      %v725 = vrot.slane %v250, 5
      %v726 = vsel %vm719, %v724, %v725
      %v727 = vrot.slane %v654, 5
      %v728 = vrot.slane %v727, 4
      %v729 = vrot.slane %v221, 5
      %v730 = vsel %vm719, %v728, %v729
      %v731 = vrot.slane %v729, 4
      %v732 = vrot.slane %v251, 5
      %v733 = vsel %vm719, %v731, %v732
      %v734 = vrot.slane %v655, 5
      %v735 = vrot.slane %v734, 4
      %v736 = vrot.slane %v223, 5
      %v737 = vsel %vm719, %v735, %v736
      %v738 = vrot.slane %v736, 4
      %v739 = vrot.slane %v252, 5
      %v740 = vsel %vm719, %v738, %v739
      %v741 = vrot.slane %v656, 5
      %v742 = vrot.slane %v741, 4
      %v743 = vrot.slane %v225, 5
      %v744 = vsel %vm719, %v742, %v743
      %v745 = vrot.slane %v743, 4
      %v746 = vrot.slane %v253, 5
      %v747 = vsel %vm719, %v745, %v746
      %v748 = vrot.slane %v657, 5
      %v749 = vrot.slane %v748, 4
      %v750 = vrot.slane %v227, 5
      %v751 = vsel %vm719, %v749, %v750
      %v752 = vrot.slane %v750, 4
      %v753 = vrot.slane %v254, 5
      %v754 = vsel %vm719, %v752, %v753
      %v755 = vrot.slane %v658, 5
      %v756 = vrot.slane %v755, 4
      %v757 = vrot.slane %v229, 5
      %v758 = vsel %vm719, %v756, %v757
      %v759 = vrot.slane %v757, 4
      %v760 = vrot.slane %v255, 5
      %v761 = vsel %vm719, %v759, %v760
      %v762 = vrot.slane %v659, 5
      %v763 = vrot.slane %v762, 4
      %v764 = vrot.slane %v231, 5
      %v765 = vsel %vm719, %v763, %v764
      %v766 = vrot.slane %v764, 4
      %v767 = vrot.slane %v256, 5
      %v768 = vsel %vm719, %v766, %v767
      %v769 = vrot.slane %v660, 5
      %v770 = vrot.slane %v769, 4
      %v771 = vrot.slane %v233, 5
      %v772 = vsel %vm719, %v770, %v771
      %v773 = vrot.slane %v771, 4
      %v774 = vrot.slane %v257, 5
      %v775 = vsel %vm719, %v773, %v774
      %v776 = vrot.slane %v661, 5
      %v777 = vrot.slane %v776, 4
      %v778 = vrot.slane %v235, 5
      %v779 = vsel %vm719, %v777, %v778
      %v780 = vrot.slane %v778, 4
      %v781 = vrot.slane %v258, 5
      %v782 = vsel %vm719, %v780, %v781
      %v783 = vrot.slane %v662, 5
      %v784 = vrot.slane %v783, 4
      %v785 = vrot.slane %v237, 5
      %v786 = vsel %vm719, %v784, %v785
      %v787 = vrot.slane %v785, 4
      %v788 = vrot.slane %v259, 5
      %v789 = vsel %vm719, %v787, %v788
      %v790 = vrot.slane %v663, 5
      %v791 = vrot.slane %v790, 4
      %v792 = vrot.slane %v239, 5
      %v793 = vsel %vm719, %v791, %v792
      %v794 = vrot.slane %v792, 4
      %v795 = vrot.slane %v260, 5
      %v796 = vsel %vm719, %v794, %v795
      %v797 = vrot.slane %v664, 5
      %v798 = vrot.slane %v797, 4
      %v799 = vrot.slane %v241, 5
      %v800 = vsel %vm719, %v798, %v799
      %v801 = vrot.slane %v799, 4
      %v802 = vrot.slane %v261, 5
      %v803 = vsel %vm719, %v801, %v802
      %v804 = vrot.slane %v665, 5
      %v805 = vrot.slane %v804, 4
      %v806 = vrot.slane %v243, 5
      %v807 = vsel %vm719, %v805, %v806
      %v808 = vrot.slane %v806, 4
      %v809 = vrot.slane %v262, 5
      %v810 = vsel %vm719, %v808, %v809
      %v811 = vrot.slane %v666, 5
      %v812 = vrot.slane %v811, 4
      %v813 = vrot.slane %v245, 5
      %v814 = vsel %vm719, %v812, %v813
      %v815 = vrot.slane %v813, 4
      %v816 = vrot.slane %v263, 5
      %v817 = vsel %vm719, %v815, %v816
      %v818 = vrot.slane %v667, 5
      %v819 = vrot.slane %v818, 4
      %v820 = vrot.slane %v247, 5
      %v821 = vsel %vm719, %v819, %v820
      %v822 = vrot.slane %v820, 4
      %v823 = vrot.slane %v264, 5
      %v824 = vsel %vm719, %v822, %v823
      %v825 = vrot.slane %v668, 5
      %v826 = vrot.slane %v825, 4
      %v827 = vrot.slane %v249, 5
      %v828 = vsel %vm719, %v826, %v827
      %v829 = vrot.slane %v827, 4
      %v830 = vrot.slane %v265, 5
      %v831 = vsel %vm719, %v829, %v830
      %s832 = sadd.s32 %s214, 1
      %s833 = smul.u32 %s832, 3
      %s834 = smul.addr %s833, 4
      %s835 = scalar_lea.vmem %s195, %s834
      %v836 = vld [vmem:[%s835] sm:$0xf]
      %v837 = vld [vmem:[%s835 + $0x4] sm:$0xf]
      %v838 = vld [vmem:[%s835 + $0xc] sm:$0xf]
      %v839 = vld [vmem:[%s835 + $0x10] sm:$0xf]
      %v840 = vld [vmem:[%s835 + $0x18] sm:$0xf]
      %v841 = vld [vmem:[%s835 + $0x1c] sm:$0xf]
      %v842 = vld [vmem:[%s835 + $0x24] sm:$0xf]
      %v843 = vld [vmem:[%s835 + $0x28] sm:$0xf]
      %v844 = vld [vmem:[%s835 + $0x30] sm:$0xf]
      %v845 = vld [vmem:[%s835 + $0x34] sm:$0xf]
      %v846 = vld [vmem:[%s835 + $0x3c] sm:$0xf]
      %v847 = vld [vmem:[%s835 + $0x40] sm:$0xf]
      %v848 = vld [vmem:[%s835 + $0x48] sm:$0xf]
      %v849 = vld [vmem:[%s835 + $0x4c] sm:$0xf]
      %v850 = vld [vmem:[%s835 + $0x54] sm:$0xf]
      %v851 = vld [vmem:[%s835 + $0x58] sm:$0xf]
      %v852 = vld [vmem:[%s835 + $0x60] sm:$0xf]
      %v853 = vld [vmem:[%s835 + $0x64] sm:$0xf]
      %v854 = vld [vmem:[%s835 + $0x6c] sm:$0xf]
      %v855 = vld [vmem:[%s835 + $0x70] sm:$0xf]
      %v856 = vld [vmem:[%s835 + $0x78] sm:$0xf]
      %v857 = vld [vmem:[%s835 + $0x7c] sm:$0xf]
      %v858 = vld [vmem:[%s835 + $0x84] sm:$0xf]
      %v859 = vld [vmem:[%s835 + $0x88] sm:$0xf]
      %v860 = vld [vmem:[%s835 + $0x90] sm:$0xf]
      %v861 = vld [vmem:[%s835 + $0x94] sm:$0xf]
      %v862 = vld [vmem:[%s835 + $0x9c] sm:$0xf]
      %v863 = vld [vmem:[%s835 + $0xa0] sm:$0xf]
      %v864 = vld [vmem:[%s835 + $0xa8] sm:$0xf]
      %v865 = vld [vmem:[%s835 + $0xac] sm:$0xf]
      %v866 = vld [vmem:[%s835 + $0xb4] sm:$0xf]
      %v867 = vld [vmem:[%s835 + $0xb8] sm:$0xf]
      %v868 = vld [vmem:[%s835 + $0x8] sm:$0x1]
      %v869 = vld [vmem:[%s835 + $0x14] sm:$0x1]
      %v870 = vld [vmem:[%s835 + $0x20] sm:$0x1]
      %v871 = vld [vmem:[%s835 + $0x2c] sm:$0x1]
      %v872 = vld [vmem:[%s835 + $0x38] sm:$0x1]
      %v873 = vld [vmem:[%s835 + $0x44] sm:$0x1]
      %v874 = vld [vmem:[%s835 + $0x50] sm:$0x1]
      %v875 = vld [vmem:[%s835 + $0x5c] sm:$0x1]
      %v876 = vld [vmem:[%s835 + $0x68] sm:$0x1]
      %v877 = vld [vmem:[%s835 + $0x74] sm:$0x1]
      %v878 = vld [vmem:[%s835 + $0x80] sm:$0x1]
      %v879 = vld [vmem:[%s835 + $0x8c] sm:$0x1]
      %v880 = vld [vmem:[%s835 + $0x98] sm:$0x1]
      %v881 = vld [vmem:[%s835 + $0xa4] sm:$0x1]
      %v882 = vld [vmem:[%s835 + $0xb0] sm:$0x1]
      %v883 = vld [vmem:[%s835 + $0xbc] sm:$0x1]
      %v885 = vshrl.u32 %v836, 16
      %v887 = vrot.slane %v885, 4
      %v888 = vshll.u32 %v836, 16
      %v890 = vrot.slane %v888, 5
      %v891 = vor.u32 %v887, %v890
      %v892 = vrot.slane %v891, 4
      %v894 = vshll.u32 %v837, 16
      %v896 = vrot.slane %v894, 5
      %v897 = vsel %vm268, %v892, %v896
      %v898 = vshrl.u32 %v837, 16
      %v900 = vrot.slane %v898, 4
      %v901 = vor.u32 %v900, %v896
      %v902 = vrot.slane %v901, 4
      %v904 = vshll.u32 %v868, 16
      %v906 = vrot.slane %v904, 5
      %v907 = vsel %vm268, %v902, %v906
      %v909 = vshrl.u32 %v838, 16
      %v911 = vrot.slane %v909, 4
      %v912 = vshll.u32 %v838, 16
      %v914 = vrot.slane %v912, 5
      %v915 = vor.u32 %v911, %v914
      %v916 = vrot.slane %v915, 4
      %v918 = vshll.u32 %v839, 16
      %v920 = vrot.slane %v918, 5
      %v921 = vsel %vm268, %v916, %v920
      %v922 = vshrl.u32 %v839, 16
      %v924 = vrot.slane %v922, 4
      %v925 = vor.u32 %v924, %v920
      %v926 = vrot.slane %v925, 4
      %v928 = vshll.u32 %v869, 16
      %v930 = vrot.slane %v928, 5
      %v931 = vsel %vm268, %v926, %v930
      %v933 = vshrl.u32 %v840, 16
      %v935 = vrot.slane %v933, 4
      %v936 = vshll.u32 %v840, 16
      %v938 = vrot.slane %v936, 5
      %v939 = vor.u32 %v935, %v938
      %v940 = vrot.slane %v939, 4
      %v942 = vshll.u32 %v841, 16
      %v944 = vrot.slane %v942, 5
      %v945 = vsel %vm268, %v940, %v944
      %v946 = vshrl.u32 %v841, 16
      %v948 = vrot.slane %v946, 4
      %v949 = vor.u32 %v948, %v944
      %v950 = vrot.slane %v949, 4
      %v952 = vshll.u32 %v870, 16
      %v954 = vrot.slane %v952, 5
      %v955 = vsel %vm268, %v950, %v954
      %v957 = vshrl.u32 %v842, 16
      %v959 = vrot.slane %v957, 4
      %v960 = vshll.u32 %v842, 16
      %v962 = vrot.slane %v960, 5
      %v963 = vor.u32 %v959, %v962
      %v964 = vrot.slane %v963, 4
      %v966 = vshll.u32 %v843, 16
      %v968 = vrot.slane %v966, 5
      %v969 = vsel %vm268, %v964, %v968
      %v970 = vshrl.u32 %v843, 16
      %v972 = vrot.slane %v970, 4
      %v973 = vor.u32 %v972, %v968
      %v974 = vrot.slane %v973, 4
      %v976 = vshll.u32 %v871, 16
      %v978 = vrot.slane %v976, 5
      %v979 = vsel %vm268, %v974, %v978
      %v981 = vshrl.u32 %v844, 16
      %v983 = vrot.slane %v981, 4
      %v984 = vshll.u32 %v844, 16
      %v986 = vrot.slane %v984, 5
      %v987 = vor.u32 %v983, %v986
      %v988 = vrot.slane %v987, 4
      %v990 = vshll.u32 %v845, 16
      %v992 = vrot.slane %v990, 5
      %v993 = vsel %vm268, %v988, %v992
      %v994 = vshrl.u32 %v845, 16
      %v996 = vrot.slane %v994, 4
      %v997 = vor.u32 %v996, %v992
      %v998 = vrot.slane %v997, 4
      %v1000 = vshll.u32 %v872, 16
      %v1002 = vrot.slane %v1000, 5
      %v1003 = vsel %vm268, %v998, %v1002
      %v1005 = vshrl.u32 %v846, 16
      %v1007 = vrot.slane %v1005, 4
      %v1008 = vshll.u32 %v846, 16
      %v1010 = vrot.slane %v1008, 5
      %v1011 = vor.u32 %v1007, %v1010
      %v1012 = vrot.slane %v1011, 4
      %v1014 = vshll.u32 %v847, 16
      %v1016 = vrot.slane %v1014, 5
      %v1017 = vsel %vm268, %v1012, %v1016
      %v1018 = vshrl.u32 %v847, 16
      %v1020 = vrot.slane %v1018, 4
      %v1021 = vor.u32 %v1020, %v1016
      %v1022 = vrot.slane %v1021, 4
      %v1024 = vshll.u32 %v873, 16
      %v1026 = vrot.slane %v1024, 5
      %v1027 = vsel %vm268, %v1022, %v1026
      %v1029 = vshrl.u32 %v848, 16
      %v1031 = vrot.slane %v1029, 4
      %v1032 = vshll.u32 %v848, 16
      %v1034 = vrot.slane %v1032, 5
      %v1035 = vor.u32 %v1031, %v1034
      %v1036 = vrot.slane %v1035, 4
      %v1038 = vshll.u32 %v849, 16
      %v1040 = vrot.slane %v1038, 5
      %v1041 = vsel %vm268, %v1036, %v1040
      %v1042 = vshrl.u32 %v849, 16
      %v1044 = vrot.slane %v1042, 4
      %v1045 = vor.u32 %v1044, %v1040
      %v1046 = vrot.slane %v1045, 4
      %v1048 = vshll.u32 %v874, 16
      %v1050 = vrot.slane %v1048, 5
      %v1051 = vsel %vm268, %v1046, %v1050
      %v1053 = vshrl.u32 %v850, 16
      %v1055 = vrot.slane %v1053, 4
      %v1056 = vshll.u32 %v850, 16
      %v1058 = vrot.slane %v1056, 5
      %v1059 = vor.u32 %v1055, %v1058
      %v1060 = vrot.slane %v1059, 4
      %v1062 = vshll.u32 %v851, 16
      %v1064 = vrot.slane %v1062, 5
      %v1065 = vsel %vm268, %v1060, %v1064
      %v1066 = vshrl.u32 %v851, 16
      %v1068 = vrot.slane %v1066, 4
      %v1069 = vor.u32 %v1068, %v1064
      %v1070 = vrot.slane %v1069, 4
      %v1072 = vshll.u32 %v875, 16
      %v1074 = vrot.slane %v1072, 5
      %v1075 = vsel %vm268, %v1070, %v1074
      %v1077 = vshrl.u32 %v852, 16
      %v1079 = vrot.slane %v1077, 4
      %v1080 = vshll.u32 %v852, 16
      %v1082 = vrot.slane %v1080, 5
      %v1083 = vor.u32 %v1079, %v1082
      %v1084 = vrot.slane %v1083, 4
      %v1086 = vshll.u32 %v853, 16
      %v1088 = vrot.slane %v1086, 5
      %v1089 = vsel %vm268, %v1084, %v1088
      %v1090 = vshrl.u32 %v853, 16
      %v1092 = vrot.slane %v1090, 4
      %v1093 = vor.u32 %v1092, %v1088
      %v1094 = vrot.slane %v1093, 4
      %v1096 = vshll.u32 %v876, 16
      %v1098 = vrot.slane %v1096, 5
      %v1099 = vsel %vm268, %v1094, %v1098
      %v1101 = vshrl.u32 %v854, 16
      %v1103 = vrot.slane %v1101, 4
      %v1104 = vshll.u32 %v854, 16
      %v1106 = vrot.slane %v1104, 5
      %v1107 = vor.u32 %v1103, %v1106
      %v1108 = vrot.slane %v1107, 4
      %v1110 = vshll.u32 %v855, 16
      %v1112 = vrot.slane %v1110, 5
      %v1113 = vsel %vm268, %v1108, %v1112
      %v1114 = vshrl.u32 %v855, 16
      %v1116 = vrot.slane %v1114, 4
      %v1117 = vor.u32 %v1116, %v1112
      %v1118 = vrot.slane %v1117, 4
      %v1120 = vshll.u32 %v877, 16
      %v1122 = vrot.slane %v1120, 5
      %v1123 = vsel %vm268, %v1118, %v1122
      %v1125 = vshrl.u32 %v856, 16
      %v1127 = vrot.slane %v1125, 4
      %v1128 = vshll.u32 %v856, 16
      %v1130 = vrot.slane %v1128, 5
      %v1131 = vor.u32 %v1127, %v1130
      %v1132 = vrot.slane %v1131, 4
      %v1134 = vshll.u32 %v857, 16
      %v1136 = vrot.slane %v1134, 5
      %v1137 = vsel %vm268, %v1132, %v1136
      %v1138 = vshrl.u32 %v857, 16
      %v1140 = vrot.slane %v1138, 4
      %v1141 = vor.u32 %v1140, %v1136
      %v1142 = vrot.slane %v1141, 4
      %v1144 = vshll.u32 %v878, 16
      %v1146 = vrot.slane %v1144, 5
      %v1147 = vsel %vm268, %v1142, %v1146
      %v1149 = vshrl.u32 %v858, 16
      %v1151 = vrot.slane %v1149, 4
      %v1152 = vshll.u32 %v858, 16
      %v1154 = vrot.slane %v1152, 5
      %v1155 = vor.u32 %v1151, %v1154
      %v1156 = vrot.slane %v1155, 4
      %v1158 = vshll.u32 %v859, 16
      %v1160 = vrot.slane %v1158, 5
      %v1161 = vsel %vm268, %v1156, %v1160
      %v1162 = vshrl.u32 %v859, 16
      %v1164 = vrot.slane %v1162, 4
      %v1165 = vor.u32 %v1164, %v1160
      %v1166 = vrot.slane %v1165, 4
      %v1168 = vshll.u32 %v879, 16
      %v1170 = vrot.slane %v1168, 5
      %v1171 = vsel %vm268, %v1166, %v1170
      %v1173 = vshrl.u32 %v860, 16
      %v1175 = vrot.slane %v1173, 4
      %v1176 = vshll.u32 %v860, 16
      %v1178 = vrot.slane %v1176, 5
      %v1179 = vor.u32 %v1175, %v1178
      %v1180 = vrot.slane %v1179, 4
      %v1182 = vshll.u32 %v861, 16
      %v1184 = vrot.slane %v1182, 5
      %v1185 = vsel %vm268, %v1180, %v1184
      %v1186 = vshrl.u32 %v861, 16
      %v1188 = vrot.slane %v1186, 4
      %v1189 = vor.u32 %v1188, %v1184
      %v1190 = vrot.slane %v1189, 4
      %v1192 = vshll.u32 %v880, 16
      %v1194 = vrot.slane %v1192, 5
      %v1195 = vsel %vm268, %v1190, %v1194
      %v1197 = vshrl.u32 %v862, 16
      %v1199 = vrot.slane %v1197, 4
      %v1200 = vshll.u32 %v862, 16
      %v1202 = vrot.slane %v1200, 5
      %v1203 = vor.u32 %v1199, %v1202
      %v1204 = vrot.slane %v1203, 4
      %v1206 = vshll.u32 %v863, 16
      %v1208 = vrot.slane %v1206, 5
      %v1209 = vsel %vm268, %v1204, %v1208
      %v1210 = vshrl.u32 %v863, 16
      %v1212 = vrot.slane %v1210, 4
      %v1213 = vor.u32 %v1212, %v1208
      %v1214 = vrot.slane %v1213, 4
      %v1216 = vshll.u32 %v881, 16
      %v1218 = vrot.slane %v1216, 5
      %v1219 = vsel %vm268, %v1214, %v1218
      %v1221 = vshrl.u32 %v864, 16
      %v1223 = vrot.slane %v1221, 4
      %v1224 = vshll.u32 %v864, 16
      %v1226 = vrot.slane %v1224, 5
      %v1227 = vor.u32 %v1223, %v1226
      %v1228 = vrot.slane %v1227, 4
      %v1230 = vshll.u32 %v865, 16
      %v1232 = vrot.slane %v1230, 5
      %v1233 = vsel %vm268, %v1228, %v1232
      %v1234 = vshrl.u32 %v865, 16
      %v1236 = vrot.slane %v1234, 4
      %v1237 = vor.u32 %v1236, %v1232
      %v1238 = vrot.slane %v1237, 4
      %v1240 = vshll.u32 %v882, 16
      %v1242 = vrot.slane %v1240, 5
      %v1243 = vsel %vm268, %v1238, %v1242
      %v1245 = vshrl.u32 %v866, 16
      %v1247 = vrot.slane %v1245, 4
      %v1248 = vshll.u32 %v866, 16
      %v1250 = vrot.slane %v1248, 5
      %v1251 = vor.u32 %v1247, %v1250
      %v1252 = vrot.slane %v1251, 4
      %v1254 = vshll.u32 %v867, 16
      %v1256 = vrot.slane %v1254, 5
      %v1257 = vsel %vm268, %v1252, %v1256
      %v1258 = vshrl.u32 %v867, 16
      %v1260 = vrot.slane %v1258, 4
      %v1261 = vor.u32 %v1260, %v1256
      %v1262 = vrot.slane %v1261, 4
      %v1264 = vshll.u32 %v883, 16
      %v1266 = vrot.slane %v1264, 5
      %v1267 = vsel %vm268, %v1262, %v1266
      %v1268 = vld [vmem:[%s835] sm:$0xe]
      %v1269 = vld [vmem:[%s835 + $0xc] sm:$0xe]
      %v1270 = vld [vmem:[%s835 + $0x18] sm:$0xe]
      %v1271 = vld [vmem:[%s835 + $0x24] sm:$0xe]
      %v1272 = vld [vmem:[%s835 + $0x30] sm:$0xe]
      %v1273 = vld [vmem:[%s835 + $0x3c] sm:$0xe]
      %v1274 = vld [vmem:[%s835 + $0x48] sm:$0xe]
      %v1275 = vld [vmem:[%s835 + $0x54] sm:$0xe]
      %v1276 = vld [vmem:[%s835 + $0x60] sm:$0xe]
      %v1277 = vld [vmem:[%s835 + $0x6c] sm:$0xe]
      %v1278 = vld [vmem:[%s835 + $0x78] sm:$0xe]
      %v1279 = vld [vmem:[%s835 + $0x84] sm:$0xe]
      %v1280 = vld [vmem:[%s835 + $0x90] sm:$0xe]
      %v1281 = vld [vmem:[%s835 + $0x9c] sm:$0xe]
      %v1282 = vld [vmem:[%s835 + $0xa8] sm:$0xe]
      %v1283 = vld [vmem:[%s835 + $0xb4] sm:$0xe]
      %v1332 = vrot.slane %v1268, 5
      %v1333 = vrot.slane %v1332, 4
      %v1334 = vrot.slane %v837, 5
      %v1335 = vsel %vm719, %v1333, %v1334
      %v1336 = vrot.slane %v1334, 4
      %v1337 = vrot.slane %v868, 5
      %v1338 = vsel %vm719, %v1336, %v1337
      %v1339 = vrot.slane %v1269, 5
      %v1340 = vrot.slane %v1339, 4
      %v1341 = vrot.slane %v839, 5
      %v1342 = vsel %vm719, %v1340, %v1341
      %v1343 = vrot.slane %v1341, 4
      %v1344 = vrot.slane %v869, 5
      %v1345 = vsel %vm719, %v1343, %v1344
      %v1346 = vrot.slane %v1270, 5
      %v1347 = vrot.slane %v1346, 4
      %v1348 = vrot.slane %v841, 5
      %v1349 = vsel %vm719, %v1347, %v1348
      %v1350 = vrot.slane %v1348, 4
      %v1351 = vrot.slane %v870, 5
      %v1352 = vsel %vm719, %v1350, %v1351
      %v1353 = vrot.slane %v1271, 5
      %v1354 = vrot.slane %v1353, 4
      %v1355 = vrot.slane %v843, 5
      %v1356 = vsel %vm719, %v1354, %v1355
      %v1357 = vrot.slane %v1355, 4
      %v1358 = vrot.slane %v871, 5
      %v1359 = vsel %vm719, %v1357, %v1358
      %v1360 = vrot.slane %v1272, 5
      %v1361 = vrot.slane %v1360, 4
      %v1362 = vrot.slane %v845, 5
      %v1363 = vsel %vm719, %v1361, %v1362
      %v1364 = vrot.slane %v1362, 4
      %v1365 = vrot.slane %v872, 5
      %v1366 = vsel %vm719, %v1364, %v1365
      %v1367 = vrot.slane %v1273, 5
      %v1368 = vrot.slane %v1367, 4
      %v1369 = vrot.slane %v847, 5
      %v1370 = vsel %vm719, %v1368, %v1369
      %v1371 = vrot.slane %v1369, 4
      %v1372 = vrot.slane %v873, 5
      %v1373 = vsel %vm719, %v1371, %v1372
      %v1374 = vrot.slane %v1274, 5
      %v1375 = vrot.slane %v1374, 4
      %v1376 = vrot.slane %v849, 5
      %v1377 = vsel %vm719, %v1375, %v1376
      %v1378 = vrot.slane %v1376, 4
      %v1379 = vrot.slane %v874, 5
      %v1380 = vsel %vm719, %v1378, %v1379
      %v1381 = vrot.slane %v1275, 5
      %v1382 = vrot.slane %v1381, 4
      %v1383 = vrot.slane %v851, 5
      %v1384 = vsel %vm719, %v1382, %v1383
      %v1385 = vrot.slane %v1383, 4
      %v1386 = vrot.slane %v875, 5
      %v1387 = vsel %vm719, %v1385, %v1386
      %v1388 = vrot.slane %v1276, 5
      %v1389 = vrot.slane %v1388, 4
      %v1390 = vrot.slane %v853, 5
      %v1391 = vsel %vm719, %v1389, %v1390
      %v1392 = vrot.slane %v1390, 4
      %v1393 = vrot.slane %v876, 5
      %v1394 = vsel %vm719, %v1392, %v1393
      %v1395 = vrot.slane %v1277, 5
      %v1396 = vrot.slane %v1395, 4
      %v1397 = vrot.slane %v855, 5
      %v1398 = vsel %vm719, %v1396, %v1397
      %v1399 = vrot.slane %v1397, 4
      %v1400 = vrot.slane %v877, 5
      %v1401 = vsel %vm719, %v1399, %v1400
      %v1402 = vrot.slane %v1278, 5
      %v1403 = vrot.slane %v1402, 4
      %v1404 = vrot.slane %v857, 5
      %v1405 = vsel %vm719, %v1403, %v1404
      %v1406 = vrot.slane %v1404, 4
      %v1407 = vrot.slane %v878, 5
      %v1408 = vsel %vm719, %v1406, %v1407
      %v1409 = vrot.slane %v1279, 5
      %v1410 = vrot.slane %v1409, 4
      %v1411 = vrot.slane %v859, 5
      %v1412 = vsel %vm719, %v1410, %v1411
      %v1413 = vrot.slane %v1411, 4
      %v1414 = vrot.slane %v879, 5
      %v1415 = vsel %vm719, %v1413, %v1414
      %v1416 = vrot.slane %v1280, 5
      %v1417 = vrot.slane %v1416, 4
      %v1418 = vrot.slane %v861, 5
      %v1419 = vsel %vm719, %v1417, %v1418
      %v1420 = vrot.slane %v1418, 4
      %v1421 = vrot.slane %v880, 5
      %v1422 = vsel %vm719, %v1420, %v1421
      %v1423 = vrot.slane %v1281, 5
      %v1424 = vrot.slane %v1423, 4
      %v1425 = vrot.slane %v863, 5
      %v1426 = vsel %vm719, %v1424, %v1425
      %v1427 = vrot.slane %v1425, 4
      %v1428 = vrot.slane %v881, 5
      %v1429 = vsel %vm719, %v1427, %v1428
      %v1430 = vrot.slane %v1282, 5
      %v1431 = vrot.slane %v1430, 4
      %v1432 = vrot.slane %v865, 5
      %v1433 = vsel %vm719, %v1431, %v1432
      %v1434 = vrot.slane %v1432, 4
      %v1435 = vrot.slane %v882, 5
      %v1436 = vsel %vm719, %v1434, %v1435
      %v1437 = vrot.slane %v1283, 5
      %v1438 = vrot.slane %v1437, 4
      %v1439 = vrot.slane %v867, 5
      %v1440 = vsel %vm719, %v1438, %v1439
      %v1441 = vrot.slane %v1439, 4
      %v1442 = vrot.slane %v883, 5
      %v1443 = vsel %vm719, %v1441, %v1442
      %s1444 = sadd.s32 %s214, 2
      %s1445 = smul.u32 %s1444, 3
      %s1446 = smul.addr %s1445, 4
      %s1447 = scalar_lea.vmem %s195, %s1446
      %v1448 = vld [vmem:[%s1447] sm:$0xf]
      %v1449 = vld [vmem:[%s1447 + $0x4] sm:$0xf]
      %v1450 = vld [vmem:[%s1447 + $0xc] sm:$0xf]
      %v1451 = vld [vmem:[%s1447 + $0x10] sm:$0xf]
      %v1452 = vld [vmem:[%s1447 + $0x18] sm:$0xf]
      %v1453 = vld [vmem:[%s1447 + $0x1c] sm:$0xf]
      %v1454 = vld [vmem:[%s1447 + $0x24] sm:$0xf]
      %v1455 = vld [vmem:[%s1447 + $0x28] sm:$0xf]
      %v1456 = vld [vmem:[%s1447 + $0x30] sm:$0xf]
      %v1457 = vld [vmem:[%s1447 + $0x34] sm:$0xf]
      %v1458 = vld [vmem:[%s1447 + $0x3c] sm:$0xf]
      %v1459 = vld [vmem:[%s1447 + $0x40] sm:$0xf]
      %v1460 = vld [vmem:[%s1447 + $0x48] sm:$0xf]
      %v1461 = vld [vmem:[%s1447 + $0x4c] sm:$0xf]
      %v1462 = vld [vmem:[%s1447 + $0x54] sm:$0xf]
      %v1463 = vld [vmem:[%s1447 + $0x58] sm:$0xf]
      %v1464 = vld [vmem:[%s1447 + $0x60] sm:$0xf]
      %v1465 = vld [vmem:[%s1447 + $0x64] sm:$0xf]
      %v1466 = vld [vmem:[%s1447 + $0x6c] sm:$0xf]
      %v1467 = vld [vmem:[%s1447 + $0x70] sm:$0xf]
      %v1468 = vld [vmem:[%s1447 + $0x78] sm:$0xf]
      %v1469 = vld [vmem:[%s1447 + $0x7c] sm:$0xf]
      %v1470 = vld [vmem:[%s1447 + $0x84] sm:$0xf]
      %v1471 = vld [vmem:[%s1447 + $0x88] sm:$0xf]
      %v1472 = vld [vmem:[%s1447 + $0x90] sm:$0xf]
      %v1473 = vld [vmem:[%s1447 + $0x94] sm:$0xf]
      %v1474 = vld [vmem:[%s1447 + $0x9c] sm:$0xf]
      %v1475 = vld [vmem:[%s1447 + $0xa0] sm:$0xf]
      %v1476 = vld [vmem:[%s1447 + $0xa8] sm:$0xf]
      %v1477 = vld [vmem:[%s1447 + $0xac] sm:$0xf]
      %v1478 = vld [vmem:[%s1447 + $0xb4] sm:$0xf]
      %v1479 = vld [vmem:[%s1447 + $0xb8] sm:$0xf]
      %v1480 = vld [vmem:[%s1447 + $0x8] sm:$0x1]
      %v1481 = vld [vmem:[%s1447 + $0x14] sm:$0x1]
      %v1482 = vld [vmem:[%s1447 + $0x20] sm:$0x1]
      %v1483 = vld [vmem:[%s1447 + $0x2c] sm:$0x1]
      %v1484 = vld [vmem:[%s1447 + $0x38] sm:$0x1]
      %v1485 = vld [vmem:[%s1447 + $0x44] sm:$0x1]
      %v1486 = vld [vmem:[%s1447 + $0x50] sm:$0x1]
      %v1487 = vld [vmem:[%s1447 + $0x5c] sm:$0x1]
      %v1488 = vld [vmem:[%s1447 + $0x68] sm:$0x1]
      %v1489 = vld [vmem:[%s1447 + $0x74] sm:$0x1]
      %v1490 = vld [vmem:[%s1447 + $0x80] sm:$0x1]
      %v1491 = vld [vmem:[%s1447 + $0x8c] sm:$0x1]
      %v1492 = vld [vmem:[%s1447 + $0x98] sm:$0x1]
      %v1493 = vld [vmem:[%s1447 + $0xa4] sm:$0x1]
      %v1494 = vld [vmem:[%s1447 + $0xb0] sm:$0x1]
      %v1495 = vld [vmem:[%s1447 + $0xbc] sm:$0x1]
      %v1497 = vshrl.u32 %v1448, 16
      %v1499 = vrot.slane %v1497, 4
      %v1500 = vshll.u32 %v1448, 16
      %v1502 = vrot.slane %v1500, 5
      %v1503 = vor.u32 %v1499, %v1502
      %v1504 = vrot.slane %v1503, 4
      %v1506 = vshll.u32 %v1449, 16
      %v1508 = vrot.slane %v1506, 5
      %v1509 = vsel %vm268, %v1504, %v1508
      %v1510 = vshrl.u32 %v1449, 16
      %v1512 = vrot.slane %v1510, 4
      %v1513 = vor.u32 %v1512, %v1508
      %v1514 = vrot.slane %v1513, 4
      %v1516 = vshll.u32 %v1480, 16
      %v1518 = vrot.slane %v1516, 5
      %v1519 = vsel %vm268, %v1514, %v1518
      %v1521 = vshrl.u32 %v1450, 16
      %v1523 = vrot.slane %v1521, 4
      %v1524 = vshll.u32 %v1450, 16
      %v1526 = vrot.slane %v1524, 5
      %v1527 = vor.u32 %v1523, %v1526
      %v1528 = vrot.slane %v1527, 4
      %v1530 = vshll.u32 %v1451, 16
      %v1532 = vrot.slane %v1530, 5
      %v1533 = vsel %vm268, %v1528, %v1532
      %v1534 = vshrl.u32 %v1451, 16
      %v1536 = vrot.slane %v1534, 4
      %v1537 = vor.u32 %v1536, %v1532
      %v1538 = vrot.slane %v1537, 4
      %v1540 = vshll.u32 %v1481, 16
      %v1542 = vrot.slane %v1540, 5
      %v1543 = vsel %vm268, %v1538, %v1542
      %v1545 = vshrl.u32 %v1452, 16
      %v1547 = vrot.slane %v1545, 4
      %v1548 = vshll.u32 %v1452, 16
      %v1550 = vrot.slane %v1548, 5
      %v1551 = vor.u32 %v1547, %v1550
      %v1552 = vrot.slane %v1551, 4
      %v1554 = vshll.u32 %v1453, 16
      %v1556 = vrot.slane %v1554, 5
      %v1557 = vsel %vm268, %v1552, %v1556
      %v1558 = vshrl.u32 %v1453, 16
      %v1560 = vrot.slane %v1558, 4
      %v1561 = vor.u32 %v1560, %v1556
      %v1562 = vrot.slane %v1561, 4
      %v1564 = vshll.u32 %v1482, 16
      %v1566 = vrot.slane %v1564, 5
      %v1567 = vsel %vm268, %v1562, %v1566
      %v1569 = vshrl.u32 %v1454, 16
      %v1571 = vrot.slane %v1569, 4
      %v1572 = vshll.u32 %v1454, 16
      %v1574 = vrot.slane %v1572, 5
      %v1575 = vor.u32 %v1571, %v1574
      %v1576 = vrot.slane %v1575, 4
      %v1578 = vshll.u32 %v1455, 16
      %v1580 = vrot.slane %v1578, 5
      %v1581 = vsel %vm268, %v1576, %v1580
      %v1582 = vshrl.u32 %v1455, 16
      %v1584 = vrot.slane %v1582, 4
      %v1585 = vor.u32 %v1584, %v1580
      %v1586 = vrot.slane %v1585, 4
      %v1588 = vshll.u32 %v1483, 16
      %v1590 = vrot.slane %v1588, 5
      %v1591 = vsel %vm268, %v1586, %v1590
      %v1593 = vshrl.u32 %v1456, 16
      %v1595 = vrot.slane %v1593, 4
      %v1596 = vshll.u32 %v1456, 16
      %v1598 = vrot.slane %v1596, 5
      %v1599 = vor.u32 %v1595, %v1598
      %v1600 = vrot.slane %v1599, 4
      %v1602 = vshll.u32 %v1457, 16
      %v1604 = vrot.slane %v1602, 5
      %v1605 = vsel %vm268, %v1600, %v1604
      %v1606 = vshrl.u32 %v1457, 16
      %v1608 = vrot.slane %v1606, 4
      %v1609 = vor.u32 %v1608, %v1604
      %v1610 = vrot.slane %v1609, 4
      %v1612 = vshll.u32 %v1484, 16
      %v1614 = vrot.slane %v1612, 5
      %v1615 = vsel %vm268, %v1610, %v1614
      %v1617 = vshrl.u32 %v1458, 16
      %v1619 = vrot.slane %v1617, 4
      %v1620 = vshll.u32 %v1458, 16
      %v1622 = vrot.slane %v1620, 5
      %v1623 = vor.u32 %v1619, %v1622
      %v1624 = vrot.slane %v1623, 4
      %v1626 = vshll.u32 %v1459, 16
      %v1628 = vrot.slane %v1626, 5
      %v1629 = vsel %vm268, %v1624, %v1628
      %v1630 = vshrl.u32 %v1459, 16
      %v1632 = vrot.slane %v1630, 4
      %v1633 = vor.u32 %v1632, %v1628
      %v1634 = vrot.slane %v1633, 4
      %v1636 = vshll.u32 %v1485, 16
      %v1638 = vrot.slane %v1636, 5
      %v1639 = vsel %vm268, %v1634, %v1638
      %v1641 = vshrl.u32 %v1460, 16
      %v1643 = vrot.slane %v1641, 4
      %v1644 = vshll.u32 %v1460, 16
      %v1646 = vrot.slane %v1644, 5
      %v1647 = vor.u32 %v1643, %v1646
      %v1648 = vrot.slane %v1647, 4
      %v1650 = vshll.u32 %v1461, 16
      %v1652 = vrot.slane %v1650, 5
      %v1653 = vsel %vm268, %v1648, %v1652
      %v1654 = vshrl.u32 %v1461, 16
      %v1656 = vrot.slane %v1654, 4
      %v1657 = vor.u32 %v1656, %v1652
      %v1658 = vrot.slane %v1657, 4
      %v1660 = vshll.u32 %v1486, 16
      %v1662 = vrot.slane %v1660, 5
      %v1663 = vsel %vm268, %v1658, %v1662
      %v1665 = vshrl.u32 %v1462, 16
      %v1667 = vrot.slane %v1665, 4
      %v1668 = vshll.u32 %v1462, 16
      %v1670 = vrot.slane %v1668, 5
      %v1671 = vor.u32 %v1667, %v1670
      %v1672 = vrot.slane %v1671, 4
      %v1674 = vshll.u32 %v1463, 16
      %v1676 = vrot.slane %v1674, 5
      %v1677 = vsel %vm268, %v1672, %v1676
      %v1678 = vshrl.u32 %v1463, 16
      %v1680 = vrot.slane %v1678, 4
      %v1681 = vor.u32 %v1680, %v1676
      %v1682 = vrot.slane %v1681, 4
      %v1684 = vshll.u32 %v1487, 16
      %v1686 = vrot.slane %v1684, 5
      %v1687 = vsel %vm268, %v1682, %v1686
      %v1689 = vshrl.u32 %v1464, 16
      %v1691 = vrot.slane %v1689, 4
      %v1692 = vshll.u32 %v1464, 16
      %v1694 = vrot.slane %v1692, 5
      %v1695 = vor.u32 %v1691, %v1694
      %v1696 = vrot.slane %v1695, 4
      %v1698 = vshll.u32 %v1465, 16
      %v1700 = vrot.slane %v1698, 5
      %v1701 = vsel %vm268, %v1696, %v1700
      %v1702 = vshrl.u32 %v1465, 16
      %v1704 = vrot.slane %v1702, 4
      %v1705 = vor.u32 %v1704, %v1700
      %v1706 = vrot.slane %v1705, 4
      %v1708 = vshll.u32 %v1488, 16
      %v1710 = vrot.slane %v1708, 5
      %v1711 = vsel %vm268, %v1706, %v1710
      %v1713 = vshrl.u32 %v1466, 16
      %v1715 = vrot.slane %v1713, 4
      %v1716 = vshll.u32 %v1466, 16
      %v1718 = vrot.slane %v1716, 5
      %v1719 = vor.u32 %v1715, %v1718
      %v1720 = vrot.slane %v1719, 4
      %v1722 = vshll.u32 %v1467, 16
      %v1724 = vrot.slane %v1722, 5
      %v1725 = vsel %vm268, %v1720, %v1724
      %v1726 = vshrl.u32 %v1467, 16
      %v1728 = vrot.slane %v1726, 4
      %v1729 = vor.u32 %v1728, %v1724
      %v1730 = vrot.slane %v1729, 4
      %v1732 = vshll.u32 %v1489, 16
      %v1734 = vrot.slane %v1732, 5
      %v1735 = vsel %vm268, %v1730, %v1734
      %v1737 = vshrl.u32 %v1468, 16
      %v1739 = vrot.slane %v1737, 4
      %v1740 = vshll.u32 %v1468, 16
      %v1742 = vrot.slane %v1740, 5
      %v1743 = vor.u32 %v1739, %v1742
      %v1744 = vrot.slane %v1743, 4
      %v1746 = vshll.u32 %v1469, 16
      %v1748 = vrot.slane %v1746, 5
      %v1749 = vsel %vm268, %v1744, %v1748
      %v1750 = vshrl.u32 %v1469, 16
      %v1752 = vrot.slane %v1750, 4
      %v1753 = vor.u32 %v1752, %v1748
      %v1754 = vrot.slane %v1753, 4
      %v1756 = vshll.u32 %v1490, 16
      %v1758 = vrot.slane %v1756, 5
      %v1759 = vsel %vm268, %v1754, %v1758
      %v1761 = vshrl.u32 %v1470, 16
      %v1763 = vrot.slane %v1761, 4
      %v1764 = vshll.u32 %v1470, 16
      %v1766 = vrot.slane %v1764, 5
      %v1767 = vor.u32 %v1763, %v1766
      %v1768 = vrot.slane %v1767, 4
      %v1770 = vshll.u32 %v1471, 16
      %v1772 = vrot.slane %v1770, 5
      %v1773 = vsel %vm268, %v1768, %v1772
      %v1774 = vshrl.u32 %v1471, 16
      %v1776 = vrot.slane %v1774, 4
      %v1777 = vor.u32 %v1776, %v1772
      %v1778 = vrot.slane %v1777, 4
      %v1780 = vshll.u32 %v1491, 16
      %v1782 = vrot.slane %v1780, 5
      %v1783 = vsel %vm268, %v1778, %v1782
      %v1785 = vshrl.u32 %v1472, 16
      %v1787 = vrot.slane %v1785, 4
      %v1788 = vshll.u32 %v1472, 16
      %v1790 = vrot.slane %v1788, 5
      %v1791 = vor.u32 %v1787, %v1790
      %v1792 = vrot.slane %v1791, 4
      %v1794 = vshll.u32 %v1473, 16
      %v1796 = vrot.slane %v1794, 5
      %v1797 = vsel %vm268, %v1792, %v1796
      %v1798 = vshrl.u32 %v1473, 16
      %v1800 = vrot.slane %v1798, 4
      %v1801 = vor.u32 %v1800, %v1796
      %v1802 = vrot.slane %v1801, 4
      %v1804 = vshll.u32 %v1492, 16
      %v1806 = vrot.slane %v1804, 5
      %v1807 = vsel %vm268, %v1802, %v1806
      %v1809 = vshrl.u32 %v1474, 16
      %v1811 = vrot.slane %v1809, 4
      %v1812 = vshll.u32 %v1474, 16
      %v1814 = vrot.slane %v1812, 5
      %v1815 = vor.u32 %v1811, %v1814
      %v1816 = vrot.slane %v1815, 4
      %v1818 = vshll.u32 %v1475, 16
      %v1820 = vrot.slane %v1818, 5
      %v1821 = vsel %vm268, %v1816, %v1820
      %v1822 = vshrl.u32 %v1475, 16
      %v1824 = vrot.slane %v1822, 4
      %v1825 = vor.u32 %v1824, %v1820
      %v1826 = vrot.slane %v1825, 4
      %v1828 = vshll.u32 %v1493, 16
      %v1830 = vrot.slane %v1828, 5
      %v1831 = vsel %vm268, %v1826, %v1830
      %v1833 = vshrl.u32 %v1476, 16
      %v1835 = vrot.slane %v1833, 4
      %v1836 = vshll.u32 %v1476, 16
      %v1838 = vrot.slane %v1836, 5
      %v1839 = vor.u32 %v1835, %v1838
      %v1840 = vrot.slane %v1839, 4
      %v1842 = vshll.u32 %v1477, 16
      %v1844 = vrot.slane %v1842, 5
      %v1845 = vsel %vm268, %v1840, %v1844
      %v1846 = vshrl.u32 %v1477, 16
      %v1848 = vrot.slane %v1846, 4
      %v1849 = vor.u32 %v1848, %v1844
      %v1850 = vrot.slane %v1849, 4
      %v1852 = vshll.u32 %v1494, 16
      %v1854 = vrot.slane %v1852, 5
      %v1855 = vsel %vm268, %v1850, %v1854
      %v1857 = vshrl.u32 %v1478, 16
      %v1859 = vrot.slane %v1857, 4
      %v1860 = vshll.u32 %v1478, 16
      %v1862 = vrot.slane %v1860, 5
      %v1863 = vor.u32 %v1859, %v1862
      %v1864 = vrot.slane %v1863, 4
      %v1866 = vshll.u32 %v1479, 16
      %v1868 = vrot.slane %v1866, 5
      %v1869 = vsel %vm268, %v1864, %v1868
      %v1870 = vshrl.u32 %v1479, 16
      %v1872 = vrot.slane %v1870, 4
      %v1873 = vor.u32 %v1872, %v1868
      %v1874 = vrot.slane %v1873, 4
      %v1876 = vshll.u32 %v1495, 16
      %v1878 = vrot.slane %v1876, 5
      %v1879 = vsel %vm268, %v1874, %v1878
      %v1880 = vld [vmem:[%s1447] sm:$0xe]
      %v1881 = vld [vmem:[%s1447 + $0xc] sm:$0xe]
      %v1882 = vld [vmem:[%s1447 + $0x18] sm:$0xe]
      %v1883 = vld [vmem:[%s1447 + $0x24] sm:$0xe]
      %v1884 = vld [vmem:[%s1447 + $0x30] sm:$0xe]
      %v1885 = vld [vmem:[%s1447 + $0x3c] sm:$0xe]
      %v1886 = vld [vmem:[%s1447 + $0x48] sm:$0xe]
      %v1887 = vld [vmem:[%s1447 + $0x54] sm:$0xe]
      %v1888 = vld [vmem:[%s1447 + $0x60] sm:$0xe]
      %v1889 = vld [vmem:[%s1447 + $0x6c] sm:$0xe]
      %v1890 = vld [vmem:[%s1447 + $0x78] sm:$0xe]
      %v1891 = vld [vmem:[%s1447 + $0x84] sm:$0xe]
      %v1892 = vld [vmem:[%s1447 + $0x90] sm:$0xe]
      %v1893 = vld [vmem:[%s1447 + $0x9c] sm:$0xe]
      %v1894 = vld [vmem:[%s1447 + $0xa8] sm:$0xe]
      %v1895 = vld [vmem:[%s1447 + $0xb4] sm:$0xe]
      %v1944 = vrot.slane %v1880, 5
      %v1945 = vrot.slane %v1944, 4
      %v1946 = vrot.slane %v1449, 5
      %v1947 = vsel %vm719, %v1945, %v1946
      %v1948 = vrot.slane %v1946, 4
      %v1949 = vrot.slane %v1480, 5
      %v1950 = vsel %vm719, %v1948, %v1949
      %v1951 = vrot.slane %v1881, 5
      %v1952 = vrot.slane %v1951, 4
      %v1953 = vrot.slane %v1451, 5
      %v1954 = vsel %vm719, %v1952, %v1953
      %v1955 = vrot.slane %v1953, 4
      %v1956 = vrot.slane %v1481, 5
      %v1957 = vsel %vm719, %v1955, %v1956
      %v1958 = vrot.slane %v1882, 5
      %v1959 = vrot.slane %v1958, 4
      %v1960 = vrot.slane %v1453, 5
      %v1961 = vsel %vm719, %v1959, %v1960
      %v1962 = vrot.slane %v1960, 4
      %v1963 = vrot.slane %v1482, 5
      %v1964 = vsel %vm719, %v1962, %v1963
      %v1965 = vrot.slane %v1883, 5
      %v1966 = vrot.slane %v1965, 4
      %v1967 = vrot.slane %v1455, 5
      %v1968 = vsel %vm719, %v1966, %v1967
      %v1969 = vrot.slane %v1967, 4
      %v1970 = vrot.slane %v1483, 5
      %v1971 = vsel %vm719, %v1969, %v1970
      %v1972 = vrot.slane %v1884, 5
      %v1973 = vrot.slane %v1972, 4
      %v1974 = vrot.slane %v1457, 5
      %v1975 = vsel %vm719, %v1973, %v1974
      %v1976 = vrot.slane %v1974, 4
      %v1977 = vrot.slane %v1484, 5
      %v1978 = vsel %vm719, %v1976, %v1977
      %v1979 = vrot.slane %v1885, 5
      %v1980 = vrot.slane %v1979, 4
      %v1981 = vrot.slane %v1459, 5
      %v1982 = vsel %vm719, %v1980, %v1981
      %v1983 = vrot.slane %v1981, 4
      %v1984 = vrot.slane %v1485, 5
      %v1985 = vsel %vm719, %v1983, %v1984
      %v1986 = vrot.slane %v1886, 5
      %v1987 = vrot.slane %v1986, 4
      %v1988 = vrot.slane %v1461, 5
      %v1989 = vsel %vm719, %v1987, %v1988
      %v1990 = vrot.slane %v1988, 4
      %v1991 = vrot.slane %v1486, 5
      %v1992 = vsel %vm719, %v1990, %v1991
      %v1993 = vrot.slane %v1887, 5
      %v1994 = vrot.slane %v1993, 4
      %v1995 = vrot.slane %v1463, 5
      %v1996 = vsel %vm719, %v1994, %v1995
      %v1997 = vrot.slane %v1995, 4
      %v1998 = vrot.slane %v1487, 5
      %v1999 = vsel %vm719, %v1997, %v1998
      %v2000 = vrot.slane %v1888, 5
      %v2001 = vrot.slane %v2000, 4
      %v2002 = vrot.slane %v1465, 5
      %v2003 = vsel %vm719, %v2001, %v2002
      %v2004 = vrot.slane %v2002, 4
      %v2005 = vrot.slane %v1488, 5
      %v2006 = vsel %vm719, %v2004, %v2005
      %v2007 = vrot.slane %v1889, 5
      %v2008 = vrot.slane %v2007, 4
      %v2009 = vrot.slane %v1467, 5
      %v2010 = vsel %vm719, %v2008, %v2009
      %v2011 = vrot.slane %v2009, 4
      %v2012 = vrot.slane %v1489, 5
      %v2013 = vsel %vm719, %v2011, %v2012
      %v2014 = vrot.slane %v1890, 5
      %v2015 = vrot.slane %v2014, 4
      %v2016 = vrot.slane %v1469, 5
      %v2017 = vsel %vm719, %v2015, %v2016
      %v2018 = vrot.slane %v2016, 4
      %v2019 = vrot.slane %v1490, 5
      %v2020 = vsel %vm719, %v2018, %v2019
      %v2021 = vrot.slane %v1891, 5
      %v2022 = vrot.slane %v2021, 4
      %v2023 = vrot.slane %v1471, 5
      %v2024 = vsel %vm719, %v2022, %v2023
      %v2025 = vrot.slane %v2023, 4
      %v2026 = vrot.slane %v1491, 5
      %v2027 = vsel %vm719, %v2025, %v2026
      %v2028 = vrot.slane %v1892, 5
      %v2029 = vrot.slane %v2028, 4
      %v2030 = vrot.slane %v1473, 5
      %v2031 = vsel %vm719, %v2029, %v2030
      %v2032 = vrot.slane %v2030, 4
      %v2033 = vrot.slane %v1492, 5
      %v2034 = vsel %vm719, %v2032, %v2033
      %v2035 = vrot.slane %v1893, 5
      %v2036 = vrot.slane %v2035, 4
      %v2037 = vrot.slane %v1475, 5
      %v2038 = vsel %vm719, %v2036, %v2037
      %v2039 = vrot.slane %v2037, 4
      %v2040 = vrot.slane %v1493, 5
      %v2041 = vsel %vm719, %v2039, %v2040
      %v2042 = vrot.slane %v1894, 5
      %v2043 = vrot.slane %v2042, 4
      %v2044 = vrot.slane %v1477, 5
      %v2045 = vsel %vm719, %v2043, %v2044
      %v2046 = vrot.slane %v2044, 4
      %v2047 = vrot.slane %v1494, 5
      %v2048 = vsel %vm719, %v2046, %v2047
      %v2049 = vrot.slane %v1895, 5
      %v2050 = vrot.slane %v2049, 4
      %v2051 = vrot.slane %v1479, 5
      %v2052 = vsel %vm719, %v2050, %v2051
      %v2053 = vrot.slane %v2051, 4
      %v2054 = vrot.slane %v1495, 5
      %v2055 = vsel %vm719, %v2053, %v2054
      %v2072 = vunpack.c.l.b16 %v218
      %v2073 = vunpack.c.l.b16 %v219
      %v2074 = vunpack.c.l.b16 %v220
      %v2075 = vunpack.c.l.b16 %v221
      %v2076 = vunpack.c.l.b16 %v222
      %v2077 = vunpack.c.l.b16 %v223
      %v2078 = vunpack.c.l.b16 %v224
      %v2079 = vunpack.c.l.b16 %v225
      %v2080 = vunpack.c.l.b16 %v226
      %v2081 = vunpack.c.l.b16 %v227
      %v2082 = vunpack.c.l.b16 %v228
      %v2083 = vunpack.c.l.b16 %v229
      %v2084 = vunpack.c.l.b16 %v230
      %v2085 = vunpack.c.l.b16 %v231
      %v2086 = vunpack.c.l.b16 %v232
      %v2087 = vunpack.c.l.b16 %v233
      %v2088 = vunpack.c.l.b16 %v234
      %v2089 = vunpack.c.l.b16 %v235
      %v2090 = vunpack.c.l.b16 %v236
      %v2091 = vunpack.c.l.b16 %v237
      %v2092 = vunpack.c.l.b16 %v238
      %v2093 = vunpack.c.l.b16 %v239
      %v2094 = vunpack.c.l.b16 %v240
      %v2095 = vunpack.c.l.b16 %v241
      %v2096 = vunpack.c.l.b16 %v242
      %v2097 = vunpack.c.l.b16 %v243
      %v2098 = vunpack.c.l.b16 %v244
      %v2099 = vunpack.c.l.b16 %v245
      %v2100 = vunpack.c.l.b16 %v246
      %v2101 = vunpack.c.l.b16 %v247
      %v2102 = vunpack.c.l.b16 %v248
      %v2103 = vunpack.c.l.b16 %v249
      %v2104 = vpack.c.b16 %v2073, %v2072
      %v2105 = vpack.c.b16 %v2075, %v2074
      %v2106 = vpack.c.b16 %v2077, %v2076
      %v2107 = vpack.c.b16 %v2079, %v2078
      %v2108 = vpack.c.b16 %v2081, %v2080
      %v2109 = vpack.c.b16 %v2083, %v2082
      %v2110 = vpack.c.b16 %v2085, %v2084
      %v2111 = vpack.c.b16 %v2087, %v2086
      %v2112 = vpack.c.b16 %v2089, %v2088
      %v2113 = vpack.c.b16 %v2091, %v2090
      %v2114 = vpack.c.b16 %v2093, %v2092
      %v2115 = vpack.c.b16 %v2095, %v2094
      %v2116 = vpack.c.b16 %v2097, %v2096
      %v2117 = vpack.c.b16 %v2099, %v2098
      %v2118 = vpack.c.b16 %v2101, %v2100
      %v2119 = vpack.c.b16 %v2103, %v2102
      %v2120 = vunpack.c.l.b16 %v282
      %v2121 = vunpack.c.l.b16 %v292
      %v2122 = vunpack.c.l.b16 %v306
      %v2123 = vunpack.c.l.b16 %v316
      %v2124 = vunpack.c.l.b16 %v330
      %v2125 = vunpack.c.l.b16 %v340
      %v2126 = vunpack.c.l.b16 %v354
      %v2127 = vunpack.c.l.b16 %v364
      %v2128 = vunpack.c.l.b16 %v378
      %v2129 = vunpack.c.l.b16 %v388
      %v2130 = vunpack.c.l.b16 %v402
      %v2131 = vunpack.c.l.b16 %v412
      %v2132 = vunpack.c.l.b16 %v426
      %v2133 = vunpack.c.l.b16 %v436
      %v2134 = vunpack.c.l.b16 %v450
      %v2135 = vunpack.c.l.b16 %v460
      %v2136 = vunpack.c.l.b16 %v474
      %v2137 = vunpack.c.l.b16 %v484
      %v2138 = vunpack.c.l.b16 %v498
      %v2139 = vunpack.c.l.b16 %v508
      %v2140 = vunpack.c.l.b16 %v522
      %v2141 = vunpack.c.l.b16 %v532
      %v2142 = vunpack.c.l.b16 %v546
      %v2143 = vunpack.c.l.b16 %v556
      %v2144 = vunpack.c.l.b16 %v570
      %v2145 = vunpack.c.l.b16 %v580
      %v2146 = vunpack.c.l.b16 %v594
      %v2147 = vunpack.c.l.b16 %v604
      %v2148 = vunpack.c.l.b16 %v618
      %v2149 = vunpack.c.l.b16 %v628
      %v2150 = vunpack.c.l.b16 %v642
      %v2151 = vunpack.c.l.b16 %v652
      %v2152 = vpack.c.b16 %v2121, %v2120
      %v2153 = vpack.c.b16 %v2123, %v2122
      %v2154 = vpack.c.b16 %v2125, %v2124
      %v2155 = vpack.c.b16 %v2127, %v2126
      %v2156 = vpack.c.b16 %v2129, %v2128
      %v2157 = vpack.c.b16 %v2131, %v2130
      %v2158 = vpack.c.b16 %v2133, %v2132
      %v2159 = vpack.c.b16 %v2135, %v2134
      %v2160 = vpack.c.b16 %v2137, %v2136
      %v2161 = vpack.c.b16 %v2139, %v2138
      %v2162 = vpack.c.b16 %v2141, %v2140
      %v2163 = vpack.c.b16 %v2143, %v2142
      %v2164 = vpack.c.b16 %v2145, %v2144
      %v2165 = vpack.c.b16 %v2147, %v2146
      %v2166 = vpack.c.b16 %v2149, %v2148
      %v2167 = vpack.c.b16 %v2151, %v2150
      %2168 = vrot.lane.b32.xlu0 %v2152, 4
      %v2169 = vpop.permute.xlu0 %2168
      %2170 = vrot.lane.b32.xlu0 %v2153, 4
      %v2171 = vpop.permute.xlu0 %2170
      %2172 = vrot.lane.b32.xlu0 %v2154, 4
      %v2173 = vpop.permute.xlu0 %2172
      %2174 = vrot.lane.b32.xlu0 %v2155, 4
      %v2175 = vpop.permute.xlu0 %2174
      %2176 = vrot.lane.b32.xlu0 %v2156, 4
      %v2177 = vpop.permute.xlu0 %2176
      %2178 = vrot.lane.b32.xlu0 %v2157, 4
      %v2179 = vpop.permute.xlu0 %2178
      %2180 = vrot.lane.b32.xlu0 %v2158, 4
      %v2181 = vpop.permute.xlu0 %2180
      %2182 = vrot.lane.b32.xlu0 %v2159, 4
      %v2183 = vpop.permute.xlu0 %2182
      %2184 = vrot.lane.b32.xlu0 %v2160, 4
      %v2185 = vpop.permute.xlu0 %2184
      %2186 = vrot.lane.b32.xlu0 %v2161, 4
      %v2187 = vpop.permute.xlu0 %2186
      %2188 = vrot.lane.b32.xlu0 %v2162, 4
      %v2189 = vpop.permute.xlu0 %2188
      %2190 = vrot.lane.b32.xlu0 %v2163, 4
      %v2191 = vpop.permute.xlu0 %2190
      %2192 = vrot.lane.b32.xlu0 %v2164, 4
      %v2193 = vpop.permute.xlu0 %2192
      %2194 = vrot.lane.b32.xlu0 %v2165, 4
      %v2195 = vpop.permute.xlu0 %2194
      %2196 = vrot.lane.b32.xlu0 %v2166, 4
      %v2197 = vpop.permute.xlu0 %2196
      %2198 = vrot.lane.b32.xlu0 %v2167, 4
      %v2199 = vpop.permute.xlu0 %2198
      %v2200 = vunpack.c.l.b16 %v723
      %v2201 = vunpack.c.l.b16 %v726
      %v2202 = vunpack.c.l.b16 %v730
      %v2203 = vunpack.c.l.b16 %v733
      %v2204 = vunpack.c.l.b16 %v737
      %v2205 = vunpack.c.l.b16 %v740
      %v2206 = vunpack.c.l.b16 %v744
      %v2207 = vunpack.c.l.b16 %v747
      %v2208 = vunpack.c.l.b16 %v751
      %v2209 = vunpack.c.l.b16 %v754
      %v2210 = vunpack.c.l.b16 %v758
      %v2211 = vunpack.c.l.b16 %v761
      %v2212 = vunpack.c.l.b16 %v765
      %v2213 = vunpack.c.l.b16 %v768
      %v2214 = vunpack.c.l.b16 %v772
      %v2215 = vunpack.c.l.b16 %v775
      %v2216 = vunpack.c.l.b16 %v779
      %v2217 = vunpack.c.l.b16 %v782
      %v2218 = vunpack.c.l.b16 %v786
      %v2219 = vunpack.c.l.b16 %v789
      %v2220 = vunpack.c.l.b16 %v793
      %v2221 = vunpack.c.l.b16 %v796
      %v2222 = vunpack.c.l.b16 %v800
      %v2223 = vunpack.c.l.b16 %v803
      %v2224 = vunpack.c.l.b16 %v807
      %v2225 = vunpack.c.l.b16 %v810
      %v2226 = vunpack.c.l.b16 %v814
      %v2227 = vunpack.c.l.b16 %v817
      %v2228 = vunpack.c.l.b16 %v821
      %v2229 = vunpack.c.l.b16 %v824
      %v2230 = vunpack.c.l.b16 %v828
      %v2231 = vunpack.c.l.b16 %v831
      %v2232 = vpack.c.b16 %v2201, %v2200
      %v2233 = vpack.c.b16 %v2203, %v2202
      %v2234 = vpack.c.b16 %v2205, %v2204
      %v2235 = vpack.c.b16 %v2207, %v2206
      %v2236 = vpack.c.b16 %v2209, %v2208
      %v2237 = vpack.c.b16 %v2211, %v2210
      %v2238 = vpack.c.b16 %v2213, %v2212
      %v2239 = vpack.c.b16 %v2215, %v2214
      %v2240 = vpack.c.b16 %v2217, %v2216
      %v2241 = vpack.c.b16 %v2219, %v2218
      %v2242 = vpack.c.b16 %v2221, %v2220
      %v2243 = vpack.c.b16 %v2223, %v2222
      %v2244 = vpack.c.b16 %v2225, %v2224
      %v2245 = vpack.c.b16 %v2227, %v2226
      %v2246 = vpack.c.b16 %v2229, %v2228
      %v2247 = vpack.c.b16 %v2231, %v2230
      %2248 = vrot.lane.b32.xlu0 %v2232, 8
      %v2249 = vpop.permute.xlu0 %2248
      %2250 = vrot.lane.b32.xlu0 %v2233, 8
      %v2251 = vpop.permute.xlu0 %2250
      %2252 = vrot.lane.b32.xlu0 %v2234, 8
      %v2253 = vpop.permute.xlu0 %2252
      %2254 = vrot.lane.b32.xlu0 %v2235, 8
      %v2255 = vpop.permute.xlu0 %2254
      %2256 = vrot.lane.b32.xlu0 %v2236, 8
      %v2257 = vpop.permute.xlu0 %2256
      %2258 = vrot.lane.b32.xlu0 %v2237, 8
      %v2259 = vpop.permute.xlu0 %2258
      %2260 = vrot.lane.b32.xlu0 %v2238, 8
      %v2261 = vpop.permute.xlu0 %2260
      %2262 = vrot.lane.b32.xlu0 %v2239, 8
      %v2263 = vpop.permute.xlu0 %2262
      %2264 = vrot.lane.b32.xlu0 %v2240, 8
      %v2265 = vpop.permute.xlu0 %2264
      %2266 = vrot.lane.b32.xlu0 %v2241, 8
      %v2267 = vpop.permute.xlu0 %2266
      %2268 = vrot.lane.b32.xlu0 %v2242, 8
      %v2269 = vpop.permute.xlu0 %2268
      %2270 = vrot.lane.b32.xlu0 %v2243, 8
      %v2271 = vpop.permute.xlu0 %2270
      %2272 = vrot.lane.b32.xlu0 %v2244, 8
      %v2273 = vpop.permute.xlu0 %2272
      %2274 = vrot.lane.b32.xlu0 %v2245, 8
      %v2275 = vpop.permute.xlu0 %2274
      %2276 = vrot.lane.b32.xlu0 %v2246, 8
      %v2277 = vpop.permute.xlu0 %2276
      %2278 = vrot.lane.b32.xlu0 %v2247, 8
      %v2279 = vpop.permute.xlu0 %2278
      %v2296 = vunpack.c.l.b16 %v836
      %v2297 = vunpack.c.l.b16 %v837
      %v2298 = vunpack.c.l.b16 %v838
      %v2299 = vunpack.c.l.b16 %v839
      %v2300 = vunpack.c.l.b16 %v840
      %v2301 = vunpack.c.l.b16 %v841
      %v2302 = vunpack.c.l.b16 %v842
      %v2303 = vunpack.c.l.b16 %v843
      %v2304 = vunpack.c.l.b16 %v844
      %v2305 = vunpack.c.l.b16 %v845
      %v2306 = vunpack.c.l.b16 %v846
      %v2307 = vunpack.c.l.b16 %v847
      %v2308 = vunpack.c.l.b16 %v848
      %v2309 = vunpack.c.l.b16 %v849
      %v2310 = vunpack.c.l.b16 %v850
      %v2311 = vunpack.c.l.b16 %v851
      %v2312 = vunpack.c.l.b16 %v852
      %v2313 = vunpack.c.l.b16 %v853
      %v2314 = vunpack.c.l.b16 %v854
      %v2315 = vunpack.c.l.b16 %v855
      %v2316 = vunpack.c.l.b16 %v856
      %v2317 = vunpack.c.l.b16 %v857
      %v2318 = vunpack.c.l.b16 %v858
      %v2319 = vunpack.c.l.b16 %v859
      %v2320 = vunpack.c.l.b16 %v860
      %v2321 = vunpack.c.l.b16 %v861
      %v2322 = vunpack.c.l.b16 %v862
      %v2323 = vunpack.c.l.b16 %v863
      %v2324 = vunpack.c.l.b16 %v864
      %v2325 = vunpack.c.l.b16 %v865
      %v2326 = vunpack.c.l.b16 %v866
      %v2327 = vunpack.c.l.b16 %v867
      %v2328 = vpack.c.b16 %v2297, %v2296
      %v2329 = vpack.c.b16 %v2299, %v2298
      %v2330 = vpack.c.b16 %v2301, %v2300
      %v2331 = vpack.c.b16 %v2303, %v2302
      %v2332 = vpack.c.b16 %v2305, %v2304
      %v2333 = vpack.c.b16 %v2307, %v2306
      %v2334 = vpack.c.b16 %v2309, %v2308
      %v2335 = vpack.c.b16 %v2311, %v2310
      %v2336 = vpack.c.b16 %v2313, %v2312
      %v2337 = vpack.c.b16 %v2315, %v2314
      %v2338 = vpack.c.b16 %v2317, %v2316
      %v2339 = vpack.c.b16 %v2319, %v2318
      %v2340 = vpack.c.b16 %v2321, %v2320
      %v2341 = vpack.c.b16 %v2323, %v2322
      %v2342 = vpack.c.b16 %v2325, %v2324
      %v2343 = vpack.c.b16 %v2327, %v2326
      %2344 = vrot.lane.b32.xlu0 %v2328, 12
      %v2345 = vpop.permute.xlu0 %2344
      %2346 = vrot.lane.b32.xlu0 %v2329, 12
      %v2347 = vpop.permute.xlu0 %2346
      %2348 = vrot.lane.b32.xlu0 %v2330, 12
      %v2349 = vpop.permute.xlu0 %2348
      %2350 = vrot.lane.b32.xlu0 %v2331, 12
      %v2351 = vpop.permute.xlu0 %2350
      %2352 = vrot.lane.b32.xlu0 %v2332, 12
      %v2353 = vpop.permute.xlu0 %2352
      %2354 = vrot.lane.b32.xlu0 %v2333, 12
      %v2355 = vpop.permute.xlu0 %2354
      %2356 = vrot.lane.b32.xlu0 %v2334, 12
      %v2357 = vpop.permute.xlu0 %2356
      %2358 = vrot.lane.b32.xlu0 %v2335, 12
      %v2359 = vpop.permute.xlu0 %2358
      %2360 = vrot.lane.b32.xlu0 %v2336, 12
      %v2361 = vpop.permute.xlu0 %2360
      %2362 = vrot.lane.b32.xlu0 %v2337, 12
      %v2363 = vpop.permute.xlu0 %2362
      %2364 = vrot.lane.b32.xlu0 %v2338, 12
      %v2365 = vpop.permute.xlu0 %2364
      %2366 = vrot.lane.b32.xlu0 %v2339, 12
      %v2367 = vpop.permute.xlu0 %2366
      %2368 = vrot.lane.b32.xlu0 %v2340, 12
      %v2369 = vpop.permute.xlu0 %2368
      %2370 = vrot.lane.b32.xlu0 %v2341, 12
      %v2371 = vpop.permute.xlu0 %2370
      %2372 = vrot.lane.b32.xlu0 %v2342, 12
      %v2373 = vpop.permute.xlu0 %2372
      %2374 = vrot.lane.b32.xlu0 %v2343, 12
      %v2375 = vpop.permute.xlu0 %2374
      %v2376 = vunpack.c.l.b16 %v897
      %v2377 = vunpack.c.l.b16 %v907
      %v2378 = vunpack.c.l.b16 %v921
      %v2379 = vunpack.c.l.b16 %v931
      %v2380 = vunpack.c.l.b16 %v945
      %v2381 = vunpack.c.l.b16 %v955
      %v2382 = vunpack.c.l.b16 %v969
      %v2383 = vunpack.c.l.b16 %v979
      %v2384 = vunpack.c.l.b16 %v993
      %v2385 = vunpack.c.l.b16 %v1003
      %v2386 = vunpack.c.l.b16 %v1017
      %v2387 = vunpack.c.l.b16 %v1027
      %v2388 = vunpack.c.l.b16 %v1041
      %v2389 = vunpack.c.l.b16 %v1051
      %v2390 = vunpack.c.l.b16 %v1065
      %v2391 = vunpack.c.l.b16 %v1075
      %v2392 = vunpack.c.l.b16 %v1089
      %v2393 = vunpack.c.l.b16 %v1099
      %v2394 = vunpack.c.l.b16 %v1113
      %v2395 = vunpack.c.l.b16 %v1123
      %v2396 = vunpack.c.l.b16 %v1137
      %v2397 = vunpack.c.l.b16 %v1147
      %v2398 = vunpack.c.l.b16 %v1161
      %v2399 = vunpack.c.l.b16 %v1171
      %v2400 = vunpack.c.l.b16 %v1185
      %v2401 = vunpack.c.l.b16 %v1195
      %v2402 = vunpack.c.l.b16 %v1209
      %v2403 = vunpack.c.l.b16 %v1219
      %v2404 = vunpack.c.l.b16 %v1233
      %v2405 = vunpack.c.l.b16 %v1243
      %v2406 = vunpack.c.l.b16 %v1257
      %v2407 = vunpack.c.l.b16 %v1267
      %v2408 = vpack.c.b16 %v2377, %v2376
      %v2409 = vpack.c.b16 %v2379, %v2378
      %v2410 = vpack.c.b16 %v2381, %v2380
      %v2411 = vpack.c.b16 %v2383, %v2382
      %v2412 = vpack.c.b16 %v2385, %v2384
      %v2413 = vpack.c.b16 %v2387, %v2386
      %v2414 = vpack.c.b16 %v2389, %v2388
      %v2415 = vpack.c.b16 %v2391, %v2390
      %v2416 = vpack.c.b16 %v2393, %v2392
      %v2417 = vpack.c.b16 %v2395, %v2394
      %v2418 = vpack.c.b16 %v2397, %v2396
      %v2419 = vpack.c.b16 %v2399, %v2398
      %v2420 = vpack.c.b16 %v2401, %v2400
      %v2421 = vpack.c.b16 %v2403, %v2402
      %v2422 = vpack.c.b16 %v2405, %v2404
      %v2423 = vpack.c.b16 %v2407, %v2406
      %2424 = vrot.lane.b32.xlu0 %v2408, 16
      %v2425 = vpop.permute.xlu0 %2424
      %2426 = vrot.lane.b32.xlu0 %v2409, 16
      %v2427 = vpop.permute.xlu0 %2426
      %2428 = vrot.lane.b32.xlu0 %v2410, 16
      %v2429 = vpop.permute.xlu0 %2428
      %2430 = vrot.lane.b32.xlu0 %v2411, 16
      %v2431 = vpop.permute.xlu0 %2430
      %2432 = vrot.lane.b32.xlu0 %v2412, 16
      %v2433 = vpop.permute.xlu0 %2432
      %2434 = vrot.lane.b32.xlu0 %v2413, 16
      %v2435 = vpop.permute.xlu0 %2434
      %2436 = vrot.lane.b32.xlu0 %v2414, 16
      %v2437 = vpop.permute.xlu0 %2436
      %2438 = vrot.lane.b32.xlu0 %v2415, 16
      %v2439 = vpop.permute.xlu0 %2438
      %2440 = vrot.lane.b32.xlu0 %v2416, 16
      %v2441 = vpop.permute.xlu0 %2440
      %2442 = vrot.lane.b32.xlu0 %v2417, 16
      %v2443 = vpop.permute.xlu0 %2442
      %2444 = vrot.lane.b32.xlu0 %v2418, 16
      %v2445 = vpop.permute.xlu0 %2444
      %2446 = vrot.lane.b32.xlu0 %v2419, 16
      %v2447 = vpop.permute.xlu0 %2446
      %2448 = vrot.lane.b32.xlu0 %v2420, 16
      %v2449 = vpop.permute.xlu0 %2448
      %2450 = vrot.lane.b32.xlu0 %v2421, 16
      %v2451 = vpop.permute.xlu0 %2450
      %2452 = vrot.lane.b32.xlu0 %v2422, 16
      %v2453 = vpop.permute.xlu0 %2452
      %2454 = vrot.lane.b32.xlu0 %v2423, 16
      %v2455 = vpop.permute.xlu0 %2454
      %v2456 = vunpack.c.l.b16 %v1335
      %v2457 = vunpack.c.l.b16 %v1338
      %v2458 = vunpack.c.l.b16 %v1342
      %v2459 = vunpack.c.l.b16 %v1345
      %v2460 = vunpack.c.l.b16 %v1349
      %v2461 = vunpack.c.l.b16 %v1352
      %v2462 = vunpack.c.l.b16 %v1356
      %v2463 = vunpack.c.l.b16 %v1359
      %v2464 = vunpack.c.l.b16 %v1363
      %v2465 = vunpack.c.l.b16 %v1366
      %v2466 = vunpack.c.l.b16 %v1370
      %v2467 = vunpack.c.l.b16 %v1373
      %v2468 = vunpack.c.l.b16 %v1377
      %v2469 = vunpack.c.l.b16 %v1380
      %v2470 = vunpack.c.l.b16 %v1384
      %v2471 = vunpack.c.l.b16 %v1387
      %v2472 = vunpack.c.l.b16 %v1391
      %v2473 = vunpack.c.l.b16 %v1394
      %v2474 = vunpack.c.l.b16 %v1398
      %v2475 = vunpack.c.l.b16 %v1401
      %v2476 = vunpack.c.l.b16 %v1405
      %v2477 = vunpack.c.l.b16 %v1408
      %v2478 = vunpack.c.l.b16 %v1412
      %v2479 = vunpack.c.l.b16 %v1415
      %v2480 = vunpack.c.l.b16 %v1419
      %v2481 = vunpack.c.l.b16 %v1422
      %v2482 = vunpack.c.l.b16 %v1426
      %v2483 = vunpack.c.l.b16 %v1429
      %v2484 = vunpack.c.l.b16 %v1433
      %v2485 = vunpack.c.l.b16 %v1436
      %v2486 = vunpack.c.l.b16 %v1440
      %v2487 = vunpack.c.l.b16 %v1443
      %v2488 = vpack.c.b16 %v2457, %v2456
      %v2489 = vpack.c.b16 %v2459, %v2458
      %v2490 = vpack.c.b16 %v2461, %v2460
      %v2491 = vpack.c.b16 %v2463, %v2462
      %v2492 = vpack.c.b16 %v2465, %v2464
      %v2493 = vpack.c.b16 %v2467, %v2466
      %v2494 = vpack.c.b16 %v2469, %v2468
      %v2495 = vpack.c.b16 %v2471, %v2470
      %v2496 = vpack.c.b16 %v2473, %v2472
      %v2497 = vpack.c.b16 %v2475, %v2474
      %v2498 = vpack.c.b16 %v2477, %v2476
      %v2499 = vpack.c.b16 %v2479, %v2478
      %v2500 = vpack.c.b16 %v2481, %v2480
      %v2501 = vpack.c.b16 %v2483, %v2482
      %v2502 = vpack.c.b16 %v2485, %v2484
      %v2503 = vpack.c.b16 %v2487, %v2486
      %2504 = vrot.lane.b32.xlu0 %v2488, 20
      %v2505 = vpop.permute.xlu0 %2504
      %2506 = vrot.lane.b32.xlu0 %v2489, 20
      %v2507 = vpop.permute.xlu0 %2506
      %2508 = vrot.lane.b32.xlu0 %v2490, 20
      %v2509 = vpop.permute.xlu0 %2508
      %2510 = vrot.lane.b32.xlu0 %v2491, 20
      %v2511 = vpop.permute.xlu0 %2510
      %2512 = vrot.lane.b32.xlu0 %v2492, 20
      %v2513 = vpop.permute.xlu0 %2512
      %2514 = vrot.lane.b32.xlu0 %v2493, 20
      %v2515 = vpop.permute.xlu0 %2514
      %2516 = vrot.lane.b32.xlu0 %v2494, 20
      %v2517 = vpop.permute.xlu0 %2516
      %2518 = vrot.lane.b32.xlu0 %v2495, 20
      %v2519 = vpop.permute.xlu0 %2518
      %2520 = vrot.lane.b32.xlu0 %v2496, 20
      %v2521 = vpop.permute.xlu0 %2520
      %2522 = vrot.lane.b32.xlu0 %v2497, 20
      %v2523 = vpop.permute.xlu0 %2522
      %2524 = vrot.lane.b32.xlu0 %v2498, 20
      %v2525 = vpop.permute.xlu0 %2524
      %2526 = vrot.lane.b32.xlu0 %v2499, 20
      %v2527 = vpop.permute.xlu0 %2526
      %2528 = vrot.lane.b32.xlu0 %v2500, 20
      %v2529 = vpop.permute.xlu0 %2528
      %2530 = vrot.lane.b32.xlu0 %v2501, 20
      %v2531 = vpop.permute.xlu0 %2530
      %2532 = vrot.lane.b32.xlu0 %v2502, 20
      %v2533 = vpop.permute.xlu0 %2532
      %2534 = vrot.lane.b32.xlu0 %v2503, 20
      %v2535 = vpop.permute.xlu0 %2534
      %v2552 = vunpack.c.l.b16 %v1448
      %v2553 = vunpack.c.l.b16 %v1449
      %v2554 = vunpack.c.l.b16 %v1450
      %v2555 = vunpack.c.l.b16 %v1451
      %v2556 = vunpack.c.l.b16 %v1452
      %v2557 = vunpack.c.l.b16 %v1453
      %v2558 = vunpack.c.l.b16 %v1454
      %v2559 = vunpack.c.l.b16 %v1455
      %v2560 = vunpack.c.l.b16 %v1456
      %v2561 = vunpack.c.l.b16 %v1457
      %v2562 = vunpack.c.l.b16 %v1458
      %v2563 = vunpack.c.l.b16 %v1459
      %v2564 = vunpack.c.l.b16 %v1460
      %v2565 = vunpack.c.l.b16 %v1461
      %v2566 = vunpack.c.l.b16 %v1462
      %v2567 = vunpack.c.l.b16 %v1463
      %v2568 = vunpack.c.l.b16 %v1464
      %v2569 = vunpack.c.l.b16 %v1465
      %v2570 = vunpack.c.l.b16 %v1466
      %v2571 = vunpack.c.l.b16 %v1467
      %v2572 = vunpack.c.l.b16 %v1468
      %v2573 = vunpack.c.l.b16 %v1469
      %v2574 = vunpack.c.l.b16 %v1470
      %v2575 = vunpack.c.l.b16 %v1471
      %v2576 = vunpack.c.l.b16 %v1472
      %v2577 = vunpack.c.l.b16 %v1473
      %v2578 = vunpack.c.l.b16 %v1474
      %v2579 = vunpack.c.l.b16 %v1475
      %v2580 = vunpack.c.l.b16 %v1476
      %v2581 = vunpack.c.l.b16 %v1477
      %v2582 = vunpack.c.l.b16 %v1478
      %v2583 = vunpack.c.l.b16 %v1479
      %v2584 = vpack.c.b16 %v2553, %v2552
      %v2585 = vpack.c.b16 %v2555, %v2554
      %v2586 = vpack.c.b16 %v2557, %v2556
      %v2587 = vpack.c.b16 %v2559, %v2558
      %v2588 = vpack.c.b16 %v2561, %v2560
      %v2589 = vpack.c.b16 %v2563, %v2562
      %v2590 = vpack.c.b16 %v2565, %v2564
      %v2591 = vpack.c.b16 %v2567, %v2566
      %v2592 = vpack.c.b16 %v2569, %v2568
      %v2593 = vpack.c.b16 %v2571, %v2570
      %v2594 = vpack.c.b16 %v2573, %v2572
      %v2595 = vpack.c.b16 %v2575, %v2574
      %v2596 = vpack.c.b16 %v2577, %v2576
      %v2597 = vpack.c.b16 %v2579, %v2578
      %v2598 = vpack.c.b16 %v2581, %v2580
      %v2599 = vpack.c.b16 %v2583, %v2582
      %2600 = vrot.lane.b32.xlu0 %v2584, 24
      %v2601 = vpop.permute.xlu0 %2600
      %2602 = vrot.lane.b32.xlu0 %v2585, 24
      %v2603 = vpop.permute.xlu0 %2602
      %2604 = vrot.lane.b32.xlu0 %v2586, 24
      %v2605 = vpop.permute.xlu0 %2604
      %2606 = vrot.lane.b32.xlu0 %v2587, 24
      %v2607 = vpop.permute.xlu0 %2606
      %2608 = vrot.lane.b32.xlu0 %v2588, 24
      %v2609 = vpop.permute.xlu0 %2608
      %2610 = vrot.lane.b32.xlu0 %v2589, 24
      %v2611 = vpop.permute.xlu0 %2610
      %2612 = vrot.lane.b32.xlu0 %v2590, 24
      %v2613 = vpop.permute.xlu0 %2612
      %2614 = vrot.lane.b32.xlu0 %v2591, 24
      %v2615 = vpop.permute.xlu0 %2614
      %2616 = vrot.lane.b32.xlu0 %v2592, 24
      %v2617 = vpop.permute.xlu0 %2616
      %2618 = vrot.lane.b32.xlu0 %v2593, 24
      %v2619 = vpop.permute.xlu0 %2618
      %2620 = vrot.lane.b32.xlu0 %v2594, 24
      %v2621 = vpop.permute.xlu0 %2620
      %2622 = vrot.lane.b32.xlu0 %v2595, 24
      %v2623 = vpop.permute.xlu0 %2622
      %2624 = vrot.lane.b32.xlu0 %v2596, 24
      %v2625 = vpop.permute.xlu0 %2624
      %2626 = vrot.lane.b32.xlu0 %v2597, 24
      %v2627 = vpop.permute.xlu0 %2626
      %2628 = vrot.lane.b32.xlu0 %v2598, 24
      %v2629 = vpop.permute.xlu0 %2628
      %2630 = vrot.lane.b32.xlu0 %v2599, 24
      %v2631 = vpop.permute.xlu0 %2630
      %v2632 = vunpack.c.l.b16 %v1509
      %v2633 = vunpack.c.l.b16 %v1519
      %v2634 = vunpack.c.l.b16 %v1533
      %v2635 = vunpack.c.l.b16 %v1543
      %v2636 = vunpack.c.l.b16 %v1557
      %v2637 = vunpack.c.l.b16 %v1567
      %v2638 = vunpack.c.l.b16 %v1581
      %v2639 = vunpack.c.l.b16 %v1591
      %v2640 = vunpack.c.l.b16 %v1605
      %v2641 = vunpack.c.l.b16 %v1615
      %v2642 = vunpack.c.l.b16 %v1629
      %v2643 = vunpack.c.l.b16 %v1639
      %v2644 = vunpack.c.l.b16 %v1653
      %v2645 = vunpack.c.l.b16 %v1663
      %v2646 = vunpack.c.l.b16 %v1677
      %v2647 = vunpack.c.l.b16 %v1687
      %v2648 = vunpack.c.l.b16 %v1701
      %v2649 = vunpack.c.l.b16 %v1711
      %v2650 = vunpack.c.l.b16 %v1725
      %v2651 = vunpack.c.l.b16 %v1735
      %v2652 = vunpack.c.l.b16 %v1749
      %v2653 = vunpack.c.l.b16 %v1759
      %v2654 = vunpack.c.l.b16 %v1773
      %v2655 = vunpack.c.l.b16 %v1783
      %v2656 = vunpack.c.l.b16 %v1797
      %v2657 = vunpack.c.l.b16 %v1807
      %v2658 = vunpack.c.l.b16 %v1821
      %v2659 = vunpack.c.l.b16 %v1831
      %v2660 = vunpack.c.l.b16 %v1845
      %v2661 = vunpack.c.l.b16 %v1855
      %v2662 = vunpack.c.l.b16 %v1869
      %v2663 = vunpack.c.l.b16 %v1879
      %v2664 = vpack.c.b16 %v2633, %v2632
      %v2665 = vpack.c.b16 %v2635, %v2634
      %v2666 = vpack.c.b16 %v2637, %v2636
      %v2667 = vpack.c.b16 %v2639, %v2638
      %v2668 = vpack.c.b16 %v2641, %v2640
      %v2669 = vpack.c.b16 %v2643, %v2642
      %v2670 = vpack.c.b16 %v2645, %v2644
      %v2671 = vpack.c.b16 %v2647, %v2646
      %v2672 = vpack.c.b16 %v2649, %v2648
      %v2673 = vpack.c.b16 %v2651, %v2650
      %v2674 = vpack.c.b16 %v2653, %v2652
      %v2675 = vpack.c.b16 %v2655, %v2654
      %v2676 = vpack.c.b16 %v2657, %v2656
      %v2677 = vpack.c.b16 %v2659, %v2658
      %v2678 = vpack.c.b16 %v2661, %v2660
      %v2679 = vpack.c.b16 %v2663, %v2662
      %2680 = vrot.lane.b32.xlu0 %v2664, 28
      %v2681 = vpop.permute.xlu0 %2680
      %2682 = vrot.lane.b32.xlu0 %v2665, 28
      %v2683 = vpop.permute.xlu0 %2682
      %2684 = vrot.lane.b32.xlu0 %v2666, 28
      %v2685 = vpop.permute.xlu0 %2684
      %2686 = vrot.lane.b32.xlu0 %v2667, 28
      %v2687 = vpop.permute.xlu0 %2686
      %2688 = vrot.lane.b32.xlu0 %v2668, 28
      %v2689 = vpop.permute.xlu0 %2688
      %2690 = vrot.lane.b32.xlu0 %v2669, 28
      %v2691 = vpop.permute.xlu0 %2690
      %2692 = vrot.lane.b32.xlu0 %v2670, 28
      %v2693 = vpop.permute.xlu0 %2692
      %2694 = vrot.lane.b32.xlu0 %v2671, 28
      %v2695 = vpop.permute.xlu0 %2694
      %2696 = vrot.lane.b32.xlu0 %v2672, 28
      %v2697 = vpop.permute.xlu0 %2696
      %2698 = vrot.lane.b32.xlu0 %v2673, 28
      %v2699 = vpop.permute.xlu0 %2698
      %2700 = vrot.lane.b32.xlu0 %v2674, 28
      %v2701 = vpop.permute.xlu0 %2700
      %2702 = vrot.lane.b32.xlu0 %v2675, 28
      %v2703 = vpop.permute.xlu0 %2702
      %2704 = vrot.lane.b32.xlu0 %v2676, 28
      %v2705 = vpop.permute.xlu0 %2704
      %2706 = vrot.lane.b32.xlu0 %v2677, 28
      %v2707 = vpop.permute.xlu0 %2706
      %2708 = vrot.lane.b32.xlu0 %v2678, 28
      %v2709 = vpop.permute.xlu0 %2708
      %2710 = vrot.lane.b32.xlu0 %v2679, 28
      %v2711 = vpop.permute.xlu0 %2710
      %v2712 = vunpack.c.l.b16 %v1947
      %v2713 = vunpack.c.l.b16 %v1950
      %v2714 = vunpack.c.l.b16 %v1954
      %v2715 = vunpack.c.l.b16 %v1957
      %v2716 = vunpack.c.l.b16 %v1961
      %v2717 = vunpack.c.l.b16 %v1964
      %v2718 = vunpack.c.l.b16 %v1968
      %v2719 = vunpack.c.l.b16 %v1971
      %v2720 = vunpack.c.l.b16 %v1975
      %v2721 = vunpack.c.l.b16 %v1978
      %v2722 = vunpack.c.l.b16 %v1982
      %v2723 = vunpack.c.l.b16 %v1985
      %v2724 = vunpack.c.l.b16 %v1989
      %v2725 = vunpack.c.l.b16 %v1992
      %v2726 = vunpack.c.l.b16 %v1996
      %v2727 = vunpack.c.l.b16 %v1999
      %v2728 = vunpack.c.l.b16 %v2003
      %v2729 = vunpack.c.l.b16 %v2006
      %v2730 = vunpack.c.l.b16 %v2010
      %v2731 = vunpack.c.l.b16 %v2013
      %v2732 = vunpack.c.l.b16 %v2017
      %v2733 = vunpack.c.l.b16 %v2020
      %v2734 = vunpack.c.l.b16 %v2024
      %v2735 = vunpack.c.l.b16 %v2027
      %v2736 = vunpack.c.l.b16 %v2031
      %v2737 = vunpack.c.l.b16 %v2034
      %v2738 = vunpack.c.l.b16 %v2038
      %v2739 = vunpack.c.l.b16 %v2041
      %v2740 = vunpack.c.l.b16 %v2045
      %v2741 = vunpack.c.l.b16 %v2048
      %v2742 = vunpack.c.l.b16 %v2052
      %v2743 = vunpack.c.l.b16 %v2055
      %v2744 = vpack.c.b16 %v2713, %v2712
      %v2745 = vpack.c.b16 %v2715, %v2714
      %v2746 = vpack.c.b16 %v2717, %v2716
      %v2747 = vpack.c.b16 %v2719, %v2718
      %v2748 = vpack.c.b16 %v2721, %v2720
      %v2749 = vpack.c.b16 %v2723, %v2722
      %v2750 = vpack.c.b16 %v2725, %v2724
      %v2751 = vpack.c.b16 %v2727, %v2726
      %v2752 = vpack.c.b16 %v2729, %v2728
      %v2753 = vpack.c.b16 %v2731, %v2730
      %v2754 = vpack.c.b16 %v2733, %v2732
      %v2755 = vpack.c.b16 %v2735, %v2734
      %v2756 = vpack.c.b16 %v2737, %v2736
      %v2757 = vpack.c.b16 %v2739, %v2738
      %v2758 = vpack.c.b16 %v2741, %v2740
      %v2759 = vpack.c.b16 %v2743, %v2742
      %2760 = vrot.lane.b32.xlu0 %v2744, 32
      %v2761 = vpop.permute.xlu0 %2760
      %2762 = vrot.lane.b32.xlu0 %v2745, 32
      %v2763 = vpop.permute.xlu0 %2762
      %2764 = vrot.lane.b32.xlu0 %v2746, 32
      %v2765 = vpop.permute.xlu0 %2764
      %2766 = vrot.lane.b32.xlu0 %v2747, 32
      %v2767 = vpop.permute.xlu0 %2766
      %2768 = vrot.lane.b32.xlu0 %v2748, 32
      %v2769 = vpop.permute.xlu0 %2768
      %2770 = vrot.lane.b32.xlu0 %v2749, 32
      %v2771 = vpop.permute.xlu0 %2770
      %2772 = vrot.lane.b32.xlu0 %v2750, 32
      %v2773 = vpop.permute.xlu0 %2772
      %2774 = vrot.lane.b32.xlu0 %v2751, 32
      %v2775 = vpop.permute.xlu0 %2774
      %2776 = vrot.lane.b32.xlu0 %v2752, 32
      %v2777 = vpop.permute.xlu0 %2776
      %2778 = vrot.lane.b32.xlu0 %v2753, 32
      %v2779 = vpop.permute.xlu0 %2778
      %2780 = vrot.lane.b32.xlu0 %v2754, 32
      %v2781 = vpop.permute.xlu0 %2780
      %2782 = vrot.lane.b32.xlu0 %v2755, 32
      %v2783 = vpop.permute.xlu0 %2782
      %2784 = vrot.lane.b32.xlu0 %v2756, 32
      %v2785 = vpop.permute.xlu0 %2784
      %2786 = vrot.lane.b32.xlu0 %v2757, 32
      %v2787 = vpop.permute.xlu0 %2786
      %2788 = vrot.lane.b32.xlu0 %v2758, 32
      %v2789 = vpop.permute.xlu0 %2788
      %2790 = vrot.lane.b32.xlu0 %v2759, 32
      %v2791 = vpop.permute.xlu0 %2790
      %vm2792 = vcmask 31744
      %v2795 = vsel %vm2792, %v2104, %v2169
      %v2798 = vsel %vm2792, %v2105, %v2171
      %v2801 = vsel %vm2792, %v2106, %v2173
      %v2804 = vsel %vm2792, %v2107, %v2175
      %v2807 = vsel %vm2792, %v2108, %v2177
      %v2810 = vsel %vm2792, %v2109, %v2179
      %v2813 = vsel %vm2792, %v2110, %v2181
      %v2816 = vsel %vm2792, %v2111, %v2183
      %v2819 = vsel %vm2792, %v2112, %v2185
      %v2822 = vsel %vm2792, %v2113, %v2187
      %v2825 = vsel %vm2792, %v2114, %v2189
      %v2828 = vsel %vm2792, %v2115, %v2191
      %v2831 = vsel %vm2792, %v2116, %v2193
      %v2834 = vsel %vm2792, %v2117, %v2195
      %v2837 = vsel %vm2792, %v2118, %v2197
      %v2840 = vsel %vm2792, %v2119, %v2199
      %vm2841 = vcmask 64512
      %v2843 = vsel %vm2841, %v2795, %v2249
      %v2845 = vsel %vm2841, %v2798, %v2251
      %v2847 = vsel %vm2841, %v2801, %v2253
      %v2849 = vsel %vm2841, %v2804, %v2255
      %v2851 = vsel %vm2841, %v2807, %v2257
      %v2853 = vsel %vm2841, %v2810, %v2259
      %v2855 = vsel %vm2841, %v2813, %v2261
      %v2857 = vsel %vm2841, %v2816, %v2263
      %v2859 = vsel %vm2841, %v2819, %v2265
      %v2861 = vsel %vm2841, %v2822, %v2267
      %v2863 = vsel %vm2841, %v2825, %v2269
      %v2865 = vsel %vm2841, %v2828, %v2271
      %v2867 = vsel %vm2841, %v2831, %v2273
      %v2869 = vsel %vm2841, %v2834, %v2275
      %v2871 = vsel %vm2841, %v2837, %v2277
      %v2873 = vsel %vm2841, %v2840, %v2279
      %vm2874 = vcmask 97280
      %v2876 = vsel %vm2874, %v2843, %v2345
      %v2878 = vsel %vm2874, %v2845, %v2347
      %v2880 = vsel %vm2874, %v2847, %v2349
      %v2882 = vsel %vm2874, %v2849, %v2351
      %v2884 = vsel %vm2874, %v2851, %v2353
      %v2886 = vsel %vm2874, %v2853, %v2355
      %v2888 = vsel %vm2874, %v2855, %v2357
      %v2890 = vsel %vm2874, %v2857, %v2359
      %v2892 = vsel %vm2874, %v2859, %v2361
      %v2894 = vsel %vm2874, %v2861, %v2363
      %v2896 = vsel %vm2874, %v2863, %v2365
      %v2898 = vsel %vm2874, %v2865, %v2367
      %v2900 = vsel %vm2874, %v2867, %v2369
      %v2902 = vsel %vm2874, %v2869, %v2371
      %v2904 = vsel %vm2874, %v2871, %v2373
      %v2906 = vsel %vm2874, %v2873, %v2375
      %vm2907 = vcmask 130048
      %v2909 = vsel %vm2907, %v2876, %v2425
      %v2911 = vsel %vm2907, %v2878, %v2427
      %v2913 = vsel %vm2907, %v2880, %v2429
      %v2915 = vsel %vm2907, %v2882, %v2431
      %v2917 = vsel %vm2907, %v2884, %v2433
      %v2919 = vsel %vm2907, %v2886, %v2435
      %v2921 = vsel %vm2907, %v2888, %v2437
      %v2923 = vsel %vm2907, %v2890, %v2439
      %v2925 = vsel %vm2907, %v2892, %v2441
      %v2927 = vsel %vm2907, %v2894, %v2443
      %v2929 = vsel %vm2907, %v2896, %v2445
      %v2931 = vsel %vm2907, %v2898, %v2447
      %v2933 = vsel %vm2907, %v2900, %v2449
      %v2935 = vsel %vm2907, %v2902, %v2451
      %v2937 = vsel %vm2907, %v2904, %v2453
      %v2939 = vsel %vm2907, %v2906, %v2455
      %vm2940 = vcmask 162816
      %v2942 = vsel %vm2940, %v2909, %v2505
      %v2944 = vsel %vm2940, %v2911, %v2507
      %v2946 = vsel %vm2940, %v2913, %v2509
      %v2948 = vsel %vm2940, %v2915, %v2511
      %v2950 = vsel %vm2940, %v2917, %v2513
      %v2952 = vsel %vm2940, %v2919, %v2515
      %v2954 = vsel %vm2940, %v2921, %v2517
      %v2956 = vsel %vm2940, %v2923, %v2519
      %v2958 = vsel %vm2940, %v2925, %v2521
      %v2960 = vsel %vm2940, %v2927, %v2523
      %v2962 = vsel %vm2940, %v2929, %v2525
      %v2964 = vsel %vm2940, %v2931, %v2527
      %v2966 = vsel %vm2940, %v2933, %v2529
      %v2968 = vsel %vm2940, %v2935, %v2531
      %v2970 = vsel %vm2940, %v2937, %v2533
      %v2972 = vsel %vm2940, %v2939, %v2535
      %vm2973 = vcmask 195584
      %v2975 = vsel %vm2973, %v2942, %v2601
      %v2977 = vsel %vm2973, %v2944, %v2603
      %v2979 = vsel %vm2973, %v2946, %v2605
      %v2981 = vsel %vm2973, %v2948, %v2607
      %v2983 = vsel %vm2973, %v2950, %v2609
      %v2985 = vsel %vm2973, %v2952, %v2611
      %v2987 = vsel %vm2973, %v2954, %v2613
      %v2989 = vsel %vm2973, %v2956, %v2615
      %v2991 = vsel %vm2973, %v2958, %v2617
      %v2993 = vsel %vm2973, %v2960, %v2619
      %v2995 = vsel %vm2973, %v2962, %v2621
      %v2997 = vsel %vm2973, %v2964, %v2623
      %v2999 = vsel %vm2973, %v2966, %v2625
      %v3001 = vsel %vm2973, %v2968, %v2627
      %v3003 = vsel %vm2973, %v2970, %v2629
      %v3005 = vsel %vm2973, %v2972, %v2631
      %vm3006 = vcmask 228352
      %v3008 = vsel %vm3006, %v2975, %v2681
      %v3010 = vsel %vm3006, %v2977, %v2683
      %v3012 = vsel %vm3006, %v2979, %v2685
      %v3014 = vsel %vm3006, %v2981, %v2687
      %v3016 = vsel %vm3006, %v2983, %v2689
      %v3018 = vsel %vm3006, %v2985, %v2691
      %v3020 = vsel %vm3006, %v2987, %v2693
      %v3022 = vsel %vm3006, %v2989, %v2695
      %v3024 = vsel %vm3006, %v2991, %v2697
      %v3026 = vsel %vm3006, %v2993, %v2699
      %v3028 = vsel %vm3006, %v2995, %v2701
      %v3030 = vsel %vm3006, %v2997, %v2703
      %v3032 = vsel %vm3006, %v2999, %v2705
      %v3034 = vsel %vm3006, %v3001, %v2707
      %v3036 = vsel %vm3006, %v3003, %v2709
      %v3038 = vsel %vm3006, %v3005, %v2711
      %vm3039 = vcmask 261120
      %v3041 = vsel %vm3039, %v3008, %v2761
      %v3043 = vsel %vm3039, %v3010, %v2763
      %v3045 = vsel %vm3039, %v3012, %v2765
      %v3047 = vsel %vm3039, %v3014, %v2767
      %v3049 = vsel %vm3039, %v3016, %v2769
      %v3051 = vsel %vm3039, %v3018, %v2771
      %v3053 = vsel %vm3039, %v3020, %v2773
      %v3055 = vsel %vm3039, %v3022, %v2775
      %v3057 = vsel %vm3039, %v3024, %v2777
      %v3059 = vsel %vm3039, %v3026, %v2779
      %v3061 = vsel %vm3039, %v3028, %v2781
      %v3063 = vsel %vm3039, %v3030, %v2783
      %v3065 = vsel %vm3039, %v3032, %v2785
      %v3067 = vsel %vm3039, %v3034, %v2787
      %v3069 = vsel %vm3039, %v3036, %v2789
      %v3071 = vsel %vm3039, %v3038, %v2791
      %v3072 = vld [vmem:[%s1] sm:$0xf]
      %v3073 = vld [vmem:[%s1 + $0x4] sm:$0xf]
      %v3074 = vld [vmem:[%s1 + $0x8] sm:$0xf]
      %v3075 = vld [vmem:[%s1 + $0xc] sm:$0xf]
      %v3076 = vld [vmem:[%s1 + $0x10] sm:$0x3]
      %v3082 = vunpack.c.l.b16 %v3072
      %v3083 = vunpack.c.l.b16 %v3073
      %v3084 = vunpack.c.l.b16 %v3074
      %v3085 = vunpack.c.l.b16 %v3075
      %v3086 = vunpack.c.l.b16 %v3076
      %v3087 = vpack.c.b16 %v3083, %v3082
      %v3088 = vpack.c.b16 %v3085, %v3084
      %v3089 = vpack.c.b16 %v3086, %v3086
      %vm3092 = vcmask 293888
      %v3093 = vsel %vm3092, %v3041, 0
      %v3095 = vsel %vm3092, %v3043, 0
      %v3097 = vsel %vm3092, %v3045, 0
      %v3099 = vsel %vm3092, %v3047, 0
      %v3101 = vsel %vm3092, %v3049, 0
      %v3103 = vsel %vm3092, %v3051, 0
      %v3105 = vsel %vm3092, %v3053, 0
      %v3107 = vsel %vm3092, %v3055, 0
      %v3109 = vsel %vm3092, %v3057, 0
      %v3111 = vsel %vm3092, %v3059, 0
      %v3113 = vsel %vm3092, %v3061, 0
      %v3115 = vsel %vm3092, %v3063, 0
      %v3117 = vsel %vm3092, %v3065, 0
      %v3119 = vsel %vm3092, %v3067, 0
      %v3121 = vsel %vm3092, %v3069, 0
      %v3123 = vsel %vm3092, %v3071, 0
      %vm3125 = vcmask 1041408
      %v3127 = vsel %vm3125, %v3089, 0
      %3129 = vmatprep.subr.bf16.mxu0 0
      %3130 = vmatpush1.bf16.msra.mxu0 %v3087
      %3131 = vmatprep.subr.bf16.mxu0 0
      %3132 = vmatpush1.bf16.msra.mxu0 %v3088
      %3133 = vmatprep.subr.bf16.mxu0 0
      %3134 = vmatpush1.bf16.msra.mxu0 %v3127
      %3135 = vmatprep.subr.bf16.mxu0 0
      %3136 = vmatpush1.bf16.msra.mxu0 0
      %3137 = vmatprep.subr.bf16.mxu0 0
      %3138 = vmatpush1.bf16.msra.mxu0 0
      %3139 = vmatprep.subr.bf16.mxu0 0
      %3140 = vmatpush1.bf16.msra.mxu0 0
      %3141 = vmatprep.subr.bf16.mxu0 0
      %3142 = vmatpush1.bf16.msra.mxu0 0
      %3143 = vmatprep.subr.bf16.mxu0 0
      %3144 = vmatpush1.bf16.msra.mxu0 0
      %3145 = vmatprep.subr.bf16.mxu0 0
      %3146 = vmatpush1.bf16.msra.mxu0 0
      %3147 = vmatprep.subr.bf16.mxu0 0
      %3148 = vmatpush1.bf16.msra.mxu0 0
      %3149 = vmatprep.subr.bf16.mxu0 0
      %3150 = vmatpush1.bf16.msra.mxu0 0
      %3151 = vmatprep.subr.bf16.mxu0 0
      %3152 = vmatpush1.bf16.msra.mxu0 0
      %3153 = vmatprep.subr.bf16.mxu0 0
      %3154 = vmatpush1.bf16.msra.mxu0 0
      %3155 = vmatprep.subr.bf16.mxu0 0
      %3156 = vmatpush1.bf16.msra.mxu0 0
      %3157 = vmatprep.subr.bf16.mxu0 0
      %3158 = vmatpush1.bf16.msra.mxu0 0
      %3159 = vmatprep.subr.bf16.mxu0 0
      %3160 = vmatpush1.bf16.msra.mxu0 0
      %3161 = vmatprep.mubr.bf16.mxu0 0
      %3162 = vmatmul.mubr.bf16.gmra.mrb[0].mxu0 %v3093
      %v3163 = vpop.f32.mrb[0].mxu0
      %v3164 = vadd.f32 0.0, %v3163
      %v3165 = vpop.f32.mrb[0].mxu0
      %v3166 = vpop.f32.mrb[0].mxu0
      %v3167 = vadd.f32 0.0, %v3166
      %v3168 = vpop.f32.mrb[0].mxu0
      %3169 = vmatprep.mubr.bf16.mxu0 0
      %3170 = vmatmul.mubr.bf16.gmra.mrb[0].mxu0 %v3095
      %v3171 = vpop.f32.mrb[0].mxu0
      %v3172 = vadd.f32 0.0, %v3171
      %v3173 = vpop.f32.mrb[0].mxu0
      %v3174 = vpop.f32.mrb[0].mxu0
      %v3175 = vadd.f32 0.0, %v3174
      %v3176 = vpop.f32.mrb[0].mxu0
      %3177 = vmatprep.mubr.bf16.mxu0 0
      %3178 = vmatmul.mubr.bf16.gmra.mrb[0].mxu0 %v3097
      %v3179 = vpop.f32.mrb[0].mxu0
      %v3180 = vadd.f32 0.0, %v3179
      %v3181 = vpop.f32.mrb[0].mxu0
      %v3182 = vpop.f32.mrb[0].mxu0
      %v3183 = vadd.f32 0.0, %v3182
      %v3184 = vpop.f32.mrb[0].mxu0
      %3185 = vmatprep.mubr.bf16.mxu0 0
      %3186 = vmatmul.mubr.bf16.gmra.mrb[0].mxu0 %v3099
      %v3187 = vpop.f32.mrb[0].mxu0
      %v3188 = vadd.f32 0.0, %v3187
      %v3189 = vpop.f32.mrb[0].mxu0
      %v3190 = vpop.f32.mrb[0].mxu0
      %v3191 = vadd.f32 0.0, %v3190
      %v3192 = vpop.f32.mrb[0].mxu0
      %3193 = vmatprep.mubr.bf16.mxu0 0
      %3194 = vmatmul.mubr.bf16.gmra.mrb[0].mxu0 %v3101
      %v3195 = vpop.f32.mrb[0].mxu0
      %v3196 = vadd.f32 0.0, %v3195
      %v3197 = vpop.f32.mrb[0].mxu0
      %v3198 = vpop.f32.mrb[0].mxu0
      %v3199 = vadd.f32 0.0, %v3198
      %v3200 = vpop.f32.mrb[0].mxu0
      %3201 = vmatprep.mubr.bf16.mxu0 0
      %3202 = vmatmul.mubr.bf16.gmra.mrb[0].mxu0 %v3103
      %v3203 = vpop.f32.mrb[0].mxu0
      %v3204 = vadd.f32 0.0, %v3203
      %v3205 = vpop.f32.mrb[0].mxu0
      %v3206 = vpop.f32.mrb[0].mxu0
      %v3207 = vadd.f32 0.0, %v3206
      %v3208 = vpop.f32.mrb[0].mxu0
      %3209 = vmatprep.mubr.bf16.mxu0 0
      %3210 = vmatmul.mubr.bf16.gmra.mrb[0].mxu0 %v3105
      %v3211 = vpop.f32.mrb[0].mxu0
      %v3212 = vadd.f32 0.0, %v3211
      %v3213 = vpop.f32.mrb[0].mxu0
      %v3214 = vpop.f32.mrb[0].mxu0
      %v3215 = vadd.f32 0.0, %v3214
      %v3216 = vpop.f32.mrb[0].mxu0
      %3217 = vmatprep.mubr.bf16.mxu0 0
      %3218 = vmatmul.mubr.bf16.gmra.mrb[0].mxu0 %v3107
      %v3219 = vpop.f32.mrb[0].mxu0
      %v3220 = vadd.f32 0.0, %v3219
      %v3221 = vpop.f32.mrb[0].mxu0
      %v3222 = vpop.f32.mrb[0].mxu0
      %v3223 = vadd.f32 0.0, %v3222
      %v3224 = vpop.f32.mrb[0].mxu0
      %3225 = vmatprep.mubr.bf16.mxu0 0
      %3226 = vmatmul.mubr.bf16.gmra.mrb[0].mxu0 %v3109
      %v3227 = vpop.f32.mrb[0].mxu0
      %v3228 = vadd.f32 0.0, %v3227
      %v3229 = vpop.f32.mrb[0].mxu0
      %v3230 = vpop.f32.mrb[0].mxu0
      %v3231 = vadd.f32 0.0, %v3230
      %v3232 = vpop.f32.mrb[0].mxu0
      %3233 = vmatprep.mubr.bf16.mxu0 0
      %3234 = vmatmul.mubr.bf16.gmra.mrb[0].mxu0 %v3111
      %v3235 = vpop.f32.mrb[0].mxu0
      %v3236 = vadd.f32 0.0, %v3235
      %v3237 = vpop.f32.mrb[0].mxu0
      %v3238 = vpop.f32.mrb[0].mxu0
      %v3239 = vadd.f32 0.0, %v3238
      %v3240 = vpop.f32.mrb[0].mxu0
      %3241 = vmatprep.mubr.bf16.mxu0 0
      %3242 = vmatmul.mubr.bf16.gmra.mrb[0].mxu0 %v3113
      %v3243 = vpop.f32.mrb[0].mxu0
      %v3244 = vadd.f32 0.0, %v3243
      %v3245 = vpop.f32.mrb[0].mxu0
      %v3246 = vpop.f32.mrb[0].mxu0
      %v3247 = vadd.f32 0.0, %v3246
      %v3248 = vpop.f32.mrb[0].mxu0
      %3249 = vmatprep.mubr.bf16.mxu0 0
      %3250 = vmatmul.mubr.bf16.gmra.mrb[0].mxu0 %v3115
      %v3251 = vpop.f32.mrb[0].mxu0
      %v3252 = vadd.f32 0.0, %v3251
      %v3253 = vpop.f32.mrb[0].mxu0
      %v3254 = vpop.f32.mrb[0].mxu0
      %v3255 = vadd.f32 0.0, %v3254
      %v3256 = vpop.f32.mrb[0].mxu0
      %3257 = vmatprep.mubr.bf16.mxu0 0
      %3258 = vmatmul.mubr.bf16.gmra.mrb[0].mxu0 %v3117
      %v3259 = vpop.f32.mrb[0].mxu0
      %v3260 = vadd.f32 0.0, %v3259
      %v3261 = vpop.f32.mrb[0].mxu0
      %v3262 = vpop.f32.mrb[0].mxu0
      %v3263 = vadd.f32 0.0, %v3262
      %v3264 = vpop.f32.mrb[0].mxu0
      %3265 = vmatprep.mubr.bf16.mxu0 0
      %3266 = vmatmul.mubr.bf16.gmra.mrb[0].mxu0 %v3119
      %v3267 = vpop.f32.mrb[0].mxu0
      %v3268 = vadd.f32 0.0, %v3267
      %v3269 = vpop.f32.mrb[0].mxu0
      %v3270 = vpop.f32.mrb[0].mxu0
      %v3271 = vadd.f32 0.0, %v3270
      %v3272 = vpop.f32.mrb[0].mxu0
      %3273 = vmatprep.mubr.bf16.mxu0 0
      %3274 = vmatmul.mubr.bf16.gmra.mrb[0].mxu0 %v3121
      %v3275 = vpop.f32.mrb[0].mxu0
      %v3276 = vadd.f32 0.0, %v3275
      %v3277 = vpop.f32.mrb[0].mxu0
      %v3278 = vpop.f32.mrb[0].mxu0
      %v3279 = vadd.f32 0.0, %v3278
      %v3280 = vpop.f32.mrb[0].mxu0
      %3281 = vmatprep.mubr.bf16.mxu0 0
      %3282 = vmatmul.mubr.bf16.gmra.mrb[0].mxu0 %v3123
      %v3283 = vpop.f32.mrb[0].mxu0
      %v3284 = vadd.f32 0.0, %v3283
      %v3285 = vpop.f32.mrb[0].mxu0
      %v3286 = vpop.f32.mrb[0].mxu0
      %v3287 = vadd.f32 0.0, %v3286
      %v3288 = vpop.f32.mrb[0].mxu0
      %3289 = vdwg.mxu0
      %v3290 = vpack.c.bf16 %v3167, %v3164
      %v3291 = vpack.c.bf16 %v3175, %v3172
      %v3292 = vpack.c.bf16 %v3183, %v3180
      %v3293 = vpack.c.bf16 %v3191, %v3188
      %v3294 = vpack.c.bf16 %v3199, %v3196
      %v3295 = vpack.c.bf16 %v3207, %v3204
      %v3296 = vpack.c.bf16 %v3215, %v3212
      %v3297 = vpack.c.bf16 %v3223, %v3220
      %v3298 = vpack.c.bf16 %v3231, %v3228
      %v3299 = vpack.c.bf16 %v3239, %v3236
      %v3300 = vpack.c.bf16 %v3247, %v3244
      %v3301 = vpack.c.bf16 %v3255, %v3252
      %v3302 = vpack.c.bf16 %v3263, %v3260
      %v3303 = vpack.c.bf16 %v3271, %v3268
      %v3304 = vpack.c.bf16 %v3279, %v3276
      %v3305 = vpack.c.bf16 %v3287, %v3284
      %v3322 = vunpack.c.l.b16 %v3290
      %v3323 = vunpack.c.h.b16 %v3290
      %v3324 = vunpack.c.l.b16 %v3291
      %v3325 = vunpack.c.h.b16 %v3291
      %v3326 = vunpack.c.l.b16 %v3292
      %v3327 = vunpack.c.h.b16 %v3292
      %v3328 = vunpack.c.l.b16 %v3293
      %v3329 = vunpack.c.h.b16 %v3293
      %v3330 = vunpack.c.l.b16 %v3294
      %v3331 = vunpack.c.h.b16 %v3294
      %v3332 = vunpack.c.l.b16 %v3295
      %v3333 = vunpack.c.h.b16 %v3295
      %v3334 = vunpack.c.l.b16 %v3296
      %v3335 = vunpack.c.h.b16 %v3296
      %v3336 = vunpack.c.l.b16 %v3297
      %v3337 = vunpack.c.h.b16 %v3297
      %v3338 = vunpack.c.l.b16 %v3298
      %v3339 = vunpack.c.h.b16 %v3298
      %v3340 = vunpack.c.l.b16 %v3299
      %v3341 = vunpack.c.h.b16 %v3299
      %v3342 = vunpack.c.l.b16 %v3300
      %v3343 = vunpack.c.h.b16 %v3300
      %v3344 = vunpack.c.l.b16 %v3301
      %v3345 = vunpack.c.h.b16 %v3301
      %v3346 = vunpack.c.l.b16 %v3302
      %v3347 = vunpack.c.h.b16 %v3302
      %v3348 = vunpack.c.l.b16 %v3303
      %v3349 = vunpack.c.h.b16 %v3303
      %v3350 = vunpack.c.l.b16 %v3304
      %v3351 = vunpack.c.h.b16 %v3304
      %v3352 = vunpack.c.l.b16 %v3305
      %v3353 = vunpack.c.h.b16 %v3305
      %v3354 = vpack.c.b16 %v3322, %v3322
      %v3355 = vpack.c.b16 %v3323, %v3323
      %v3356 = vpack.c.b16 %v3324, %v3324
      %v3357 = vpack.c.b16 %v3325, %v3325
      %v3358 = vpack.c.b16 %v3326, %v3326
      %v3359 = vpack.c.b16 %v3327, %v3327
      %v3360 = vpack.c.b16 %v3328, %v3328
      %v3361 = vpack.c.b16 %v3329, %v3329
      %v3362 = vpack.c.b16 %v3330, %v3330
      %v3363 = vpack.c.b16 %v3331, %v3331
      %v3364 = vpack.c.b16 %v3332, %v3332
      %v3365 = vpack.c.b16 %v3333, %v3333
      %v3366 = vpack.c.b16 %v3334, %v3334
      %v3367 = vpack.c.b16 %v3335, %v3335
      %v3368 = vpack.c.b16 %v3336, %v3336
      %v3369 = vpack.c.b16 %v3337, %v3337
      %v3370 = vpack.c.b16 %v3338, %v3338
      %v3371 = vpack.c.b16 %v3339, %v3339
      %v3372 = vpack.c.b16 %v3340, %v3340
      %v3373 = vpack.c.b16 %v3341, %v3341
      %v3374 = vpack.c.b16 %v3342, %v3342
      %v3375 = vpack.c.b16 %v3343, %v3343
      %v3376 = vpack.c.b16 %v3344, %v3344
      %v3377 = vpack.c.b16 %v3345, %v3345
      %v3378 = vpack.c.b16 %v3346, %v3346
      %v3379 = vpack.c.b16 %v3347, %v3347
      %v3380 = vpack.c.b16 %v3348, %v3348
      %v3381 = vpack.c.b16 %v3349, %v3349
      %v3382 = vpack.c.b16 %v3350, %v3350
      %v3383 = vpack.c.b16 %v3351, %v3351
      %v3384 = vpack.c.b16 %v3352, %v3352
      %v3385 = vpack.c.b16 %v3353, %v3353
      %vm3418 = vcmask 60416
      %3419 = vst.msk [vmem:[%s204] sm:$0xf] %vm3418, %v3354
      %3420 = vst.msk [vmem:[%s204 + $0x4] sm:$0xf] %vm3418, %v3355
      %3421 = vst.msk [vmem:[%s204 + $0x8] sm:$0xf] %vm3418, %v3356
      %3422 = vst.msk [vmem:[%s204 + $0xc] sm:$0xf] %vm3418, %v3357
      %3423 = vst.msk [vmem:[%s204 + $0x10] sm:$0xf] %vm3418, %v3358
      %3424 = vst.msk [vmem:[%s204 + $0x14] sm:$0xf] %vm3418, %v3359
      %3425 = vst.msk [vmem:[%s204 + $0x18] sm:$0xf] %vm3418, %v3360
      %3426 = vst.msk [vmem:[%s204 + $0x1c] sm:$0xf] %vm3418, %v3361
      %3427 = vst.msk [vmem:[%s204 + $0x20] sm:$0xf] %vm3418, %v3362
      %3428 = vst.msk [vmem:[%s204 + $0x24] sm:$0xf] %vm3418, %v3363
      %3429 = vst.msk [vmem:[%s204 + $0x28] sm:$0xf] %vm3418, %v3364
      %3430 = vst.msk [vmem:[%s204 + $0x2c] sm:$0xf] %vm3418, %v3365
      %3431 = vst.msk [vmem:[%s204 + $0x30] sm:$0xf] %vm3418, %v3366
      %3432 = vst.msk [vmem:[%s204 + $0x34] sm:$0xf] %vm3418, %v3367
      %3433 = vst.msk [vmem:[%s204 + $0x38] sm:$0xf] %vm3418, %v3368
      %3434 = vst.msk [vmem:[%s204 + $0x3c] sm:$0xf] %vm3418, %v3369
      %3435 = vst.msk [vmem:[%s204 + $0x40] sm:$0xf] %vm3418, %v3370
      %3436 = vst.msk [vmem:[%s204 + $0x44] sm:$0xf] %vm3418, %v3371
      %3437 = vst.msk [vmem:[%s204 + $0x48] sm:$0xf] %vm3418, %v3372
      %3438 = vst.msk [vmem:[%s204 + $0x4c] sm:$0xf] %vm3418, %v3373
      %3439 = vst.msk [vmem:[%s204 + $0x50] sm:$0xf] %vm3418, %v3374
      %3440 = vst.msk [vmem:[%s204 + $0x54] sm:$0xf] %vm3418, %v3375
      %3441 = vst.msk [vmem:[%s204 + $0x58] sm:$0xf] %vm3418, %v3376
      %3442 = vst.msk [vmem:[%s204 + $0x5c] sm:$0xf] %vm3418, %v3377
      %3443 = vst.msk [vmem:[%s204 + $0x60] sm:$0xf] %vm3418, %v3378
      %3444 = vst.msk [vmem:[%s204 + $0x64] sm:$0xf] %vm3418, %v3379
      %3445 = vst.msk [vmem:[%s204 + $0x68] sm:$0xf] %vm3418, %v3380
      %3446 = vst.msk [vmem:[%s204 + $0x6c] sm:$0xf] %vm3418, %v3381
      %3447 = vst.msk [vmem:[%s204 + $0x70] sm:$0xf] %vm3418, %v3382
      %3448 = vst.msk [vmem:[%s204 + $0x74] sm:$0xf] %vm3418, %v3383
      %3449 = vst.msk [vmem:[%s204 + $0x78] sm:$0xf] %vm3418, %v3384
      %3450 = vst.msk [vmem:[%s204 + $0x7c] sm:$0xf] %vm3418, %v3385
      %v3451 = vsel %vm2841, %v3164, 0.0
      %v3452 = vsel %vm2841, %v3167, 0.0
      %v3453 = vadd.f32 %v3451, %v3452
      %v3454 = vsel %vm2841, %v3172, 0.0
      %v3455 = vadd.f32 %v3453, %v3454
      %v3456 = vsel %vm2841, %v3175, 0.0
      %v3457 = vadd.f32 %v3455, %v3456
      %v3458 = vsel %vm2841, %v3180, 0.0
      %v3459 = vadd.f32 %v3457, %v3458
      %v3460 = vsel %vm2841, %v3183, 0.0
      %v3461 = vadd.f32 %v3459, %v3460
      %v3462 = vsel %vm2841, %v3188, 0.0
      %v3463 = vadd.f32 %v3461, %v3462
      %v3464 = vsel %vm2841, %v3191, 0.0
      %v3465 = vadd.f32 %v3463, %v3464
      %v3466 = vsel %vm2841, %v3196, 0.0
      %v3467 = vadd.f32 %v3465, %v3466
      %v3468 = vsel %vm2841, %v3199, 0.0
      %v3469 = vadd.f32 %v3467, %v3468
      %v3470 = vsel %vm2841, %v3204, 0.0
      %v3471 = vadd.f32 %v3469, %v3470
      %v3472 = vsel %vm2841, %v3207, 0.0
      %v3473 = vadd.f32 %v3471, %v3472
      %v3474 = vsel %vm2841, %v3212, 0.0
      %v3475 = vadd.f32 %v3473, %v3474
      %v3476 = vsel %vm2841, %v3215, 0.0
      %v3477 = vadd.f32 %v3475, %v3476
      %v3478 = vsel %vm2841, %v3220, 0.0
      %v3479 = vadd.f32 %v3477, %v3478
      %v3480 = vsel %vm2841, %v3223, 0.0
      %v3481 = vadd.f32 %v3479, %v3480
      %v3482 = vsel %vm2841, %v3228, 0.0
      %v3483 = vadd.f32 %v3481, %v3482
      %v3484 = vsel %vm2841, %v3231, 0.0
      %v3485 = vadd.f32 %v3483, %v3484
      %v3486 = vsel %vm2841, %v3236, 0.0
      %v3487 = vadd.f32 %v3485, %v3486
      %v3488 = vsel %vm2841, %v3239, 0.0
      %v3489 = vadd.f32 %v3487, %v3488
      %v3490 = vsel %vm2841, %v3244, 0.0
      %v3491 = vadd.f32 %v3489, %v3490
      %v3492 = vsel %vm2841, %v3247, 0.0
      %v3493 = vadd.f32 %v3491, %v3492
      %v3494 = vsel %vm2841, %v3252, 0.0
      %v3495 = vadd.f32 %v3493, %v3494
      %v3496 = vsel %vm2841, %v3255, 0.0
      %v3497 = vadd.f32 %v3495, %v3496
      %v3498 = vsel %vm2841, %v3260, 0.0
      %v3499 = vadd.f32 %v3497, %v3498
      %v3500 = vsel %vm2841, %v3263, 0.0
      %v3501 = vadd.f32 %v3499, %v3500
      %v3502 = vsel %vm2841, %v3268, 0.0
      %v3503 = vadd.f32 %v3501, %v3502
      %v3504 = vsel %vm2841, %v3271, 0.0
      %v3505 = vadd.f32 %v3503, %v3504
      %v3506 = vsel %vm2841, %v3276, 0.0
      %v3507 = vadd.f32 %v3505, %v3506
      %v3508 = vsel %vm2841, %v3279, 0.0
      %v3509 = vadd.f32 %v3507, %v3508
      %v3510 = vsel %vm2841, %v3284, 0.0
      %v3511 = vadd.f32 %v3509, %v3510
      %v3512 = vsel %vm2841, %v3287, 0.0
      %v3513 = vadd.f32 %v3511, %v3512
      %v3514 = vrot.slane %v3513, 4
      %v3515 = vadd.f32 %v3513, %v3514
      %v3516 = vrot.slane %v3515, 2
      %v3517 = vadd.f32 %v3515, %v3516
      %v3518 = vrot.slane %v3517, 1
      %v3519 = vadd.f32 %v3517, %v3518
      %v3520 = vmul.f32 %v3164, %v3164
      %v3521 = vmul.f32 %v3167, %v3167
      %v3522 = vmul.f32 %v3172, %v3172
      %v3523 = vmul.f32 %v3175, %v3175
      %v3524 = vmul.f32 %v3180, %v3180
      %v3525 = vmul.f32 %v3183, %v3183
      %v3526 = vmul.f32 %v3188, %v3188
      %v3527 = vmul.f32 %v3191, %v3191
      %v3528 = vmul.f32 %v3196, %v3196
      %v3529 = vmul.f32 %v3199, %v3199
      %v3530 = vmul.f32 %v3204, %v3204
      %v3531 = vmul.f32 %v3207, %v3207
      %v3532 = vmul.f32 %v3212, %v3212
      %v3533 = vmul.f32 %v3215, %v3215
      %v3534 = vmul.f32 %v3220, %v3220
      %v3535 = vmul.f32 %v3223, %v3223
      %v3536 = vmul.f32 %v3228, %v3228
      %v3537 = vmul.f32 %v3231, %v3231
      %v3538 = vmul.f32 %v3236, %v3236
      %v3539 = vmul.f32 %v3239, %v3239
      %v3540 = vmul.f32 %v3244, %v3244
      %v3541 = vmul.f32 %v3247, %v3247
      %v3542 = vmul.f32 %v3252, %v3252
      %v3543 = vmul.f32 %v3255, %v3255
      %v3544 = vmul.f32 %v3260, %v3260
      %v3545 = vmul.f32 %v3263, %v3263
      %v3546 = vmul.f32 %v3268, %v3268
      %v3547 = vmul.f32 %v3271, %v3271
      %v3548 = vmul.f32 %v3276, %v3276
      %v3549 = vmul.f32 %v3279, %v3279
      %v3550 = vmul.f32 %v3284, %v3284
      %v3551 = vmul.f32 %v3287, %v3287
      %v3552 = vsel %vm2841, %v3520, 0.0
      %v3553 = vsel %vm2841, %v3521, 0.0
      %v3554 = vadd.f32 %v3552, %v3553
      %v3555 = vsel %vm2841, %v3522, 0.0
      %v3556 = vadd.f32 %v3554, %v3555
      %v3557 = vsel %vm2841, %v3523, 0.0
      %v3558 = vadd.f32 %v3556, %v3557
      %v3559 = vsel %vm2841, %v3524, 0.0
      %v3560 = vadd.f32 %v3558, %v3559
      %v3561 = vsel %vm2841, %v3525, 0.0
      %v3562 = vadd.f32 %v3560, %v3561
      %v3563 = vsel %vm2841, %v3526, 0.0
      %v3564 = vadd.f32 %v3562, %v3563
      %v3565 = vsel %vm2841, %v3527, 0.0
      %v3566 = vadd.f32 %v3564, %v3565
      %v3567 = vsel %vm2841, %v3528, 0.0
      %v3568 = vadd.f32 %v3566, %v3567
      %v3569 = vsel %vm2841, %v3529, 0.0
      %v3570 = vadd.f32 %v3568, %v3569
      %v3571 = vsel %vm2841, %v3530, 0.0
      %v3572 = vadd.f32 %v3570, %v3571
      %v3573 = vsel %vm2841, %v3531, 0.0
      %v3574 = vadd.f32 %v3572, %v3573
      %v3575 = vsel %vm2841, %v3532, 0.0
      %v3576 = vadd.f32 %v3574, %v3575
      %v3577 = vsel %vm2841, %v3533, 0.0
      %v3578 = vadd.f32 %v3576, %v3577
      %v3579 = vsel %vm2841, %v3534, 0.0
      %v3580 = vadd.f32 %v3578, %v3579
      %v3581 = vsel %vm2841, %v3535, 0.0
      %v3582 = vadd.f32 %v3580, %v3581
      %v3583 = vsel %vm2841, %v3536, 0.0
      %v3584 = vadd.f32 %v3582, %v3583
      %v3585 = vsel %vm2841, %v3537, 0.0
      %v3586 = vadd.f32 %v3584, %v3585
      %v3587 = vsel %vm2841, %v3538, 0.0
      %v3588 = vadd.f32 %v3586, %v3587
      %v3589 = vsel %vm2841, %v3539, 0.0
      %v3590 = vadd.f32 %v3588, %v3589
      %v3591 = vsel %vm2841, %v3540, 0.0
      %v3592 = vadd.f32 %v3590, %v3591
      %v3593 = vsel %vm2841, %v3541, 0.0
      %v3594 = vadd.f32 %v3592, %v3593
      %v3595 = vsel %vm2841, %v3542, 0.0
      %v3596 = vadd.f32 %v3594, %v3595
      %v3597 = vsel %vm2841, %v3543, 0.0
      %v3598 = vadd.f32 %v3596, %v3597
      %v3599 = vsel %vm2841, %v3544, 0.0
      %v3600 = vadd.f32 %v3598, %v3599
      %v3601 = vsel %vm2841, %v3545, 0.0
      %v3602 = vadd.f32 %v3600, %v3601
      %v3603 = vsel %vm2841, %v3546, 0.0
      %v3604 = vadd.f32 %v3602, %v3603
      %v3605 = vsel %vm2841, %v3547, 0.0
      %v3606 = vadd.f32 %v3604, %v3605
      %v3607 = vsel %vm2841, %v3548, 0.0
      %v3608 = vadd.f32 %v3606, %v3607
      %v3609 = vsel %vm2841, %v3549, 0.0
      %v3610 = vadd.f32 %v3608, %v3609
      %v3611 = vsel %vm2841, %v3550, 0.0
      %v3612 = vadd.f32 %v3610, %v3611
      %v3613 = vsel %vm2841, %v3551, 0.0
      %v3614 = vadd.f32 %v3612, %v3613
      %v3615 = vrot.slane %v3614, 4
      %v3616 = vadd.f32 %v3614, %v3615
      %v3617 = vrot.slane %v3616, 2
      %v3618 = vadd.f32 %v3616, %v3617
      %v3619 = vrot.slane %v3618, 1
      %v3620 = vadd.f32 %v3618, %v3619
      %vm3621 = vcmask 1040384
      %v3622 = vsel %vm3621, %v3519, %v3620
      %vm3623 = vcmask 58368
      %3624 = vst.msk [vmem:[%s212] sm:$0x3] %vm3623, %v3622
      %s3625 = smul.u32 32, %s20
      %p3626 = scmp.lt.s32.totalorder %s19, 1
      %s3627 = scalar_select %p3626, %s19, 1
      %p3628 = scmp.lt.s32.totalorder %s3625, 31
      %s3629 = scalar_select %p3628, %s3625, 31
      %s3630 = smul.addr %s3627, 32
      %s3631 = sadd.s32 %s3629, %s3630
      %s3632 = smul.addr %s3631, 4
      %s3633 = scalar_lea.vmem %s2, %s3632
      %p3634 = scmp.lt.s32.totalorder %s19, 1
      %s3635 = scalar_select %p3634, %s19, 1
      %p3636 = scmp.lt.s32.totalorder %s20, 0
      %s3637 = scalar_select %p3636, %s20, 0
      %s3638 = sadd.s32 %s3637, %s3635
      %s3639 = smul.addr %s3638, 2
      %s3640 = scalar_lea.vmem %s3, %s3639
      // Predicated region
      $region29: #{cnn_block.2} parent=27 // pred_check
        %p3641 = pneg %p94
      $region30: #{cnn_block.2} parent=27 // pred_check_branch
        %3643 = sbr.rel (%p3641) target = $region32
      $region31: #{cnn_block.2} parent=27 // pred_region
        %s3644 = smul.u32 32, %s20
      $region32: #{cnn_block.2} parent=27 // pred_fallthru
        _
      // Predicated region
      $region33: #{cnn_block.2} parent=27 // pred_check
        %p3645 = pneg %p122
      $region34: #{cnn_block.2} parent=27 // pred_check_branch
        %3647 = sbr.rel (%p3645) target = $region36
      $region35: #{cnn_block.2} parent=27 // pred_region
        _
      $region36: #{cnn_block.2} parent=27 // pred_fallthru
        _
    $region28: #{cnn_block.2} parent=5 // pred_fallthru
      _
    %p3648 = scmp.le.s32.totalorder 2, %s10
    // Predicated region
    $region37: #{cnn_block.2} parent=5 // pred_check
      %p3649 = pneg %p3648
    $region38: #{cnn_block.2} parent=5 // pred_check_branch
      %3651 = sbr.rel (%p3649) target = $region40
    $region39: #{cnn_block.2} parent=5 // pred_region
      %s3652 = ssub.s32 %s10, 2
      // Predicated region
      $region41: #{cnn_block.2} parent=39 // pred_check
        %p3653 = pneg %p100
      $region42: #{cnn_block.2} parent=39 // pred_check_branch
        %3655 = sbr.rel (%p3653) target = $region44
      $region43: #{cnn_block.2} parent=39 // pred_region
        %s3656 = smul.u32 32, %s22
        %p3657 = scmp.lt.s32.totalorder %s21, 1
        %s3658 = scalar_select %p3657, %s21, 1
        %p3659 = scmp.lt.s32.totalorder %s3656, 31
        %s3660 = scalar_select %p3659, %s3656, 31
        %s3661 = smul.addr %s3658, 32
        %s3662 = sadd.s32 %s3660, %s3661
        %s3663 = smul.addr %s3662, 4
        %s3664 = scalar_lea.vmem %s2, %s3663
      $region44: #{cnn_block.2} parent=39 // pred_fallthru
        _
      // Predicated region
      $region45: #{cnn_block.2} parent=39 // pred_check
        %p3665 = pneg %p128
      $region46: #{cnn_block.2} parent=39 // pred_check_branch
        %3667 = sbr.rel (%p3665) target = $region48
      $region47: #{cnn_block.2} parent=39 // pred_region
        %p3668 = scmp.lt.s32.totalorder %s21, 1
        %s3669 = scalar_select %p3668, %s21, 1
        %p3670 = scmp.lt.s32.totalorder %s22, 0
        %s3671 = scalar_select %p3670, %s22, 0
        %s3672 = sadd.s32 %s3671, %s3669
        %s3673 = smul.addr %s3672, 2
        %s3674 = scalar_lea.vmem %s3, %s3673
      $region48: #{cnn_block.2} parent=39 // pred_fallthru
        _
    $region40: #{cnn_block.2} parent=5 // pred_fallthru
      _
  $region6: #{cnn_block.2} parent=0 // loop_footer
    %s14 = sadd.s32 1, %s10
  $region7: #{cnn_block.2} parent=0 // loop_footer_branch
    %9 = sbr.rel target = $region3
  $region8: #{cnn_block.2} parent=0 // loop_exit
    _

</llo_original>
